<compile_context>
chip_gen: v5e
topology: v5e:2x2
jax: 0.10.0
libtpu: 0.0.40
codegen_flags: <defaults>
</compile_context>

<pallas_src>
import functools

import jax
import jax.numpy as jnp
from jax import lax
from jax.experimental import pallas as pl
from jax.experimental.pallas import tpu as pltpu


def _make_kernel(stride, c_out, block_rows, wo):
    """Kernel for one (batch, row-block) grid cell.

    refs = [phase_0 ... phase_{s*s-1}, w_ref, b_ref, o_ref]
      phase_p : (1, 1, block_rows+extra, C_in, wo+extra)  VMEM
      w_ref   : (9, C_out, C_in)                          VMEM (resident)
      b_ref   : (C_out, 1)                                VMEM (resident)
      o_ref   : (1, C_out, block_rows, wo)                VMEM
    """
    n_ph = stride * stride

    def kernel(*refs):
        phase_refs = refs[:n_ph]
        w_ref, b_ref, o_ref = refs[n_ph], refs[n_ph + 1], refs[n_ph + 2]

        bias = b_ref[...]                                  # (C_out, 1), f32
        w_taps = [w_ref[t] for t in range(9)]              # 9 x (C_out, C_in)

        for r in range(block_rows):                        # static, unrolled
            acc = jnp.zeros((c_out, wo), dtype=jnp.float32)
            for dh in range(3):
                for dw in range(3):
                    ph = (dh % stride) * stride + (dw % stride)
                    rr = r + dh // stride                  # static row offset in phase
                    cc = dw // stride                      # static lane offset in phase
                    piece = phase_refs[ph][0, 0, rr, :, pl.ds(cc, wo)]   # (C_in, wo)
                    acc = acc + jnp.dot(w_taps[dh * 3 + dw], piece,
                                        preferred_element_type=jnp.float32)
            acc = acc + bias                               # broadcast over lanes
            o_ref[0, :, r, :] = jnp.maximum(acc, 0.0).astype(o_ref.dtype)

    return kernel


def _fit(x, axis, n):
    """Zero-pad or slice so that x.shape[axis] == n (static shapes)."""
    cur = x.shape[axis]
    if cur > n:
        return lax.slice_in_dim(x, 0, n, axis=axis)
    if cur < n:
        pad = [(0, 0)] * x.ndim
        pad[axis] = (0, n - cur)
        return jnp.pad(x, pad)
    return x


@functools.partial(jax.jit, static_argnames=("stride", "block_rows"))
def downsample_forward(x, weight, bias, stride=2, block_rows=8):
    """x: (B, C_in, H, W) NCHW.  weight: (C_out, C_in, 3, 3).  bias: (C_out,)."""
    assert stride >= 1
    b, c_in, h, w = x.shape
    c_out = weight.shape[0]

    # ReflectionPad2d(1): border-only growth, kept as XLA glue.
    xpad = jnp.pad(x, ((0, 0), (0, 0), (1, 1), (1, 1)), mode="reflect")

    # Conv output spatial size (kernel=3, pad=1 already applied).
    ho = (h + 2 - 3) // stride + 1
    wo = (w + 2 - 3) // stride + 1

    # Row-block tiling of the output height (grid axis 1).
    if ho <= block_rows:
        th, n_hblk = ho, 1
    else:
        assert block_rows % 8 == 0, "block_rows must be a multiple of 8"
        th = block_rows
        n_hblk = pl.cdiv(ho, th)
    ho_pad = th * n_hblk

    # Stride-phase split ("space to depth"): phase (pr, pc) = xpad[:, :, pr::s, pc::s].
    # Tap (dh, dw) of the 3x3 window becomes a *contiguous* (dh//s, dw//s) shift of
    # phase (dh % s, dw % s), so the kernel only needs plain contiguous slices.
    extra = 2 // stride                       # max in-phase shift for a 3-tap window
    rows_needed = ho_pad + extra
    cols_needed = wo + extra
    phases = []
    for pr in range(stride):
        for pc in range(stride):
            p = xpad[:, :, pr::stride, pc::stride]            # (B, C, R, Wc)
            p = _fit(p, 2, rows_needed)
            p = _fit(p, 3, cols_needed)
            p = jnp.transpose(p, (0, 2, 1, 3))                # (B, R, C, Wc)
            # Chunk rows with the tiny `extra`-row overlap each block needs, so a
            # BlockSpec can fetch exactly one contiguous chunk per grid step.
            chunks = [lax.slice_in_dim(p, i * th, i * th + th + extra, axis=1)
                      for i in range(n_hblk)]
            phases.append(jnp.stack(chunks, axis=1))          # (B, nH, th+e, C, Wc)

    # Weight as 9 per-tap (C_out, C_in) matrices; bias as an f32 column.
    w_taps = jnp.transpose(weight, (2, 3, 0, 1)).reshape(9, c_out, c_in)
    b_col = bias.reshape(c_out, 1).astype(jnp.float32)

    phase_spec = pl.BlockSpec((1, 1, th + extra, c_in, cols_needed),
                              lambda bi, hi: (bi, hi, 0, 0, 0))
    in_specs = [phase_spec] * (stride * stride) + [
        pl.BlockSpec((9, c_out, c_in), lambda bi, hi: (0, 0, 0)),   # resident weight
        pl.BlockSpec((c_out, 1), lambda bi, hi: (0, 0)),            # resident bias
    ]
    out_spec = pl.BlockSpec((1, c_out, th, wo), lambda bi, hi: (bi, 0, hi, 0))

    itemsize = jnp.dtype(x.dtype).itemsize
    flops = 2 * b * ho_pad * wo * c_out * c_in * 9
    bytes_accessed = (sum(p.size for p in phases) + w_taps.size + b_col.size
                      + b * c_out * ho_pad * wo) * itemsize

    out = pl.pallas_call(
        _make_kernel(stride, c_out, th, wo),
        out_shape=jax.ShapeDtypeStruct((b, c_out, ho_pad, wo), x.dtype),
        grid=(b, n_hblk),
        in_specs=in_specs,
        out_specs=out_spec,
        compiler_params=pltpu.CompilerParams(
            dimension_semantics=("parallel", "parallel")),
        cost_estimate=pl.CostEstimate(
            flops=flops, transcendentals=0, bytes_accessed=bytes_accessed),
    )(*phases, w_taps, b_col)

    # Drop padded output rows; result is already NCHW (no transpose needed).
    # TODO(synk): for very large C_in, add a channel-block reduction grid axis to
    # bound VMEM further (not needed at these shapes).
    return out[:, :, :ho, :]


def _reference_forward(x, weight, bias, stride=2):
    xpad = jnp.pad(x, ((0, 0), (0, 0), (1, 1), (1, 1)), mode="reflect")
    y = jax.lax.conv_general_dilated(
        xpad, weight, window_strides=(stride, stride), padding="VALID",
        dimension_numbers=("NCHW", "OIHW", "NCHW"))
    y = y + bias.reshape(1, -1, 1, 1)
    return jnp.maximum(y, 0.0)


if __name__ == "__main__":
    key = jax.random.PRNGKey(0)
    kx, kw, kb = jax.random.split(key, 3)

    B, C_IN, C_OUT, H, W = 2, 4, 8, 16, 16
    x = jax.random.normal(kx, (B, C_IN, H, W), dtype=jnp.float32)
    weight = jax.random.normal(kw, (C_OUT, C_IN, 3, 3), dtype=jnp.float32) * 0.1
    bias = jax.random.normal(kb, (C_OUT,), dtype=jnp.float32) * 0.1

    out = jax.block_until_ready(downsample_forward(x, weight, bias, stride=2))
    ref = jax.block_until_ready(_reference_forward(x, weight, bias, stride=2))

    assert out.shape == (B, C_OUT, 8, 8), out.shape
    max_err = float(jnp.max(jnp.abs(out - ref)))
    assert jnp.allclose(out, ref, atol=1e-4, rtol=1e-4), max_err

    print("KERNEL_OK")
</pallas_src>

<mosaic_0001>
module attributes {stable_mosaic.version = 11 : i64} {
  func.func @kernel(%arg0: i32, %arg1: i32, %arg2: memref<1x1x9x4x9xf32, #tpu.memory_space<vmem>>, %arg3: memref<1x1x9x4x9xf32, #tpu.memory_space<vmem>>, %arg4: memref<1x1x9x4x9xf32, #tpu.memory_space<vmem>>, %arg5: memref<1x1x9x4x9xf32, #tpu.memory_space<vmem>>, %arg6: memref<9x8x4xf32, #tpu.memory_space<vmem>>, %arg7: memref<8x1xf32, #tpu.memory_space<vmem>>, %arg8: memref<1x8x8x8xf32, #tpu.memory_space<vmem>>) attributes {dimension_semantics = [#tpu.dimension_semantics<parallel>, #tpu.dimension_semantics<parallel>], iteration_bounds = array<i64: 2, 1>, scalar_prefetch = 0 : i64, scratch_operands = 0 : i64, tpu.core_type = #tpu.core_type<tc>, window_params = [{transform_indices = @transform_0, window_bounds = array<i64: 1, 1, 9, 4, 9>}, {transform_indices = @transform_1, window_bounds = array<i64: 1, 1, 9, 4, 9>}, {transform_indices = @transform_2, window_bounds = array<i64: 1, 1, 9, 4, 9>}, {transform_indices = @transform_3, window_bounds = array<i64: 1, 1, 9, 4, 9>}, {pipeline_mode = #tpu.pipeline_mode<synchronous>, transform_indices = @transform_4, window_bounds = array<i64: 9, 8, 4>}, {pipeline_mode = #tpu.pipeline_mode<synchronous>, transform_indices = @transform_5, window_bounds = array<i64: 8, 1>}, {transform_indices = @transform_6, window_bounds = array<i64: 1, 8, 8, 8>}]} {
    %c0 = arith.constant 0 : index
    %c0_0 = arith.constant 0 : index
    %0 = vector.load %arg7[%c0, %c0_0] : memref<8x1xf32, #tpu.memory_space<vmem>>, vector<8x1xf32>
    %c0_1 = arith.constant 0 : index
    %c0_2 = arith.constant 0 : index
    %c0_3 = arith.constant 0 : index
    %1 = vector.load %arg6[%c0_1, %c0_2, %c0_3] : memref<9x8x4xf32, #tpu.memory_space<vmem>>, vector<1x8x4xf32>
    %2 = vector.shape_cast %1 : vector<1x8x4xf32> to vector<8x4xf32>
    %c1 = arith.constant 1 : index
    %c0_4 = arith.constant 0 : index
    %c0_5 = arith.constant 0 : index
    %3 = vector.load %arg6[%c1, %c0_4, %c0_5] : memref<9x8x4xf32, #tpu.memory_space<vmem>>, vector<1x8x4xf32>
    %4 = vector.shape_cast %3 : vector<1x8x4xf32> to vector<8x4xf32>
    %c2 = arith.constant 2 : index
    %c0_6 = arith.constant 0 : index
    %c0_7 = arith.constant 0 : index
    %5 = vector.load %arg6[%c2, %c0_6, %c0_7] : memref<9x8x4xf32, #tpu.memory_space<vmem>>, vector<1x8x4xf32>
    %6 = vector.shape_cast %5 : vector<1x8x4xf32> to vector<8x4xf32>
    %c3 = arith.constant 3 : index
    %c0_8 = arith.constant 0 : index
    %c0_9 = arith.constant 0 : index
    %7 = vector.load %arg6[%c3, %c0_8, %c0_9] : memref<9x8x4xf32, #tpu.memory_space<vmem>>, vector<1x8x4xf32>
    %8 = vector.shape_cast %7 : vector<1x8x4xf32> to vector<8x4xf32>
    %c4 = arith.constant 4 : index
    %c0_10 = arith.constant 0 : index
    %c0_11 = arith.constant 0 : index
    %9 = vector.load %arg6[%c4, %c0_10, %c0_11] : memref<9x8x4xf32, #tpu.memory_space<vmem>>, vector<1x8x4xf32>
    %10 = vector.shape_cast %9 : vector<1x8x4xf32> to vector<8x4xf32>
    %c5 = arith.constant 5 : index
    %c0_12 = arith.constant 0 : index
    %c0_13 = arith.constant 0 : index
    %11 = vector.load %arg6[%c5, %c0_12, %c0_13] : memref<9x8x4xf32, #tpu.memory_space<vmem>>, vector<1x8x4xf32>
    %12 = vector.shape_cast %11 : vector<1x8x4xf32> to vector<8x4xf32>
    %c6 = arith.constant 6 : index
    %c0_14 = arith.constant 0 : index
    %c0_15 = arith.constant 0 : index
    %13 = vector.load %arg6[%c6, %c0_14, %c0_15] : memref<9x8x4xf32, #tpu.memory_space<vmem>>, vector<1x8x4xf32>
    %14 = vector.shape_cast %13 : vector<1x8x4xf32> to vector<8x4xf32>
    %c7 = arith.constant 7 : index
    %c0_16 = arith.constant 0 : index
    %c0_17 = arith.constant 0 : index
    %15 = vector.load %arg6[%c7, %c0_16, %c0_17] : memref<9x8x4xf32, #tpu.memory_space<vmem>>, vector<1x8x4xf32>
    %16 = vector.shape_cast %15 : vector<1x8x4xf32> to vector<8x4xf32>
    %c8 = arith.constant 8 : index
    %c0_18 = arith.constant 0 : index
    %c0_19 = arith.constant 0 : index
    %17 = vector.load %arg6[%c8, %c0_18, %c0_19] : memref<9x8x4xf32, #tpu.memory_space<vmem>>, vector<1x8x4xf32>
    %18 = vector.shape_cast %17 : vector<1x8x4xf32> to vector<8x4xf32>
    %cst = arith.constant 0.000000e+00 : f32
    %19 = vector.broadcast %cst : f32 to vector<8x8xf32>
    %c0_20 = arith.constant 0 : index
    %c0_21 = arith.constant 0 : index
    %c0_22 = arith.constant 0 : index
    %c0_23 = arith.constant 0 : index
    %c0_24 = arith.constant 0 : index
    %20 = vector.load %arg2[%c0_20, %c0_21, %c0_22, %c0_23, %c0_24] : memref<1x1x9x4x9xf32, #tpu.memory_space<vmem>>, vector<1x1x1x4x8xf32>
    %21 = vector.shape_cast %20 : vector<1x1x1x4x8xf32> to vector<4x8xf32>
    %cst_25 = arith.constant dense<0.000000e+00> : vector<8x8xf32>
    %22 = tpu.matmul %2, %21, %cst_25 {dimension_numbers = #tpu.dot_dimension_numbers<[1], [0], [0], [1], [0, 0, 1, 1], [], []>} : vector<8x4xf32>, vector<4x8xf32>, vector<8x8xf32> -> vector<8x8xf32>
    %23 = arith.addf %19, %22 : vector<8x8xf32>
    %c0_26 = arith.constant 0 : index
    %c0_27 = arith.constant 0 : index
    %c0_28 = arith.constant 0 : index
    %c0_29 = arith.constant 0 : index
    %c0_30 = arith.constant 0 : index
    %24 = vector.load %arg3[%c0_26, %c0_27, %c0_28, %c0_29, %c0_30] : memref<1x1x9x4x9xf32, #tpu.memory_space<vmem>>, vector<1x1x1x4x8xf32>
    %25 = vector.shape_cast %24 : vector<1x1x1x4x8xf32> to vector<4x8xf32>
    %cst_31 = arith.constant dense<0.000000e+00> : vector<8x8xf32>
    %26 = tpu.matmul %4, %25, %cst_31 {dimension_numbers = #tpu.dot_dimension_numbers<[1], [0], [0], [1], [0, 0, 1, 1], [], []>} : vector<8x4xf32>, vector<4x8xf32>, vector<8x8xf32> -> vector<8x8xf32>
    %27 = arith.addf %23, %26 : vector<8x8xf32>
    %c0_32 = arith.constant 0 : index
    %c0_33 = arith.constant 0 : index
    %c0_34 = arith.constant 0 : index
    %c0_35 = arith.constant 0 : index
    %c1_36 = arith.constant 1 : index
    %28 = vector.load %arg2[%c0_32, %c0_33, %c0_34, %c0_35, %c1_36] : memref<1x1x9x4x9xf32, #tpu.memory_space<vmem>>, vector<1x1x1x4x8xf32>
    %29 = vector.shape_cast %28 : vector<1x1x1x4x8xf32> to vector<4x8xf32>
    %cst_37 = arith.constant dense<0.000000e+00> : vector<8x8xf32>
    %30 = tpu.matmul %6, %29, %cst_37 {dimension_numbers = #tpu.dot_dimension_numbers<[1], [0], [0], [1], [0, 0, 1, 1], [], []>} : vector<8x4xf32>, vector<4x8xf32>, vector<8x8xf32> -> vector<8x8xf32>
    %31 = arith.addf %27, %30 : vector<8x8xf32>
    %c0_38 = arith.constant 0 : index
    %c0_39 = arith.constant 0 : index
    %c0_40 = arith.constant 0 : index
    %c0_41 = arith.constant 0 : index
    %c0_42 = arith.constant 0 : index
    %32 = vector.load %arg4[%c0_38, %c0_39, %c0_40, %c0_41, %c0_42] : memref<1x1x9x4x9xf32, #tpu.memory_space<vmem>>, vector<1x1x1x4x8xf32>
    %33 = vector.shape_cast %32 : vector<1x1x1x4x8xf32> to vector<4x8xf32>
    %cst_43 = arith.constant dense<0.000000e+00> : vector<8x8xf32>
    %34 = tpu.matmul %8, %33, %cst_43 {dimension_numbers = #tpu.dot_dimension_numbers<[1], [0], [0], [1], [0, 0, 1, 1], [], []>} : vector<8x4xf32>, vector<4x8xf32>, vector<8x8xf32> -> vector<8x8xf32>
    %35 = arith.addf %31, %34 : vector<8x8xf32>
    %c0_44 = arith.constant 0 : index
    %c0_45 = arith.constant 0 : index
    %c0_46 = arith.constant 0 : index
    %c0_47 = arith.constant 0 : index
    %c0_48 = arith.constant 0 : index
    %36 = vector.load %arg5[%c0_44, %c0_45, %c0_46, %c0_47, %c0_48] : memref<1x1x9x4x9xf32, #tpu.memory_space<vmem>>, vector<1x1x1x4x8xf32>
    %37 = vector.shape_cast %36 : vector<1x1x1x4x8xf32> to vector<4x8xf32>
    %cst_49 = arith.constant dense<0.000000e+00> : vector<8x8xf32>
    %38 = tpu.matmul %10, %37, %cst_49 {dimension_numbers = #tpu.dot_dimension_numbers<[1], [0], [0], [1], [0, 0, 1, 1], [], []>} : vector<8x4xf32>, vector<4x8xf32>, vector<8x8xf32> -> vector<8x8xf32>
    %39 = arith.addf %35, %38 : vector<8x8xf32>
    %c0_50 = arith.constant 0 : index
    %c0_51 = arith.constant 0 : index
    %c0_52 = arith.constant 0 : index
    %c0_53 = arith.constant 0 : index
    %c1_54 = arith.constant 1 : index
    %40 = vector.load %arg4[%c0_50, %c0_51, %c0_52, %c0_53, %c1_54] : memref<1x1x9x4x9xf32, #tpu.memory_space<vmem>>, vector<1x1x1x4x8xf32>
    %41 = vector.shape_cast %40 : vector<1x1x1x4x8xf32> to vector<4x8xf32>
    %cst_55 = arith.constant dense<0.000000e+00> : vector<8x8xf32>
    %42 = tpu.matmul %12, %41, %cst_55 {dimension_numbers = #tpu.dot_dimension_numbers<[1], [0], [0], [1], [0, 0, 1, 1], [], []>} : vector<8x4xf32>, vector<4x8xf32>, vector<8x8xf32> -> vector<8x8xf32>
    %43 = arith.addf %39, %42 : vector<8x8xf32>
    %c0_56 = arith.constant 0 : index
    %c0_57 = arith.constant 0 : index
    %c1_58 = arith.constant 1 : index
    %c0_59 = arith.constant 0 : index
    %c0_60 = arith.constant 0 : index
    %44 = vector.load %arg2[%c0_56, %c0_57, %c1_58, %c0_59, %c0_60] : memref<1x1x9x4x9xf32, #tpu.memory_space<vmem>>, vector<1x1x1x4x8xf32>
    %45 = vector.shape_cast %44 : vector<1x1x1x4x8xf32> to vector<4x8xf32>
    %cst_61 = arith.constant dense<0.000000e+00> : vector<8x8xf32>
    %46 = tpu.matmul %14, %45, %cst_61 {dimension_numbers = #tpu.dot_dimension_numbers<[1], [0], [0], [1], [0, 0, 1, 1], [], []>} : vector<8x4xf32>, vector<4x8xf32>, vector<8x8xf32> -> vector<8x8xf32>
    %47 = arith.addf %43, %46 : vector<8x8xf32>
    %c0_62 = arith.constant 0 : index
    %c0_63 = arith.constant 0 : index
    %c1_64 = arith.constant 1 : index
    %c0_65 = arith.constant 0 : index
    %c0_66 = arith.constant 0 : index
    %48 = vector.load %arg3[%c0_62, %c0_63, %c1_64, %c0_65, %c0_66] : memref<1x1x9x4x9xf32, #tpu.memory_space<vmem>>, vector<1x1x1x4x8xf32>
    %49 = vector.shape_cast %48 : vector<1x1x1x4x8xf32> to vector<4x8xf32>
    %cst_67 = arith.constant dense<0.000000e+00> : vector<8x8xf32>
    %50 = tpu.matmul %16, %49, %cst_67 {dimension_numbers = #tpu.dot_dimension_numbers<[1], [0], [0], [1], [0, 0, 1, 1], [], []>} : vector<8x4xf32>, vector<4x8xf32>, vector<8x8xf32> -> vector<8x8xf32>
    %51 = arith.addf %47, %50 : vector<8x8xf32>
    %c0_68 = arith.constant 0 : index
    %c0_69 = arith.constant 0 : index
    %c1_70 = arith.constant 1 : index
    %c0_71 = arith.constant 0 : index
    %c1_72 = arith.constant 1 : index
    %52 = vector.load %arg2[%c0_68, %c0_69, %c1_70, %c0_71, %c1_72] : memref<1x1x9x4x9xf32, #tpu.memory_space<vmem>>, vector<1x1x1x4x8xf32>
    %53 = vector.shape_cast %52 : vector<1x1x1x4x8xf32> to vector<4x8xf32>
    %cst_73 = arith.constant dense<0.000000e+00> : vector<8x8xf32>
    %54 = tpu.matmul %18, %53, %cst_73 {dimension_numbers = #tpu.dot_dimension_numbers<[1], [0], [0], [1], [0, 0, 1, 1], [], []>} : vector<8x4xf32>, vector<4x8xf32>, vector<8x8xf32> -> vector<8x8xf32>
    %55 = arith.addf %51, %54 : vector<8x8xf32>
    %56 = vector.broadcast %0 : vector<8x1xf32> to vector<8x8xf32>
    %57 = arith.addf %55, %56 : vector<8x8xf32>
    %cst_74 = arith.constant 0.000000e+00 : f32
    %58 = vector.broadcast %cst_74 : f32 to vector<8x8xf32>
    %59 = arith.maximumf %57, %58 : vector<8x8xf32>
    %c0_75 = arith.constant 0 : index
    %c0_76 = arith.constant 0 : index
    %c0_77 = arith.constant 0 : index
    %c0_78 = arith.constant 0 : index
    %60 = vector.load %arg8[%c0_75, %c0_76, %c0_77, %c0_78] : memref<1x8x8x8xf32, #tpu.memory_space<vmem>>, vector<1x8x1x8xf32>
    %61 = vector.shape_cast %60 : vector<1x8x1x8xf32> to vector<8x8xf32>
    %62 = vector.shape_cast %59 : vector<8x8xf32> to vector<1x8x1x8xf32>
    tpu.vector_store %arg8[%c0_75, %c0_76, %c0_77, %c0_78], %62 {strides = array<i32>} : memref<1x8x8x8xf32, #tpu.memory_space<vmem>>, vector<1x8x1x8xf32>,
    %cst_79 = arith.constant 0.000000e+00 : f32
    %63 = vector.broadcast %cst_79 : f32 to vector<8x8xf32>
    %c0_80 = arith.constant 0 : index
    %c0_81 = arith.constant 0 : index
    %c1_82 = arith.constant 1 : index
    %c0_83 = arith.constant 0 : index
    %c0_84 = arith.constant 0 : index
    %64 = vector.load %arg2[%c0_80, %c0_81, %c1_82, %c0_83, %c0_84] : memref<1x1x9x4x9xf32, #tpu.memory_space<vmem>>, vector<1x1x1x4x8xf32>
    %65 = vector.shape_cast %64 : vector<1x1x1x4x8xf32> to vector<4x8xf32>
    %cst_85 = arith.constant dense<0.000000e+00> : vector<8x8xf32>
    %66 = tpu.matmul %2, %65, %cst_85 {dimension_numbers = #tpu.dot_dimension_numbers<[1], [0], [0], [1], [0, 0, 1, 1], [], []>} : vector<8x4xf32>, vector<4x8xf32>, vector<8x8xf32> -> vector<8x8xf32>
    %67 = arith.addf %63, %66 : vector<8x8xf32>
    %c0_86 = arith.constant 0 : index
    %c0_87 = arith.constant 0 : index
    %c1_88 = arith.constant 1 : index
    %c0_89 = arith.constant 0 : index
    %c0_90 = arith.constant 0 : index
    %68 = vector.load %arg3[%c0_86, %c0_87, %c1_88, %c0_89, %c0_90] : memref<1x1x9x4x9xf32, #tpu.memory_space<vmem>>, vector<1x1x1x4x8xf32>
    %69 = vector.shape_cast %68 : vector<1x1x1x4x8xf32> to vector<4x8xf32>
    %cst_91 = arith.constant dense<0.000000e+00> : vector<8x8xf32>
    %70 = tpu.matmul %4, %69, %cst_91 {dimension_numbers = #tpu.dot_dimension_numbers<[1], [0], [0], [1], [0, 0, 1, 1], [], []>} : vector<8x4xf32>, vector<4x8xf32>, vector<8x8xf32> -> vector<8x8xf32>
    %71 = arith.addf %67, %70 : vector<8x8xf32>
    %c0_92 = arith.constant 0 : index
    %c0_93 = arith.constant 0 : index
    %c1_94 = arith.constant 1 : index
    %c0_95 = arith.constant 0 : index
    %c1_96 = arith.constant 1 : index
    %72 = vector.load %arg2[%c0_92, %c0_93, %c1_94, %c0_95, %c1_96] : memref<1x1x9x4x9xf32, #tpu.memory_space<vmem>>, vector<1x1x1x4x8xf32>
    %73 = vector.shape_cast %72 : vector<1x1x1x4x8xf32> to vector<4x8xf32>
    %cst_97 = arith.constant dense<0.000000e+00> : vector<8x8xf32>
    %74 = tpu.matmul %6, %73, %cst_97 {dimension_numbers = #tpu.dot_dimension_numbers<[1], [0], [0], [1], [0, 0, 1, 1], [], []>} : vector<8x4xf32>, vector<4x8xf32>, vector<8x8xf32> -> vector<8x8xf32>
    %75 = arith.addf %71, %74 : vector<8x8xf32>
    %c0_98 = arith.constant 0 : index
    %c0_99 = arith.constant 0 : index
    %c1_100 = arith.constant 1 : index
    %c0_101 = arith.constant 0 : index
    %c0_102 = arith.constant 0 : index
    %76 = vector.load %arg4[%c0_98, %c0_99, %c1_100, %c0_101, %c0_102] : memref<1x1x9x4x9xf32, #tpu.memory_space<vmem>>, vector<1x1x1x4x8xf32>
    %77 = vector.shape_cast %76 : vector<1x1x1x4x8xf32> to vector<4x8xf32>
    %cst_103 = arith.constant dense<0.000000e+00> : vector<8x8xf32>
    %78 = tpu.matmul %8, %77, %cst_103 {dimension_numbers = #tpu.dot_dimension_numbers<[1], [0], [0], [1], [0, 0, 1, 1], [], []>} : vector<8x4xf32>, vector<4x8xf32>, vector<8x8xf32> -> vector<8x8xf32>
    %79 = arith.addf %75, %78 : vector<8x8xf32>
    %c0_104 = arith.constant 0 : index
    %c0_105 = arith.constant 0 : index
    %c1_106 = arith.constant 1 : index
    %c0_107 = arith.constant 0 : index
    %c0_108 = arith.constant 0 : index
    %80 = vector.load %arg5[%c0_104, %c0_105, %c1_106, %c0_107, %c0_108] : memref<1x1x9x4x9xf32, #tpu.memory_space<vmem>>, vector<1x1x1x4x8xf32>
    %81 = vector.shape_cast %80 : vector<1x1x1x4x8xf32> to vector<4x8xf32>
    %cst_109 = arith.constant dense<0.000000e+00> : vector<8x8xf32>
    %82 = tpu.matmul %10, %81, %cst_109 {dimension_numbers = #tpu.dot_dimension_numbers<[1], [0], [0], [1], [0, 0, 1, 1], [], []>} : vector<8x4xf32>, vector<4x8xf32>, vector<8x8xf32> -> vector<8x8xf32>
    %83 = arith.addf %79, %82 : vector<8x8xf32>
    %c0_110 = arith.constant 0 : index
    %c0_111 = arith.constant 0 : index
    %c1_112 = arith.constant 1 : index
    %c0_113 = arith.constant 0 : index
    %c1_114 = arith.constant 1 : index
    %84 = vector.load %arg4[%c0_110, %c0_111, %c1_112, %c0_113, %c1_114] : memref<1x1x9x4x9xf32, #tpu.memory_space<vmem>>, vector<1x1x1x4x8xf32>
    %85 = vector.shape_cast %84 : vector<1x1x1x4x8xf32> to vector<4x8xf32>
    %cst_115 = arith.constant dense<0.000000e+00> : vector<8x8xf32>
    %86 = tpu.matmul %12, %85, %cst_115 {dimension_numbers = #tpu.dot_dimension_numbers<[1], [0], [0], [1], [0, 0, 1, 1], [], []>} : vector<8x4xf32>, vector<4x8xf32>, vector<8x8xf32> -> vector<8x8xf32>
    %87 = arith.addf %83, %86 : vector<8x8xf32>
    %c0_116 = arith.constant 0 : index
    %c0_117 = arith.constant 0 : index
    %c2_118 = arith.constant 2 : index
    %c0_119 = arith.constant 0 : index
    %c0_120 = arith.constant 0 : index
    %88 = vector.load %arg2[%c0_116, %c0_117, %c2_118, %c0_119, %c0_120] : memref<1x1x9x4x9xf32, #tpu.memory_space<vmem>>, vector<1x1x1x4x8xf32>
    %89 = vector.shape_cast %88 : vector<1x1x1x4x8xf32> to vector<4x8xf32>
    %cst_121 = arith.constant dense<0.000000e+00> : vector<8x8xf32>
    %90 = tpu.matmul %14, %89, %cst_121 {dimension_numbers = #tpu.dot_dimension_numbers<[1], [0], [0], [1], [0, 0, 1, 1], [], []>} : vector<8x4xf32>, vector<4x8xf32>, vector<8x8xf32> -> vector<8x8xf32>
    %91 = arith.addf %87, %90 : vector<8x8xf32>
    %c0_122 = arith.constant 0 : index
    %c0_123 = arith.constant 0 : index
    %c2_124 = arith.constant 2 : index
    %c0_125 = arith.constant 0 : index
    %c0_126 = arith.constant 0 : index
    %92 = vector.load %arg3[%c0_122, %c0_123, %c2_124, %c0_125, %c0_126] : memref<1x1x9x4x9xf32, #tpu.memory_space<vmem>>, vector<1x1x1x4x8xf32>
    %93 = vector.shape_cast %92 : vector<1x1x1x4x8xf32> to vector<4x8xf32>
    %cst_127 = arith.constant dense<0.000000e+00> : vector<8x8xf32>
    %94 = tpu.matmul %16, %93, %cst_127 {dimension_numbers = #tpu.dot_dimension_numbers<[1], [0], [0], [1], [0, 0, 1, 1], [], []>} : vector<8x4xf32>, vector<4x8xf32>, vector<8x8xf32> -> vector<8x8xf32>
    %95 = arith.addf %91, %94 : vector<8x8xf32>
    %c0_128 = arith.constant 0 : index
    %c0_129 = arith.constant 0 : index
    %c2_130 = arith.constant 2 : index
    %c0_131 = arith.constant 0 : index
    %c1_132 = arith.constant 1 : index
    %96 = vector.load %arg2[%c0_128, %c0_129, %c2_130, %c0_131, %c1_132] : memref<1x1x9x4x9xf32, #tpu.memory_space<vmem>>, vector<1x1x1x4x8xf32>
    %97 = vector.shape_cast %96 : vector<1x1x1x4x8xf32> to vector<4x8xf32>
    %cst_133 = arith.constant dense<0.000000e+00> : vector<8x8xf32>
    %98 = tpu.matmul %18, %97, %cst_133 {dimension_numbers = #tpu.dot_dimension_numbers<[1], [0], [0], [1], [0, 0, 1, 1], [], []>} : vector<8x4xf32>, vector<4x8xf32>, vector<8x8xf32> -> vector<8x8xf32>
    %99 = arith.addf %95, %98 : vector<8x8xf32>
    %100 = vector.broadcast %0 : vector<8x1xf32> to vector<8x8xf32>
    %101 = arith.addf %99, %100 : vector<8x8xf32>
    %cst_134 = arith.constant 0.000000e+00 : f32
    %102 = vector.broadcast %cst_134 : f32 to vector<8x8xf32>
    %103 = arith.maximumf %101, %102 : vector<8x8xf32>
    %c0_135 = arith.constant 0 : index
    %c0_136 = arith.constant 0 : index
    %c1_137 = arith.constant 1 : index
    %c0_138 = arith.constant 0 : index
    %104 = vector.load %arg8[%c0_135, %c0_136, %c1_137, %c0_138] : memref<1x8x8x8xf32, #tpu.memory_space<vmem>>, vector<1x8x1x8xf32>
    %105 = vector.shape_cast %104 : vector<1x8x1x8xf32> to vector<8x8xf32>
    %106 = vector.shape_cast %103 : vector<8x8xf32> to vector<1x8x1x8xf32>
    tpu.vector_store %arg8[%c0_135, %c0_136, %c1_137, %c0_138], %106 {strides = array<i32>} : memref<1x8x8x8xf32, #tpu.memory_space<vmem>>, vector<1x8x1x8xf32>,
    %cst_139 = arith.constant 0.000000e+00 : f32
    %107 = vector.broadcast %cst_139 : f32 to vector<8x8xf32>
    %c0_140 = arith.constant 0 : index
    %c0_141 = arith.constant 0 : index
    %c2_142 = arith.constant 2 : index
    %c0_143 = arith.constant 0 : index
    %c0_144 = arith.constant 0 : index
    %108 = vector.load %arg2[%c0_140, %c0_141, %c2_142, %c0_143, %c0_144] : memref<1x1x9x4x9xf32, #tpu.memory_space<vmem>>, vector<1x1x1x4x8xf32>
    %109 = vector.shape_cast %108 : vector<1x1x1x4x8xf32> to vector<4x8xf32>
    %cst_145 = arith.constant dense<0.000000e+00> : vector<8x8xf32>
    %110 = tpu.matmul %2, %109, %cst_145 {dimension_numbers = #tpu.dot_dimension_numbers<[1], [0], [0], [1], [0, 0, 1, 1], [], []>} : vector<8x4xf32>, vector<4x8xf32>, vector<8x8xf32> -> vector<8x8xf32>
    %111 = arith.addf %107, %110 : vector<8x8xf32>
    %c0_146 = arith.constant 0 : index
    %c0_147 = arith.constant 0 : index
    %c2_148 = arith.constant 2 : index
    %c0_149 = arith.constant 0 : index
    %c0_150 = arith.constant 0 : index
    %112 = vector.load %arg3[%c0_146, %c0_147, %c2_148, %c0_149, %c0_150] : memref<1x1x9x4x9xf32, #tpu.memory_space<vmem>>, vector<1x1x1x4x8xf32>
    %113 = vector.shape_cast %112 : vector<1x1x1x4x8xf32> to vector<4x8xf32>
    %cst_151 = arith.constant dense<0.000000e+00> : vector<8x8xf32>
    %114 = tpu.matmul %4, %113, %cst_151 {dimension_numbers = #tpu.dot_dimension_numbers<[1], [0], [0], [1], [0, 0, 1, 1], [], []>} : vector<8x4xf32>, vector<4x8xf32>, vector<8x8xf32> -> vector<8x8xf32>
    %115 = arith.addf %111, %114 : vector<8x8xf32>
    %c0_152 = arith.constant 0 : index
    %c0_153 = arith.constant 0 : index
    %c2_154 = arith.constant 2 : index
    %c0_155 = arith.constant 0 : index
    %c1_156 = arith.constant 1 : index
    %116 = vector.load %arg2[%c0_152, %c0_153, %c2_154, %c0_155, %c1_156] : memref<1x1x9x4x9xf32, #tpu.memory_space<vmem>>, vector<1x1x1x4x8xf32>
    %117 = vector.shape_cast %116 : vector<1x1x1x4x8xf32> to vector<4x8xf32>
    %cst_157 = arith.constant dense<0.000000e+00> : vector<8x8xf32>
    %118 = tpu.matmul %6, %117, %cst_157 {dimension_numbers = #tpu.dot_dimension_numbers<[1], [0], [0], [1], [0, 0, 1, 1], [], []>} : vector<8x4xf32>, vector<4x8xf32>, vector<8x8xf32> -> vector<8x8xf32>
    %119 = arith.addf %115, %118 : vector<8x8xf32>
    %c0_158 = arith.constant 0 : index
    %c0_159 = arith.constant 0 : index
    %c2_160 = arith.constant 2 : index
    %c0_161 = arith.constant 0 : index
    %c0_162 = arith.constant 0 : index
    %120 = vector.load %arg4[%c0_158, %c0_159, %c2_160, %c0_161, %c0_162] : memref<1x1x9x4x9xf32, #tpu.memory_space<vmem>>, vector<1x1x1x4x8xf32>
    %121 = vector.shape_cast %120 : vector<1x1x1x4x8xf32> to vector<4x8xf32>
    %cst_163 = arith.constant dense<0.000000e+00> : vector<8x8xf32>
    %122 = tpu.matmul %8, %121, %cst_163 {dimension_numbers = #tpu.dot_dimension_numbers<[1], [0], [0], [1], [0, 0, 1, 1], [], []>} : vector<8x4xf32>, vector<4x8xf32>, vector<8x8xf32> -> vector<8x8xf32>
    %123 = arith.addf %119, %122 : vector<8x8xf32>
    %c0_164 = arith.constant 0 : index
    %c0_165 = arith.constant 0 : index
    %c2_166 = arith.constant 2 : index
    %c0_167 = arith.constant 0 : index
    %c0_168 = arith.constant 0 : index
    %124 = vector.load %arg5[%c0_164, %c0_165, %c2_166, %c0_167, %c0_168] : memref<1x1x9x4x9xf32, #tpu.memory_space<vmem>>, vector<1x1x1x4x8xf32>
    %125 = vector.shape_cast %124 : vector<1x1x1x4x8xf32> to vector<4x8xf32>
    %cst_169 = arith.constant dense<0.000000e+00> : vector<8x8xf32>
    %126 = tpu.matmul %10, %125, %cst_169 {dimension_numbers = #tpu.dot_dimension_numbers<[1], [0], [0], [1], [0, 0, 1, 1], [], []>} : vector<8x4xf32>, vector<4x8xf32>, vector<8x8xf32> -> vector<8x8xf32>
    %127 = arith.addf %123, %126 : vector<8x8xf32>
    %c0_170 = arith.constant 0 : index
    %c0_171 = arith.constant 0 : index
    %c2_172 = arith.constant 2 : index
    %c0_173 = arith.constant 0 : index
    %c1_174 = arith.constant 1 : index
    %128 = vector.load %arg4[%c0_170, %c0_171, %c2_172, %c0_173, %c1_174] : memref<1x1x9x4x9xf32, #tpu.memory_space<vmem>>, vector<1x1x1x4x8xf32>
    %129 = vector.shape_cast %128 : vector<1x1x1x4x8xf32> to vector<4x8xf32>
    %cst_175 = arith.constant dense<0.000000e+00> : vector<8x8xf32>
    %130 = tpu.matmul %12, %129, %cst_175 {dimension_numbers = #tpu.dot_dimension_numbers<[1], [0], [0], [1], [0, 0, 1, 1], [], []>} : vector<8x4xf32>, vector<4x8xf32>, vector<8x8xf32> -> vector<8x8xf32>
    %131 = arith.addf %127, %130 : vector<8x8xf32>
    %c0_176 = arith.constant 0 : index
    %c0_177 = arith.constant 0 : index
    %c3_178 = arith.constant 3 : index
    %c0_179 = arith.constant 0 : index
    %c0_180 = arith.constant 0 : index
    %132 = vector.load %arg2[%c0_176, %c0_177, %c3_178, %c0_179, %c0_180] : memref<1x1x9x4x9xf32, #tpu.memory_space<vmem>>, vector<1x1x1x4x8xf32>
    %133 = vector.shape_cast %132 : vector<1x1x1x4x8xf32> to vector<4x8xf32>
    %cst_181 = arith.constant dense<0.000000e+00> : vector<8x8xf32>
    %134 = tpu.matmul %14, %133, %cst_181 {dimension_numbers = #tpu.dot_dimension_numbers<[1], [0], [0], [1], [0, 0, 1, 1], [], []>} : vector<8x4xf32>, vector<4x8xf32>, vector<8x8xf32> -> vector<8x8xf32>
    %135 = arith.addf %131, %134 : vector<8x8xf32>
    %c0_182 = arith.constant 0 : index
    %c0_183 = arith.constant 0 : index
    %c3_184 = arith.constant 3 : index
    %c0_185 = arith.constant 0 : index
    %c0_186 = arith.constant 0 : index
    %136 = vector.load %arg3[%c0_182, %c0_183, %c3_184, %c0_185, %c0_186] : memref<1x1x9x4x9xf32, #tpu.memory_space<vmem>>, vector<1x1x1x4x8xf32>
    %137 = vector.shape_cast %136 : vector<1x1x1x4x8xf32> to vector<4x8xf32>
    %cst_187 = arith.constant dense<0.000000e+00> : vector<8x8xf32>
    %138 = tpu.matmul %16, %137, %cst_187 {dimension_numbers = #tpu.dot_dimension_numbers<[1], [0], [0], [1], [0, 0, 1, 1], [], []>} : vector<8x4xf32>, vector<4x8xf32>, vector<8x8xf32> -> vector<8x8xf32>
    %139 = arith.addf %135, %138 : vector<8x8xf32>
    %c0_188 = arith.constant 0 : index
    %c0_189 = arith.constant 0 : index
    %c3_190 = arith.constant 3 : index
    %c0_191 = arith.constant 0 : index
    %c1_192 = arith.constant 1 : index
    %140 = vector.load %arg2[%c0_188, %c0_189, %c3_190, %c0_191, %c1_192] : memref<1x1x9x4x9xf32, #tpu.memory_space<vmem>>, vector<1x1x1x4x8xf32>
    %141 = vector.shape_cast %140 : vector<1x1x1x4x8xf32> to vector<4x8xf32>
    %cst_193 = arith.constant dense<0.000000e+00> : vector<8x8xf32>
    %142 = tpu.matmul %18, %141, %cst_193 {dimension_numbers = #tpu.dot_dimension_numbers<[1], [0], [0], [1], [0, 0, 1, 1], [], []>} : vector<8x4xf32>, vector<4x8xf32>, vector<8x8xf32> -> vector<8x8xf32>
    %143 = arith.addf %139, %142 : vector<8x8xf32>
    %144 = vector.broadcast %0 : vector<8x1xf32> to vector<8x8xf32>
    %145 = arith.addf %143, %144 : vector<8x8xf32>
    %cst_194 = arith.constant 0.000000e+00 : f32
    %146 = vector.broadcast %cst_194 : f32 to vector<8x8xf32>
    %147 = arith.maximumf %145, %146 : vector<8x8xf32>
    %c0_195 = arith.constant 0 : index
    %c0_196 = arith.constant 0 : index
    %c2_197 = arith.constant 2 : index
    %c0_198 = arith.constant 0 : index
    %148 = vector.load %arg8[%c0_195, %c0_196, %c2_197, %c0_198] : memref<1x8x8x8xf32, #tpu.memory_space<vmem>>, vector<1x8x1x8xf32>
    %149 = vector.shape_cast %148 : vector<1x8x1x8xf32> to vector<8x8xf32>
    %150 = vector.shape_cast %147 : vector<8x8xf32> to vector<1x8x1x8xf32>
    tpu.vector_store %arg8[%c0_195, %c0_196, %c2_197, %c0_198], %150 {strides = array<i32>} : memref<1x8x8x8xf32, #tpu.memory_space<vmem>>, vector<1x8x1x8xf32>,
    %cst_199 = arith.constant 0.000000e+00 : f32
    %151 = vector.broadcast %cst_199 : f32 to vector<8x8xf32>
    %c0_200 = arith.constant 0 : index
    %c0_201 = arith.constant 0 : index
    %c3_202 = arith.constant 3 : index
    %c0_203 = arith.constant 0 : index
    %c0_204 = arith.constant 0 : index
    %152 = vector.load %arg2[%c0_200, %c0_201, %c3_202, %c0_203, %c0_204] : memref<1x1x9x4x9xf32, #tpu.memory_space<vmem>>, vector<1x1x1x4x8xf32>
    %153 = vector.shape_cast %152 : vector<1x1x1x4x8xf32> to vector<4x8xf32>
    %cst_205 = arith.constant dense<0.000000e+00> : vector<8x8xf32>
    %154 = tpu.matmul %2, %153, %cst_205 {dimension_numbers = #tpu.dot_dimension_numbers<[1], [0], [0], [1], [0, 0, 1, 1], [], []>} : vector<8x4xf32>, vector<4x8xf32>, vector<8x8xf32> -> vector<8x8xf32>
    %155 = arith.addf %151, %154 : vector<8x8xf32>
    %c0_206 = arith.constant 0 : index
    %c0_207 = arith.constant 0 : index
    %c3_208 = arith.constant 3 : index
    %c0_209 = arith.constant 0 : index
    %c0_210 = arith.constant 0 : index
    %156 = vector.load %arg3[%c0_206, %c0_207, %c3_208, %c0_209, %c0_210] : memref<1x1x9x4x9xf32, #tpu.memory_space<vmem>>, vector<1x1x1x4x8xf32>
    %157 = vector.shape_cast %156 : vector<1x1x1x4x8xf32> to vector<4x8xf32>
    %cst_211 = arith.constant dense<0.000000e+00> : vector<8x8xf32>
    %158 = tpu.matmul %4, %157, %cst_211 {dimension_numbers = #tpu.dot_dimension_numbers<[1], [0], [0], [1], [0, 0, 1, 1], [], []>} : vector<8x4xf32>, vector<4x8xf32>, vector<8x8xf32> -> vector<8x8xf32>
    %159 = arith.addf %155, %158 : vector<8x8xf32>
    %c0_212 = arith.constant 0 : index
    %c0_213 = arith.constant 0 : index
    %c3_214 = arith.constant 3 : index
    %c0_215 = arith.constant 0 : index
    %c1_216 = arith.constant 1 : index
    %160 = vector.load %arg2[%c0_212, %c0_213, %c3_214, %c0_215, %c1_216] : memref<1x1x9x4x9xf32, #tpu.memory_space<vmem>>, vector<1x1x1x4x8xf32>
    %161 = vector.shape_cast %160 : vector<1x1x1x4x8xf32> to vector<4x8xf32>
    %cst_217 = arith.constant dense<0.000000e+00> : vector<8x8xf32>
    %162 = tpu.matmul %6, %161, %cst_217 {dimension_numbers = #tpu.dot_dimension_numbers<[1], [0], [0], [1], [0, 0, 1, 1], [], []>} : vector<8x4xf32>, vector<4x8xf32>, vector<8x8xf32> -> vector<8x8xf32>
    %163 = arith.addf %159, %162 : vector<8x8xf32>
    %c0_218 = arith.constant 0 : index
    %c0_219 = arith.constant 0 : index
    %c3_220 = arith.constant 3 : index
    %c0_221 = arith.constant 0 : index
    %c0_222 = arith.constant 0 : index
    %164 = vector.load %arg4[%c0_218, %c0_219, %c3_220, %c0_221, %c0_222] : memref<1x1x9x4x9xf32, #tpu.memory_space<vmem>>, vector<1x1x1x4x8xf32>
    %165 = vector.shape_cast %164 : vector<1x1x1x4x8xf32> to vector<4x8xf32>
    %cst_223 = arith.constant dense<0.000000e+00> : vector<8x8xf32>
    %166 = tpu.matmul %8, %165, %cst_223 {dimension_numbers = #tpu.dot_dimension_numbers<[1], [0], [0], [1], [0, 0, 1, 1], [], []>} : vector<8x4xf32>, vector<4x8xf32>, vector<8x8xf32> -> vector<8x8xf32>
    %167 = arith.addf %163, %166 : vector<8x8xf32>
    %c0_224 = arith.constant 0 : index
    %c0_225 = arith.constant 0 : index
    %c3_226 = arith.constant 3 : index
    %c0_227 = arith.constant 0 : index
    %c0_228 = arith.constant 0 : index
    %168 = vector.load %arg5[%c0_224, %c0_225, %c3_226, %c0_227, %c0_228] : memref<1x1x9x4x9xf32, #tpu.memory_space<vmem>>, vector<1x1x1x4x8xf32>
    %169 = vector.shape_cast %168 : vector<1x1x1x4x8xf32> to vector<4x8xf32>
    %cst_229 = arith.constant dense<0.000000e+00> : vector<8x8xf32>
    %170 = tpu.matmul %10, %169, %cst_229 {dimension_numbers = #tpu.dot_dimension_numbers<[1], [0], [0], [1], [0, 0, 1, 1], [], []>} : vector<8x4xf32>, vector<4x8xf32>, vector<8x8xf32> -> vector<8x8xf32>
    %171 = arith.addf %167, %170 : vector<8x8xf32>
    %c0_230 = arith.constant 0 : index
    %c0_231 = arith.constant 0 : index
    %c3_232 = arith.constant 3 : index
    %c0_233 = arith.constant 0 : index
    %c1_234 = arith.constant 1 : index
    %172 = vector.load %arg4[%c0_230, %c0_231, %c3_232, %c0_233, %c1_234] : memref<1x1x9x4x9xf32, #tpu.memory_space<vmem>>, vector<1x1x1x4x8xf32>
    %173 = vector.shape_cast %172 : vector<1x1x1x4x8xf32> to vector<4x8xf32>
    %cst_235 = arith.constant dense<0.000000e+00> : vector<8x8xf32>
    %174 = tpu.matmul %12, %173, %cst_235 {dimension_numbers = #tpu.dot_dimension_numbers<[1], [0], [0], [1], [0, 0, 1, 1], [], []>} : vector<8x4xf32>, vector<4x8xf32>, vector<8x8xf32> -> vector<8x8xf32>
    %175 = arith.addf %171, %174 : vector<8x8xf32>
    %c0_236 = arith.constant 0 : index
    %c0_237 = arith.constant 0 : index
    %c4_238 = arith.constant 4 : index
    %c0_239 = arith.constant 0 : index
    %c0_240 = arith.constant 0 : index
    %176 = vector.load %arg2[%c0_236, %c0_237, %c4_238, %c0_239, %c0_240] : memref<1x1x9x4x9xf32, #tpu.memory_space<vmem>>, vector<1x1x1x4x8xf32>
    %177 = vector.shape_cast %176 : vector<1x1x1x4x8xf32> to vector<4x8xf32>
    %cst_241 = arith.constant dense<0.000000e+00> : vector<8x8xf32>
    %178 = tpu.matmul %14, %177, %cst_241 {dimension_numbers = #tpu.dot_dimension_numbers<[1], [0], [0], [1], [0, 0, 1, 1], [], []>} : vector<8x4xf32>, vector<4x8xf32>, vector<8x8xf32> -> vector<8x8xf32>
    %179 = arith.addf %175, %178 : vector<8x8xf32>
    %c0_242 = arith.constant 0 : index
    %c0_243 = arith.constant 0 : index
    %c4_244 = arith.constant 4 : index
    %c0_245 = arith.constant 0 : index
    %c0_246 = arith.constant 0 : index
    %180 = vector.load %arg3[%c0_242, %c0_243, %c4_244, %c0_245, %c0_246] : memref<1x1x9x4x9xf32, #tpu.memory_space<vmem>>, vector<1x1x1x4x8xf32>
    %181 = vector.shape_cast %180 : vector<1x1x1x4x8xf32> to vector<4x8xf32>
    %cst_247 = arith.constant dense<0.000000e+00> : vector<8x8xf32>
    %182 = tpu.matmul %16, %181, %cst_247 {dimension_numbers = #tpu.dot_dimension_numbers<[1], [0], [0], [1], [0, 0, 1, 1], [], []>} : vector<8x4xf32>, vector<4x8xf32>, vector<8x8xf32> -> vector<8x8xf32>
    %183 = arith.addf %179, %182 : vector<8x8xf32>
    %c0_248 = arith.constant 0 : index
    %c0_249 = arith.constant 0 : index
    %c4_250 = arith.constant 4 : index
    %c0_251 = arith.constant 0 : index
    %c1_252 = arith.constant 1 : index
    %184 = vector.load %arg2[%c0_248, %c0_249, %c4_250, %c0_251, %c1_252] : memref<1x1x9x4x9xf32, #tpu.memory_space<vmem>>, vector<1x1x1x4x8xf32>
    %185 = vector.shape_cast %184 : vector<1x1x1x4x8xf32> to vector<4x8xf32>
    %cst_253 = arith.constant dense<0.000000e+00> : vector<8x8xf32>
    %186 = tpu.matmul %18, %185, %cst_253 {dimension_numbers = #tpu.dot_dimension_numbers<[1], [0], [0], [1], [0, 0, 1, 1], [], []>} : vector<8x4xf32>, vector<4x8xf32>, vector<8x8xf32> -> vector<8x8xf32>
    %187 = arith.addf %183, %186 : vector<8x8xf32>
    %188 = vector.broadcast %0 : vector<8x1xf32> to vector<8x8xf32>
    %189 = arith.addf %187, %188 : vector<8x8xf32>
    %cst_254 = arith.constant 0.000000e+00 : f32
    %190 = vector.broadcast %cst_254 : f32 to vector<8x8xf32>
    %191 = arith.maximumf %189, %190 : vector<8x8xf32>
    %c0_255 = arith.constant 0 : index
    %c0_256 = arith.constant 0 : index
    %c3_257 = arith.constant 3 : index
    %c0_258 = arith.constant 0 : index
    %192 = vector.load %arg8[%c0_255, %c0_256, %c3_257, %c0_258] : memref<1x8x8x8xf32, #tpu.memory_space<vmem>>, vector<1x8x1x8xf32>
    %193 = vector.shape_cast %192 : vector<1x8x1x8xf32> to vector<8x8xf32>
    %194 = vector.shape_cast %191 : vector<8x8xf32> to vector<1x8x1x8xf32>
    tpu.vector_store %arg8[%c0_255, %c0_256, %c3_257, %c0_258], %194 {strides = array<i32>} : memref<1x8x8x8xf32, #tpu.memory_space<vmem>>, vector<1x8x1x8xf32>,
    %cst_259 = arith.constant 0.000000e+00 : f32
    %195 = vector.broadcast %cst_259 : f32 to vector<8x8xf32>
    %c0_260 = arith.constant 0 : index
    %c0_261 = arith.constant 0 : index
    %c4_262 = arith.constant 4 : index
    %c0_263 = arith.constant 0 : index
    %c0_264 = arith.constant 0 : index
    %196 = vector.load %arg2[%c0_260, %c0_261, %c4_262, %c0_263, %c0_264] : memref<1x1x9x4x9xf32, #tpu.memory_space<vmem>>, vector<1x1x1x4x8xf32>
    %197 = vector.shape_cast %196 : vector<1x1x1x4x8xf32> to vector<4x8xf32>
    %cst_265 = arith.constant dense<0.000000e+00> : vector<8x8xf32>
    %198 = tpu.matmul %2, %197, %cst_265 {dimension_numbers = #tpu.dot_dimension_numbers<[1], [0], [0], [1], [0, 0, 1, 1], [], []>} : vector<8x4xf32>, vector<4x8xf32>, vector<8x8xf32> -> vector<8x8xf32>
    %199 = arith.addf %195, %198 : vector<8x8xf32>
    %c0_266 = arith.constant 0 : index
    %c0_267 = arith.constant 0 : index
    %c4_268 = arith.constant 4 : index
    %c0_269 = arith.constant 0 : index
    %c0_270 = arith.constant 0 : index
    %200 = vector.load %arg3[%c0_266, %c0_267, %c4_268, %c0_269, %c0_270] : memref<1x1x9x4x9xf32, #tpu.memory_space<vmem>>, vector<1x1x1x4x8xf32>
    %201 = vector.shape_cast %200 : vector<1x1x1x4x8xf32> to vector<4x8xf32>
    %cst_271 = arith.constant dense<0.000000e+00> : vector<8x8xf32>
    %202 = tpu.matmul %4, %201, %cst_271 {dimension_numbers = #tpu.dot_dimension_numbers<[1], [0], [0], [1], [0, 0, 1, 1], [], []>} : vector<8x4xf32>, vector<4x8xf32>, vector<8x8xf32> -> vector<8x8xf32>
    %203 = arith.addf %199, %202 : vector<8x8xf32>
    %c0_272 = arith.constant 0 : index
    %c0_273 = arith.constant 0 : index
    %c4_274 = arith.constant 4 : index
    %c0_275 = arith.constant 0 : index
    %c1_276 = arith.constant 1 : index
    %204 = vector.load %arg2[%c0_272, %c0_273, %c4_274, %c0_275, %c1_276] : memref<1x1x9x4x9xf32, #tpu.memory_space<vmem>>, vector<1x1x1x4x8xf32>
    %205 = vector.shape_cast %204 : vector<1x1x1x4x8xf32> to vector<4x8xf32>
    %cst_277 = arith.constant dense<0.000000e+00> : vector<8x8xf32>
    %206 = tpu.matmul %6, %205, %cst_277 {dimension_numbers = #tpu.dot_dimension_numbers<[1], [0], [0], [1], [0, 0, 1, 1], [], []>} : vector<8x4xf32>, vector<4x8xf32>, vector<8x8xf32> -> vector<8x8xf32>
    %207 = arith.addf %203, %206 : vector<8x8xf32>
    %c0_278 = arith.constant 0 : index
    %c0_279 = arith.constant 0 : index
    %c4_280 = arith.constant 4 : index
    %c0_281 = arith.constant 0 : index
    %c0_282 = arith.constant 0 : index
    %208 = vector.load %arg4[%c0_278, %c0_279, %c4_280, %c0_281, %c0_282] : memref<1x1x9x4x9xf32, #tpu.memory_space<vmem>>, vector<1x1x1x4x8xf32>
    %209 = vector.shape_cast %208 : vector<1x1x1x4x8xf32> to vector<4x8xf32>
    %cst_283 = arith.constant dense<0.000000e+00> : vector<8x8xf32>
    %210 = tpu.matmul %8, %209, %cst_283 {dimension_numbers = #tpu.dot_dimension_numbers<[1], [0], [0], [1], [0, 0, 1, 1], [], []>} : vector<8x4xf32>, vector<4x8xf32>, vector<8x8xf32> -> vector<8x8xf32>
    %211 = arith.addf %207, %210 : vector<8x8xf32>
    %c0_284 = arith.constant 0 : index
    %c0_285 = arith.constant 0 : index
    %c4_286 = arith.constant 4 : index
    %c0_287 = arith.constant 0 : index
    %c0_288 = arith.constant 0 : index
    %212 = vector.load %arg5[%c0_284, %c0_285, %c4_286, %c0_287, %c0_288] : memref<1x1x9x4x9xf32, #tpu.memory_space<vmem>>, vector<1x1x1x4x8xf32>
    %213 = vector.shape_cast %212 : vector<1x1x1x4x8xf32> to vector<4x8xf32>
    %cst_289 = arith.constant dense<0.000000e+00> : vector<8x8xf32>
    %214 = tpu.matmul %10, %213, %cst_289 {dimension_numbers = #tpu.dot_dimension_numbers<[1], [0], [0], [1], [0, 0, 1, 1], [], []>} : vector<8x4xf32>, vector<4x8xf32>, vector<8x8xf32> -> vector<8x8xf32>
    %215 = arith.addf %211, %214 : vector<8x8xf32>
    %c0_290 = arith.constant 0 : index
    %c0_291 = arith.constant 0 : index
    %c4_292 = arith.constant 4 : index
    %c0_293 = arith.constant 0 : index
    %c1_294 = arith.constant 1 : index
    %216 = vector.load %arg4[%c0_290, %c0_291, %c4_292, %c0_293, %c1_294] : memref<1x1x9x4x9xf32, #tpu.memory_space<vmem>>, vector<1x1x1x4x8xf32>
    %217 = vector.shape_cast %216 : vector<1x1x1x4x8xf32> to vector<4x8xf32>
    %cst_295 = arith.constant dense<0.000000e+00> : vector<8x8xf32>
    %218 = tpu.matmul %12, %217, %cst_295 {dimension_numbers = #tpu.dot_dimension_numbers<[1], [0], [0], [1], [0, 0, 1, 1], [], []>} : vector<8x4xf32>, vector<4x8xf32>, vector<8x8xf32> -> vector<8x8xf32>
    %219 = arith.addf %215, %218 : vector<8x8xf32>
    %c0_296 = arith.constant 0 : index
    %c0_297 = arith.constant 0 : index
    %c5_298 = arith.constant 5 : index
    %c0_299 = arith.constant 0 : index
    %c0_300 = arith.constant 0 : index
    %220 = vector.load %arg2[%c0_296, %c0_297, %c5_298, %c0_299, %c0_300] : memref<1x1x9x4x9xf32, #tpu.memory_space<vmem>>, vector<1x1x1x4x8xf32>
    %221 = vector.shape_cast %220 : vector<1x1x1x4x8xf32> to vector<4x8xf32>
    %cst_301 = arith.constant dense<0.000000e+00> : vector<8x8xf32>
    %222 = tpu.matmul %14, %221, %cst_301 {dimension_numbers = #tpu.dot_dimension_numbers<[1], [0], [0], [1], [0, 0, 1, 1], [], []>} : vector<8x4xf32>, vector<4x8xf32>, vector<8x8xf32> -> vector<8x8xf32>
    %223 = arith.addf %219, %222 : vector<8x8xf32>
    %c0_302 = arith.constant 0 : index
    %c0_303 = arith.constant 0 : index
    %c5_304 = arith.constant 5 : index
    %c0_305 = arith.constant 0 : index
    %c0_306 = arith.constant 0 : index
    %224 = vector.load %arg3[%c0_302, %c0_303, %c5_304, %c0_305, %c0_306] : memref<1x1x9x4x9xf32, #tpu.memory_space<vmem>>, vector<1x1x1x4x8xf32>
    %225 = vector.shape_cast %224 : vector<1x1x1x4x8xf32> to vector<4x8xf32>
    %cst_307 = arith.constant dense<0.000000e+00> : vector<8x8xf32>
    %226 = tpu.matmul %16, %225, %cst_307 {dimension_numbers = #tpu.dot_dimension_numbers<[1], [0], [0], [1], [0, 0, 1, 1], [], []>} : vector<8x4xf32>, vector<4x8xf32>, vector<8x8xf32> -> vector<8x8xf32>
    %227 = arith.addf %223, %226 : vector<8x8xf32>
    %c0_308 = arith.constant 0 : index
    %c0_309 = arith.constant 0 : index
    %c5_310 = arith.constant 5 : index
    %c0_311 = arith.constant 0 : index
    %c1_312 = arith.constant 1 : index
    %228 = vector.load %arg2[%c0_308, %c0_309, %c5_310, %c0_311, %c1_312] : memref<1x1x9x4x9xf32, #tpu.memory_space<vmem>>, vector<1x1x1x4x8xf32>
    %229 = vector.shape_cast %228 : vector<1x1x1x4x8xf32> to vector<4x8xf32>
    %cst_313 = arith.constant dense<0.000000e+00> : vector<8x8xf32>
    %230 = tpu.matmul %18, %229, %cst_313 {dimension_numbers = #tpu.dot_dimension_numbers<[1], [0], [0], [1], [0, 0, 1, 1], [], []>} : vector<8x4xf32>, vector<4x8xf32>, vector<8x8xf32> -> vector<8x8xf32>
    %231 = arith.addf %227, %230 : vector<8x8xf32>
    %232 = vector.broadcast %0 : vector<8x1xf32> to vector<8x8xf32>
    %233 = arith.addf %231, %232 : vector<8x8xf32>
    %cst_314 = arith.constant 0.000000e+00 : f32
    %234 = vector.broadcast %cst_314 : f32 to vector<8x8xf32>
    %235 = arith.maximumf %233, %234 : vector<8x8xf32>
    %c0_315 = arith.constant 0 : index
    %c0_316 = arith.constant 0 : index
    %c4_317 = arith.constant 4 : index
    %c0_318 = arith.constant 0 : index
    %236 = vector.load %arg8[%c0_315, %c0_316, %c4_317, %c0_318] : memref<1x8x8x8xf32, #tpu.memory_space<vmem>>, vector<1x8x1x8xf32>
    %237 = vector.shape_cast %236 : vector<1x8x1x8xf32> to vector<8x8xf32>
    %238 = vector.shape_cast %235 : vector<8x8xf32> to vector<1x8x1x8xf32>
    tpu.vector_store %arg8[%c0_315, %c0_316, %c4_317, %c0_318], %238 {strides = array<i32>} : memref<1x8x8x8xf32, #tpu.memory_space<vmem>>, vector<1x8x1x8xf32>,
    %cst_319 = arith.constant 0.000000e+00 : f32
    %239 = vector.broadcast %cst_319 : f32 to vector<8x8xf32>
    %c0_320 = arith.constant 0 : index
    %c0_321 = arith.constant 0 : index
    %c5_322 = arith.constant 5 : index
    %c0_323 = arith.constant 0 : index
    %c0_324 = arith.constant 0 : index
    %240 = vector.load %arg2[%c0_320, %c0_321, %c5_322, %c0_323, %c0_324] : memref<1x1x9x4x9xf32, #tpu.memory_space<vmem>>, vector<1x1x1x4x8xf32>
    %241 = vector.shape_cast %240 : vector<1x1x1x4x8xf32> to vector<4x8xf32>
    %cst_325 = arith.constant dense<0.000000e+00> : vector<8x8xf32>
    %242 = tpu.matmul %2, %241, %cst_325 {dimension_numbers = #tpu.dot_dimension_numbers<[1], [0], [0], [1], [0, 0, 1, 1], [], []>} : vector<8x4xf32>, vector<4x8xf32>, vector<8x8xf32> -> vector<8x8xf32>
    %243 = arith.addf %239, %242 : vector<8x8xf32>
    %c0_326 = arith.constant 0 : index
    %c0_327 = arith.constant 0 : index
    %c5_328 = arith.constant 5 : index
    %c0_329 = arith.constant 0 : index
    %c0_330 = arith.constant 0 : index
    %244 = vector.load %arg3[%c0_326, %c0_327, %c5_328, %c0_329, %c0_330] : memref<1x1x9x4x9xf32, #tpu.memory_space<vmem>>, vector<1x1x1x4x8xf32>
    %245 = vector.shape_cast %244 : vector<1x1x1x4x8xf32> to vector<4x8xf32>
    %cst_331 = arith.constant dense<0.000000e+00> : vector<8x8xf32>
    %246 = tpu.matmul %4, %245, %cst_331 {dimension_numbers = #tpu.dot_dimension_numbers<[1], [0], [0], [1], [0, 0, 1, 1], [], []>} : vector<8x4xf32>, vector<4x8xf32>, vector<8x8xf32> -> vector<8x8xf32>
    %247 = arith.addf %243, %246 : vector<8x8xf32>
    %c0_332 = arith.constant 0 : index
    %c0_333 = arith.constant 0 : index
    %c5_334 = arith.constant 5 : index
    %c0_335 = arith.constant 0 : index
    %c1_336 = arith.constant 1 : index
    %248 = vector.load %arg2[%c0_332, %c0_333, %c5_334, %c0_335, %c1_336] : memref<1x1x9x4x9xf32, #tpu.memory_space<vmem>>, vector<1x1x1x4x8xf32>
    %249 = vector.shape_cast %248 : vector<1x1x1x4x8xf32> to vector<4x8xf32>
    %cst_337 = arith.constant dense<0.000000e+00> : vector<8x8xf32>
    %250 = tpu.matmul %6, %249, %cst_337 {dimension_numbers = #tpu.dot_dimension_numbers<[1], [0], [0], [1], [0, 0, 1, 1], [], []>} : vector<8x4xf32>, vector<4x8xf32>, vector<8x8xf32> -> vector<8x8xf32>
    %251 = arith.addf %247, %250 : vector<8x8xf32>
    %c0_338 = arith.constant 0 : index
    %c0_339 = arith.constant 0 : index
    %c5_340 = arith.constant 5 : index
    %c0_341 = arith.constant 0 : index
    %c0_342 = arith.constant 0 : index
    %252 = vector.load %arg4[%c0_338, %c0_339, %c5_340, %c0_341, %c0_342] : memref<1x1x9x4x9xf32, #tpu.memory_space<vmem>>, vector<1x1x1x4x8xf32>
    %253 = vector.shape_cast %252 : vector<1x1x1x4x8xf32> to vector<4x8xf32>
    %cst_343 = arith.constant dense<0.000000e+00> : vector<8x8xf32>
    %254 = tpu.matmul %8, %253, %cst_343 {dimension_numbers = #tpu.dot_dimension_numbers<[1], [0], [0], [1], [0, 0, 1, 1], [], []>} : vector<8x4xf32>, vector<4x8xf32>, vector<8x8xf32> -> vector<8x8xf32>
    %255 = arith.addf %251, %254 : vector<8x8xf32>
    %c0_344 = arith.constant 0 : index
    %c0_345 = arith.constant 0 : index
    %c5_346 = arith.constant 5 : index
    %c0_347 = arith.constant 0 : index
    %c0_348 = arith.constant 0 : index
    %256 = vector.load %arg5[%c0_344, %c0_345, %c5_346, %c0_347, %c0_348] : memref<1x1x9x4x9xf32, #tpu.memory_space<vmem>>, vector<1x1x1x4x8xf32>
    %257 = vector.shape_cast %256 : vector<1x1x1x4x8xf32> to vector<4x8xf32>
    %cst_349 = arith.constant dense<0.000000e+00> : vector<8x8xf32>
    %258 = tpu.matmul %10, %257, %cst_349 {dimension_numbers = #tpu.dot_dimension_numbers<[1], [0], [0], [1], [0, 0, 1, 1], [], []>} : vector<8x4xf32>, vector<4x8xf32>, vector<8x8xf32> -> vector<8x8xf32>
    %259 = arith.addf %255, %258 : vector<8x8xf32>
    %c0_350 = arith.constant 0 : index
    %c0_351 = arith.constant 0 : index
    %c5_352 = arith.constant 5 : index
    %c0_353 = arith.constant 0 : index
    %c1_354 = arith.constant 1 : index
    %260 = vector.load %arg4[%c0_350, %c0_351, %c5_352, %c0_353, %c1_354] : memref<1x1x9x4x9xf32, #tpu.memory_space<vmem>>, vector<1x1x1x4x8xf32>
    %261 = vector.shape_cast %260 : vector<1x1x1x4x8xf32> to vector<4x8xf32>
    %cst_355 = arith.constant dense<0.000000e+00> : vector<8x8xf32>
    %262 = tpu.matmul %12, %261, %cst_355 {dimension_numbers = #tpu.dot_dimension_numbers<[1], [0], [0], [1], [0, 0, 1, 1], [], []>} : vector<8x4xf32>, vector<4x8xf32>, vector<8x8xf32> -> vector<8x8xf32>
    %263 = arith.addf %259, %262 : vector<8x8xf32>
    %c0_356 = arith.constant 0 : index
    %c0_357 = arith.constant 0 : index
    %c6_358 = arith.constant 6 : index
    %c0_359 = arith.constant 0 : index
    %c0_360 = arith.constant 0 : index
    %264 = vector.load %arg2[%c0_356, %c0_357, %c6_358, %c0_359, %c0_360] : memref<1x1x9x4x9xf32, #tpu.memory_space<vmem>>, vector<1x1x1x4x8xf32>
    %265 = vector.shape_cast %264 : vector<1x1x1x4x8xf32> to vector<4x8xf32>
    %cst_361 = arith.constant dense<0.000000e+00> : vector<8x8xf32>
    %266 = tpu.matmul %14, %265, %cst_361 {dimension_numbers = #tpu.dot_dimension_numbers<[1], [0], [0], [1], [0, 0, 1, 1], [], []>} : vector<8x4xf32>, vector<4x8xf32>, vector<8x8xf32> -> vector<8x8xf32>
    %267 = arith.addf %263, %266 : vector<8x8xf32>
    %c0_362 = arith.constant 0 : index
    %c0_363 = arith.constant 0 : index
    %c6_364 = arith.constant 6 : index
    %c0_365 = arith.constant 0 : index
    %c0_366 = arith.constant 0 : index
    %268 = vector.load %arg3[%c0_362, %c0_363, %c6_364, %c0_365, %c0_366] : memref<1x1x9x4x9xf32, #tpu.memory_space<vmem>>, vector<1x1x1x4x8xf32>
    %269 = vector.shape_cast %268 : vector<1x1x1x4x8xf32> to vector<4x8xf32>
    %cst_367 = arith.constant dense<0.000000e+00> : vector<8x8xf32>
    %270 = tpu.matmul %16, %269, %cst_367 {dimension_numbers = #tpu.dot_dimension_numbers<[1], [0], [0], [1], [0, 0, 1, 1], [], []>} : vector<8x4xf32>, vector<4x8xf32>, vector<8x8xf32> -> vector<8x8xf32>
    %271 = arith.addf %267, %270 : vector<8x8xf32>
    %c0_368 = arith.constant 0 : index
    %c0_369 = arith.constant 0 : index
    %c6_370 = arith.constant 6 : index
    %c0_371 = arith.constant 0 : index
    %c1_372 = arith.constant 1 : index
    %272 = vector.load %arg2[%c0_368, %c0_369, %c6_370, %c0_371, %c1_372] : memref<1x1x9x4x9xf32, #tpu.memory_space<vmem>>, vector<1x1x1x4x8xf32>
    %273 = vector.shape_cast %272 : vector<1x1x1x4x8xf32> to vector<4x8xf32>
    %cst_373 = arith.constant dense<0.000000e+00> : vector<8x8xf32>
    %274 = tpu.matmul %18, %273, %cst_373 {dimension_numbers = #tpu.dot_dimension_numbers<[1], [0], [0], [1], [0, 0, 1, 1], [], []>} : vector<8x4xf32>, vector<4x8xf32>, vector<8x8xf32> -> vector<8x8xf32>
    %275 = arith.addf %271, %274 : vector<8x8xf32>
    %276 = vector.broadcast %0 : vector<8x1xf32> to vector<8x8xf32>
    %277 = arith.addf %275, %276 : vector<8x8xf32>
    %cst_374 = arith.constant 0.000000e+00 : f32
    %278 = vector.broadcast %cst_374 : f32 to vector<8x8xf32>
    %279 = arith.maximumf %277, %278 : vector<8x8xf32>
    %c0_375 = arith.constant 0 : index
    %c0_376 = arith.constant 0 : index
    %c5_377 = arith.constant 5 : index
    %c0_378 = arith.constant 0 : index
    %280 = vector.load %arg8[%c0_375, %c0_376, %c5_377, %c0_378] : memref<1x8x8x8xf32, #tpu.memory_space<vmem>>, vector<1x8x1x8xf32>
    %281 = vector.shape_cast %280 : vector<1x8x1x8xf32> to vector<8x8xf32>
    %282 = vector.shape_cast %279 : vector<8x8xf32> to vector<1x8x1x8xf32>
    tpu.vector_store %arg8[%c0_375, %c0_376, %c5_377, %c0_378], %282 {strides = array<i32>} : memref<1x8x8x8xf32, #tpu.memory_space<vmem>>, vector<1x8x1x8xf32>,
    %cst_379 = arith.constant 0.000000e+00 : f32
    %283 = vector.broadcast %cst_379 : f32 to vector<8x8xf32>
    %c0_380 = arith.constant 0 : index
    %c0_381 = arith.constant 0 : index
    %c6_382 = arith.constant 6 : index
    %c0_383 = arith.constant 0 : index
    %c0_384 = arith.constant 0 : index
    %284 = vector.load %arg2[%c0_380, %c0_381, %c6_382, %c0_383, %c0_384] : memref<1x1x9x4x9xf32, #tpu.memory_space<vmem>>, vector<1x1x1x4x8xf32>
    %285 = vector.shape_cast %284 : vector<1x1x1x4x8xf32> to vector<4x8xf32>
    %cst_385 = arith.constant dense<0.000000e+00> : vector<8x8xf32>
    %286 = tpu.matmul %2, %285, %cst_385 {dimension_numbers = #tpu.dot_dimension_numbers<[1], [0], [0], [1], [0, 0, 1, 1], [], []>} : vector<8x4xf32>, vector<4x8xf32>, vector<8x8xf32> -> vector<8x8xf32>
    %287 = arith.addf %283, %286 : vector<8x8xf32>
    %c0_386 = arith.constant 0 : index
    %c0_387 = arith.constant 0 : index
    %c6_388 = arith.constant 6 : index
    %c0_389 = arith.constant 0 : index
    %c0_390 = arith.constant 0 : index
    %288 = vector.load %arg3[%c0_386, %c0_387, %c6_388, %c0_389, %c0_390] : memref<1x1x9x4x9xf32, #tpu.memory_space<vmem>>, vector<1x1x1x4x8xf32>
    %289 = vector.shape_cast %288 : vector<1x1x1x4x8xf32> to vector<4x8xf32>
    %cst_391 = arith.constant dense<0.000000e+00> : vector<8x8xf32>
    %290 = tpu.matmul %4, %289, %cst_391 {dimension_numbers = #tpu.dot_dimension_numbers<[1], [0], [0], [1], [0, 0, 1, 1], [], []>} : vector<8x4xf32>, vector<4x8xf32>, vector<8x8xf32> -> vector<8x8xf32>
    %291 = arith.addf %287, %290 : vector<8x8xf32>
    %c0_392 = arith.constant 0 : index
    %c0_393 = arith.constant 0 : index
    %c6_394 = arith.constant 6 : index
    %c0_395 = arith.constant 0 : index
    %c1_396 = arith.constant 1 : index
    %292 = vector.load %arg2[%c0_392, %c0_393, %c6_394, %c0_395, %c1_396] : memref<1x1x9x4x9xf32, #tpu.memory_space<vmem>>, vector<1x1x1x4x8xf32>
    %293 = vector.shape_cast %292 : vector<1x1x1x4x8xf32> to vector<4x8xf32>
    %cst_397 = arith.constant dense<0.000000e+00> : vector<8x8xf32>
    %294 = tpu.matmul %6, %293, %cst_397 {dimension_numbers = #tpu.dot_dimension_numbers<[1], [0], [0], [1], [0, 0, 1, 1], [], []>} : vector<8x4xf32>, vector<4x8xf32>, vector<8x8xf32> -> vector<8x8xf32>
    %295 = arith.addf %291, %294 : vector<8x8xf32>
    %c0_398 = arith.constant 0 : index
    %c0_399 = arith.constant 0 : index
    %c6_400 = arith.constant 6 : index
    %c0_401 = arith.constant 0 : index
    %c0_402 = arith.constant 0 : index
    %296 = vector.load %arg4[%c0_398, %c0_399, %c6_400, %c0_401, %c0_402] : memref<1x1x9x4x9xf32, #tpu.memory_space<vmem>>, vector<1x1x1x4x8xf32>
    %297 = vector.shape_cast %296 : vector<1x1x1x4x8xf32> to vector<4x8xf32>
    %cst_403 = arith.constant dense<0.000000e+00> : vector<8x8xf32>
    %298 = tpu.matmul %8, %297, %cst_403 {dimension_numbers = #tpu.dot_dimension_numbers<[1], [0], [0], [1], [0, 0, 1, 1], [], []>} : vector<8x4xf32>, vector<4x8xf32>, vector<8x8xf32> -> vector<8x8xf32>
    %299 = arith.addf %295, %298 : vector<8x8xf32>
    %c0_404 = arith.constant 0 : index
    %c0_405 = arith.constant 0 : index
    %c6_406 = arith.constant 6 : index
    %c0_407 = arith.constant 0 : index
    %c0_408 = arith.constant 0 : index
    %300 = vector.load %arg5[%c0_404, %c0_405, %c6_406, %c0_407, %c0_408] : memref<1x1x9x4x9xf32, #tpu.memory_space<vmem>>, vector<1x1x1x4x8xf32>
    %301 = vector.shape_cast %300 : vector<1x1x1x4x8xf32> to vector<4x8xf32>
    %cst_409 = arith.constant dense<0.000000e+00> : vector<8x8xf32>
    %302 = tpu.matmul %10, %301, %cst_409 {dimension_numbers = #tpu.dot_dimension_numbers<[1], [0], [0], [1], [0, 0, 1, 1], [], []>} : vector<8x4xf32>, vector<4x8xf32>, vector<8x8xf32> -> vector<8x8xf32>
    %303 = arith.addf %299, %302 : vector<8x8xf32>
    %c0_410 = arith.constant 0 : index
    %c0_411 = arith.constant 0 : index
    %c6_412 = arith.constant 6 : index
    %c0_413 = arith.constant 0 : index
    %c1_414 = arith.constant 1 : index
    %304 = vector.load %arg4[%c0_410, %c0_411, %c6_412, %c0_413, %c1_414] : memref<1x1x9x4x9xf32, #tpu.memory_space<vmem>>, vector<1x1x1x4x8xf32>
    %305 = vector.shape_cast %304 : vector<1x1x1x4x8xf32> to vector<4x8xf32>
    %cst_415 = arith.constant dense<0.000000e+00> : vector<8x8xf32>
    %306 = tpu.matmul %12, %305, %cst_415 {dimension_numbers = #tpu.dot_dimension_numbers<[1], [0], [0], [1], [0, 0, 1, 1], [], []>} : vector<8x4xf32>, vector<4x8xf32>, vector<8x8xf32> -> vector<8x8xf32>
    %307 = arith.addf %303, %306 : vector<8x8xf32>
    %c0_416 = arith.constant 0 : index
    %c0_417 = arith.constant 0 : index
    %c7_418 = arith.constant 7 : index
    %c0_419 = arith.constant 0 : index
    %c0_420 = arith.constant 0 : index
    %308 = vector.load %arg2[%c0_416, %c0_417, %c7_418, %c0_419, %c0_420] : memref<1x1x9x4x9xf32, #tpu.memory_space<vmem>>, vector<1x1x1x4x8xf32>
    %309 = vector.shape_cast %308 : vector<1x1x1x4x8xf32> to vector<4x8xf32>
    %cst_421 = arith.constant dense<0.000000e+00> : vector<8x8xf32>
    %310 = tpu.matmul %14, %309, %cst_421 {dimension_numbers = #tpu.dot_dimension_numbers<[1], [0], [0], [1], [0, 0, 1, 1], [], []>} : vector<8x4xf32>, vector<4x8xf32>, vector<8x8xf32> -> vector<8x8xf32>
    %311 = arith.addf %307, %310 : vector<8x8xf32>
    %c0_422 = arith.constant 0 : index
    %c0_423 = arith.constant 0 : index
    %c7_424 = arith.constant 7 : index
    %c0_425 = arith.constant 0 : index
    %c0_426 = arith.constant 0 : index
    %312 = vector.load %arg3[%c0_422, %c0_423, %c7_424, %c0_425, %c0_426] : memref<1x1x9x4x9xf32, #tpu.memory_space<vmem>>, vector<1x1x1x4x8xf32>
    %313 = vector.shape_cast %312 : vector<1x1x1x4x8xf32> to vector<4x8xf32>
    %cst_427 = arith.constant dense<0.000000e+00> : vector<8x8xf32>
    %314 = tpu.matmul %16, %313, %cst_427 {dimension_numbers = #tpu.dot_dimension_numbers<[1], [0], [0], [1], [0, 0, 1, 1], [], []>} : vector<8x4xf32>, vector<4x8xf32>, vector<8x8xf32> -> vector<8x8xf32>
    %315 = arith.addf %311, %314 : vector<8x8xf32>
    %c0_428 = arith.constant 0 : index
    %c0_429 = arith.constant 0 : index
    %c7_430 = arith.constant 7 : index
    %c0_431 = arith.constant 0 : index
    %c1_432 = arith.constant 1 : index
    %316 = vector.load %arg2[%c0_428, %c0_429, %c7_430, %c0_431, %c1_432] : memref<1x1x9x4x9xf32, #tpu.memory_space<vmem>>, vector<1x1x1x4x8xf32>
    %317 = vector.shape_cast %316 : vector<1x1x1x4x8xf32> to vector<4x8xf32>
    %cst_433 = arith.constant dense<0.000000e+00> : vector<8x8xf32>
    %318 = tpu.matmul %18, %317, %cst_433 {dimension_numbers = #tpu.dot_dimension_numbers<[1], [0], [0], [1], [0, 0, 1, 1], [], []>} : vector<8x4xf32>, vector<4x8xf32>, vector<8x8xf32> -> vector<8x8xf32>
    %319 = arith.addf %315, %318 : vector<8x8xf32>
    %320 = vector.broadcast %0 : vector<8x1xf32> to vector<8x8xf32>
    %321 = arith.addf %319, %320 : vector<8x8xf32>
    %cst_434 = arith.constant 0.000000e+00 : f32
    %322 = vector.broadcast %cst_434 : f32 to vector<8x8xf32>
    %323 = arith.maximumf %321, %322 : vector<8x8xf32>
    %c0_435 = arith.constant 0 : index
    %c0_436 = arith.constant 0 : index
    %c6_437 = arith.constant 6 : index
    %c0_438 = arith.constant 0 : index
    %324 = vector.load %arg8[%c0_435, %c0_436, %c6_437, %c0_438] : memref<1x8x8x8xf32, #tpu.memory_space<vmem>>, vector<1x8x1x8xf32>
    %325 = vector.shape_cast %324 : vector<1x8x1x8xf32> to vector<8x8xf32>
    %326 = vector.shape_cast %323 : vector<8x8xf32> to vector<1x8x1x8xf32>
    tpu.vector_store %arg8[%c0_435, %c0_436, %c6_437, %c0_438], %326 {strides = array<i32>} : memref<1x8x8x8xf32, #tpu.memory_space<vmem>>, vector<1x8x1x8xf32>,
    %cst_439 = arith.constant 0.000000e+00 : f32
    %327 = vector.broadcast %cst_439 : f32 to vector<8x8xf32>
    %c0_440 = arith.constant 0 : index
    %c0_441 = arith.constant 0 : index
    %c7_442 = arith.constant 7 : index
    %c0_443 = arith.constant 0 : index
    %c0_444 = arith.constant 0 : index
    %328 = vector.load %arg2[%c0_440, %c0_441, %c7_442, %c0_443, %c0_444] : memref<1x1x9x4x9xf32, #tpu.memory_space<vmem>>, vector<1x1x1x4x8xf32>
    %329 = vector.shape_cast %328 : vector<1x1x1x4x8xf32> to vector<4x8xf32>
    %cst_445 = arith.constant dense<0.000000e+00> : vector<8x8xf32>
    %330 = tpu.matmul %2, %329, %cst_445 {dimension_numbers = #tpu.dot_dimension_numbers<[1], [0], [0], [1], [0, 0, 1, 1], [], []>} : vector<8x4xf32>, vector<4x8xf32>, vector<8x8xf32> -> vector<8x8xf32>
    %331 = arith.addf %327, %330 : vector<8x8xf32>
    %c0_446 = arith.constant 0 : index
    %c0_447 = arith.constant 0 : index
    %c7_448 = arith.constant 7 : index
    %c0_449 = arith.constant 0 : index
    %c0_450 = arith.constant 0 : index
    %332 = vector.load %arg3[%c0_446, %c0_447, %c7_448, %c0_449, %c0_450] : memref<1x1x9x4x9xf32, #tpu.memory_space<vmem>>, vector<1x1x1x4x8xf32>
    %333 = vector.shape_cast %332 : vector<1x1x1x4x8xf32> to vector<4x8xf32>
    %cst_451 = arith.constant dense<0.000000e+00> : vector<8x8xf32>
    %334 = tpu.matmul %4, %333, %cst_451 {dimension_numbers = #tpu.dot_dimension_numbers<[1], [0], [0], [1], [0, 0, 1, 1], [], []>} : vector<8x4xf32>, vector<4x8xf32>, vector<8x8xf32> -> vector<8x8xf32>
    %335 = arith.addf %331, %334 : vector<8x8xf32>
    %c0_452 = arith.constant 0 : index
    %c0_453 = arith.constant 0 : index
    %c7_454 = arith.constant 7 : index
    %c0_455 = arith.constant 0 : index
    %c1_456 = arith.constant 1 : index
    %336 = vector.load %arg2[%c0_452, %c0_453, %c7_454, %c0_455, %c1_456] : memref<1x1x9x4x9xf32, #tpu.memory_space<vmem>>, vector<1x1x1x4x8xf32>
    %337 = vector.shape_cast %336 : vector<1x1x1x4x8xf32> to vector<4x8xf32>
    %cst_457 = arith.constant dense<0.000000e+00> : vector<8x8xf32>
    %338 = tpu.matmul %6, %337, %cst_457 {dimension_numbers = #tpu.dot_dimension_numbers<[1], [0], [0], [1], [0, 0, 1, 1], [], []>} : vector<8x4xf32>, vector<4x8xf32>, vector<8x8xf32> -> vector<8x8xf32>
    %339 = arith.addf %335, %338 : vector<8x8xf32>
    %c0_458 = arith.constant 0 : index
    %c0_459 = arith.constant 0 : index
    %c7_460 = arith.constant 7 : index
    %c0_461 = arith.constant 0 : index
    %c0_462 = arith.constant 0 : index
    %340 = vector.load %arg4[%c0_458, %c0_459, %c7_460, %c0_461, %c0_462] : memref<1x1x9x4x9xf32, #tpu.memory_space<vmem>>, vector<1x1x1x4x8xf32>
    %341 = vector.shape_cast %340 : vector<1x1x1x4x8xf32> to vector<4x8xf32>
    %cst_463 = arith.constant dense<0.000000e+00> : vector<8x8xf32>
    %342 = tpu.matmul %8, %341, %cst_463 {dimension_numbers = #tpu.dot_dimension_numbers<[1], [0], [0], [1], [0, 0, 1, 1], [], []>} : vector<8x4xf32>, vector<4x8xf32>, vector<8x8xf32> -> vector<8x8xf32>
    %343 = arith.addf %339, %342 : vector<8x8xf32>
    %c0_464 = arith.constant 0 : index
    %c0_465 = arith.constant 0 : index
    %c7_466 = arith.constant 7 : index
    %c0_467 = arith.constant 0 : index
    %c0_468 = arith.constant 0 : index
    %344 = vector.load %arg5[%c0_464, %c0_465, %c7_466, %c0_467, %c0_468] : memref<1x1x9x4x9xf32, #tpu.memory_space<vmem>>, vector<1x1x1x4x8xf32>
    %345 = vector.shape_cast %344 : vector<1x1x1x4x8xf32> to vector<4x8xf32>
    %cst_469 = arith.constant dense<0.000000e+00> : vector<8x8xf32>
    %346 = tpu.matmul %10, %345, %cst_469 {dimension_numbers = #tpu.dot_dimension_numbers<[1], [0], [0], [1], [0, 0, 1, 1], [], []>} : vector<8x4xf32>, vector<4x8xf32>, vector<8x8xf32> -> vector<8x8xf32>
    %347 = arith.addf %343, %346 : vector<8x8xf32>
    %c0_470 = arith.constant 0 : index
    %c0_471 = arith.constant 0 : index
    %c7_472 = arith.constant 7 : index
    %c0_473 = arith.constant 0 : index
    %c1_474 = arith.constant 1 : index
    %348 = vector.load %arg4[%c0_470, %c0_471, %c7_472, %c0_473, %c1_474] : memref<1x1x9x4x9xf32, #tpu.memory_space<vmem>>, vector<1x1x1x4x8xf32>
    %349 = vector.shape_cast %348 : vector<1x1x1x4x8xf32> to vector<4x8xf32>
    %cst_475 = arith.constant dense<0.000000e+00> : vector<8x8xf32>
    %350 = tpu.matmul %12, %349, %cst_475 {dimension_numbers = #tpu.dot_dimension_numbers<[1], [0], [0], [1], [0, 0, 1, 1], [], []>} : vector<8x4xf32>, vector<4x8xf32>, vector<8x8xf32> -> vector<8x8xf32>
    %351 = arith.addf %347, %350 : vector<8x8xf32>
    %c0_476 = arith.constant 0 : index
    %c0_477 = arith.constant 0 : index
    %c8_478 = arith.constant 8 : index
    %c0_479 = arith.constant 0 : index
    %c0_480 = arith.constant 0 : index
    %352 = vector.load %arg2[%c0_476, %c0_477, %c8_478, %c0_479, %c0_480] : memref<1x1x9x4x9xf32, #tpu.memory_space<vmem>>, vector<1x1x1x4x8xf32>
    %353 = vector.shape_cast %352 : vector<1x1x1x4x8xf32> to vector<4x8xf32>
    %cst_481 = arith.constant dense<0.000000e+00> : vector<8x8xf32>
    %354 = tpu.matmul %14, %353, %cst_481 {dimension_numbers = #tpu.dot_dimension_numbers<[1], [0], [0], [1], [0, 0, 1, 1], [], []>} : vector<8x4xf32>, vector<4x8xf32>, vector<8x8xf32> -> vector<8x8xf32>
    %355 = arith.addf %351, %354 : vector<8x8xf32>
    %c0_482 = arith.constant 0 : index
    %c0_483 = arith.constant 0 : index
    %c8_484 = arith.constant 8 : index
    %c0_485 = arith.constant 0 : index
    %c0_486 = arith.constant 0 : index
    %356 = vector.load %arg3[%c0_482, %c0_483, %c8_484, %c0_485, %c0_486] : memref<1x1x9x4x9xf32, #tpu.memory_space<vmem>>, vector<1x1x1x4x8xf32>
    %357 = vector.shape_cast %356 : vector<1x1x1x4x8xf32> to vector<4x8xf32>
    %cst_487 = arith.constant dense<0.000000e+00> : vector<8x8xf32>
    %358 = tpu.matmul %16, %357, %cst_487 {dimension_numbers = #tpu.dot_dimension_numbers<[1], [0], [0], [1], [0, 0, 1, 1], [], []>} : vector<8x4xf32>, vector<4x8xf32>, vector<8x8xf32> -> vector<8x8xf32>
    %359 = arith.addf %355, %358 : vector<8x8xf32>
    %c0_488 = arith.constant 0 : index
    %c0_489 = arith.constant 0 : index
    %c8_490 = arith.constant 8 : index
    %c0_491 = arith.constant 0 : index
    %c1_492 = arith.constant 1 : index
    %360 = vector.load %arg2[%c0_488, %c0_489, %c8_490, %c0_491, %c1_492] : memref<1x1x9x4x9xf32, #tpu.memory_space<vmem>>, vector<1x1x1x4x8xf32>
    %361 = vector.shape_cast %360 : vector<1x1x1x4x8xf32> to vector<4x8xf32>
    %cst_493 = arith.constant dense<0.000000e+00> : vector<8x8xf32>
    %362 = tpu.matmul %18, %361, %cst_493 {dimension_numbers = #tpu.dot_dimension_numbers<[1], [0], [0], [1], [0, 0, 1, 1], [], []>} : vector<8x4xf32>, vector<4x8xf32>, vector<8x8xf32> -> vector<8x8xf32>
    %363 = arith.addf %359, %362 : vector<8x8xf32>
    %364 = vector.broadcast %0 : vector<8x1xf32> to vector<8x8xf32>
    %365 = arith.addf %363, %364 : vector<8x8xf32>
    %cst_494 = arith.constant 0.000000e+00 : f32
    %366 = vector.broadcast %cst_494 : f32 to vector<8x8xf32>
    %367 = arith.maximumf %365, %366 : vector<8x8xf32>
    %c0_495 = arith.constant 0 : index
    %c0_496 = arith.constant 0 : index
    %c7_497 = arith.constant 7 : index
    %c0_498 = arith.constant 0 : index
    %368 = vector.load %arg8[%c0_495, %c0_496, %c7_497, %c0_498] : memref<1x8x8x8xf32, #tpu.memory_space<vmem>>, vector<1x8x1x8xf32>
    %369 = vector.shape_cast %368 : vector<1x8x1x8xf32> to vector<8x8xf32>
    %370 = vector.shape_cast %367 : vector<8x8xf32> to vector<1x8x1x8xf32>
    tpu.vector_store %arg8[%c0_495, %c0_496, %c7_497, %c0_498], %370 {strides = array<i32>} : memref<1x8x8x8xf32, #tpu.memory_space<vmem>>, vector<1x8x1x8xf32>,
    return
  }
  func.func @transform_0(%arg0: i32, %arg1: i32) -> (i32, i32, i32, i32, i32) {
    %c0_i32 = arith.constant 0 : i32
    %c0_i32_0 = arith.constant 0 : i32
    %c0_i32_1 = arith.constant 0 : i32
    %c0_i32_2 = arith.constant 0 : i32
    return %arg0, %arg1, %c0_i32, %c0_i32_0, %c0_i32_1 : i32, i32, i32, i32, i32
  }
  func.func @transform_1(%arg0: i32, %arg1: i32) -> (i32, i32, i32, i32, i32) {
    %c0_i32 = arith.constant 0 : i32
    %c0_i32_0 = arith.constant 0 : i32
    %c0_i32_1 = arith.constant 0 : i32
    %c0_i32_2 = arith.constant 0 : i32
    return %arg0, %arg1, %c0_i32, %c0_i32_0, %c0_i32_1 : i32, i32, i32, i32, i32
  }
  func.func @transform_2(%arg0: i32, %arg1: i32) -> (i32, i32, i32, i32, i32) {
    %c0_i32 = arith.constant 0 : i32
    %c0_i32_0 = arith.constant 0 : i32
    %c0_i32_1 = arith.constant 0 : i32
    %c0_i32_2 = arith.constant 0 : i32
    return %arg0, %arg1, %c0_i32, %c0_i32_0, %c0_i32_1 : i32, i32, i32, i32, i32
  }
  func.func @transform_3(%arg0: i32, %arg1: i32) -> (i32, i32, i32, i32, i32) {
    %c0_i32 = arith.constant 0 : i32
    %c0_i32_0 = arith.constant 0 : i32
    %c0_i32_1 = arith.constant 0 : i32
    %c0_i32_2 = arith.constant 0 : i32
    return %arg0, %arg1, %c0_i32, %c0_i32_0, %c0_i32_1 : i32, i32, i32, i32, i32
  }
  func.func @transform_4(%arg0: i32, %arg1: i32) -> (i32, i32, i32) {
    %c0_i32 = arith.constant 0 : i32
    %c0_i32_0 = arith.constant 0 : i32
    %c0_i32_1 = arith.constant 0 : i32
    %c0_i32_2 = arith.constant 0 : i32
    return %c0_i32, %c0_i32_0, %c0_i32_1 : i32, i32, i32
  }
  func.func @transform_5(%arg0: i32, %arg1: i32) -> (i32, i32) {
    %c0_i32 = arith.constant 0 : i32
    %c0_i32_0 = arith.constant 0 : i32
    %c0_i32_1 = arith.constant 0 : i32
    return %c0_i32, %c0_i32_0 : i32, i32
  }
  func.func @transform_6(%arg0: i32, %arg1: i32) -> (i32, i32, i32, i32) {
    %c0_i32 = arith.constant 0 : i32
    %c0_i32_0 = arith.constant 0 : i32
    %c0_i32_1 = arith.constant 0 : i32
    return %arg0, %c0_i32, %arg1, %c0_i32_0 : i32, i32, i32, i32
  }
}

</mosaic_0001>

<llo_original>
// kernel: downsample_forward.1
$region0: #{downsample_forward.1}
  #allocation0 [shape = 'u32[]', space=smem, size = 0x4, offset = 0x4, fixed_abs, tag = 'smem constant byte address 0x4 - core index']
  #allocation1 [shape = 'u32[72,128]{1,0:T(1,128)}', space=vmem, size = 0x9000, scoped, tag = 'internal scratch']
  %s0 = inlined_call_operand.vmem [shape: f32[2,1,9,4,9], index: 0, kind: input, shape index: {}]
  %s1 = inlined_call_operand.vmem [shape: f32[2,1,9,4,9], index: 1, kind: input, shape index: {}]
  %s2 = inlined_call_operand.vmem [shape: f32[2,1,9,4,9], index: 2, kind: input, shape index: {}]
  %s3 = inlined_call_operand.vmem [shape: f32[2,1,9,4,9], index: 3, kind: input, shape index: {}]
  %s4 = inlined_call_operand.vmem [shape: f32[9,8,4], index: 4, kind: input, shape index: {}]
  %s5 = inlined_call_operand.vmem [shape: f32[8,1], index: 5, kind: input, shape index: {}]
  %s6 = inlined_call_operand.hbm [shape: f32[2,8,8,8], index: 6, kind: output, shape index: {}]
  %s7 = sld [smem:[#allocation0]]
  $region57: #{downsample_forward.1} parent=0
    _
  %s9 = ssub.s32 1, %s7
  %s10 = scalar_select 0, %s9, %s7
  $region1: #{downsample_forward.1} parent=0
    #allocation2 [shape = 'u8[65536]{0}', space=vmem, size = 0x10000, scoped, tag = 'output window, operand 0']
    #allocation3 [shape = 's32[2]{0}', space=sflag, size = 0x8, scoped, tag = 'scoped memory for downsample_forward.1']
    %11 = vsyncpa [#allocation3], 0
    %s12 = scalar_lea.sflag [#allocation3], 1
    %13 = vsyncpa %s12, 0
    loop: start=0, step=1, limit=4
    $region2: #{downsample_forward.1} parent=1 // loop_pre_header
      _
    $region3: #{downsample_forward.1} parent=1 // loop_header
      %s15 = sphi 0, %s19
      %p16 = scmp.ge.s32.totalorder %s15, 4
      %s22 = sphi 0, %s34
      %s23 = sphi 0, %s30
      %s24 = sphi 0, %s22
      %s25 = sphi 0, %s23
      %s26 = sphi 0, %s24
      %s27 = sphi 0, %s25
      %s39 = sphi 0, %s41
      %s42 = sphi 0, %s39
      %s43 = sphi 0, %s42
      %s59 = sphi 0, %s43
      %s67 = sphi 0, %s69
      %s70 = sphi 0, %s67
      %s71 = sphi 0, %s70
      %s87 = sphi 0, %s71
      %s95 = sphi 0, %s97
      %s98 = sphi 0, %s95
      %s99 = sphi 0, %s98
      %s115 = sphi 0, %s99
      %s123 = sphi 0, %s125
      %s126 = sphi 0, %s123
      %s127 = sphi 0, %s126
      %s143 = sphi 0, %s127
      %s147 = sphi 0, %s147
      %s149 = sphi 0, %s147
      %s150 = sphi 0, %s149
      %s164 = sphi 0, %s150
      %s168 = sphi 0, %s168
      %s170 = sphi 0, %s168
      %s171 = sphi 0, %s170
      %s185 = sphi 0, %s171
      %s193 = sphi 0, %s195
      %s196 = sphi 0, %s193
      %s197 = sphi 0, %s196
      %s213 = sphi 0, %s197
    $region4: #{downsample_forward.1} parent=1 // loop_header_branch
      %18 = sbr.rel (%p16) target = $region8
    $region5: #{downsample_forward.1} parent=1 // loop_body
      %s20 = ssub.s32 %s15, 1
      %s21 = ssub.s32 %s15, 2
      %s28 = sadd.s32 1, %s23
      %p29 = scmp.ge.s32.totalorder %s28, 1
      %s30 = scalar_select %p29, 0, %s28
      %s31 = sadd.s32 1, %s22
      %s32 = scalar_select %p29, %s31, %s22
      %p33 = scmp.ge.s32.totalorder %s32, 2
      %s34 = scalar_select %p33, 0, %s32
      %s35 = ssub.s32 %s22, %s34
      %s36 = ssub.s32 %s23, %s30
      %s37 = sor.u32 %s35, %s36
      %p38 = scmp.eq.s32.totalorder %s37, 0
      %s40 = sadd.s32 %s39, 1
      %s41 = scalar_select %p38, %s39, %s40
      %p44 = pneg %p38
      %p45 = scmp.eq.s32.totalorder %s15, 1
      %p46 = por %p44, %p45
      %p47 = scmp.ne.s32.totalorder %s39, %s42
      %p48 = scmp.eq.s32.totalorder %s15, 0
      %p49 = por %p47, %p48
      %p50 = scmp.ne.s32.totalorder %s39, %s42
      %p51 = scmp.eq.s32.totalorder %s20, 1
      %p52 = por %p50, %p51
      %p53 = scmp.ne.s32.totalorder %s42, %s43
      %p54 = scmp.eq.s32.totalorder %s20, 0
      %p55 = por %p53, %p54
      %p56 = scmp.ne.s32.totalorder %s42, %s43
      %p57 = scmp.eq.s32.totalorder %s21, 1
      %p58 = por %p56, %p57
      %p60 = scmp.ne.s32.totalorder %s43, %s59
      %p61 = scmp.eq.s32.totalorder %s21, 0
      %p62 = por %p60, %p61
      %s63 = ssub.s32 %s22, %s34
      %s64 = ssub.s32 %s23, %s30
      %s65 = sor.u32 %s63, %s64
      %p66 = scmp.eq.s32.totalorder %s65, 0
      %s68 = sadd.s32 %s67, 1
      %s69 = scalar_select %p66, %s67, %s68
      %p72 = pneg %p66
      %p73 = scmp.eq.s32.totalorder %s15, 1
      %p74 = por %p72, %p73
      %p75 = scmp.ne.s32.totalorder %s67, %s70
      %p76 = scmp.eq.s32.totalorder %s15, 0
      %p77 = por %p75, %p76
      %p78 = scmp.ne.s32.totalorder %s67, %s70
      %p79 = scmp.eq.s32.totalorder %s20, 1
      %p80 = por %p78, %p79
      %p81 = scmp.ne.s32.totalorder %s70, %s71
      %p82 = scmp.eq.s32.totalorder %s20, 0
      %p83 = por %p81, %p82
      %p84 = scmp.ne.s32.totalorder %s70, %s71
      %p85 = scmp.eq.s32.totalorder %s21, 1
      %p86 = por %p84, %p85
      %p88 = scmp.ne.s32.totalorder %s71, %s87
      %p89 = scmp.eq.s32.totalorder %s21, 0
      %p90 = por %p88, %p89
      %s91 = ssub.s32 %s22, %s34
      %s92 = ssub.s32 %s23, %s30
      %s93 = sor.u32 %s91, %s92
      %p94 = scmp.eq.s32.totalorder %s93, 0
      %s96 = sadd.s32 %s95, 1
      %s97 = scalar_select %p94, %s95, %s96
      %p100 = pneg %p94
      %p101 = scmp.eq.s32.totalorder %s15, 1
      %p102 = por %p100, %p101
      %p103 = scmp.ne.s32.totalorder %s95, %s98
      %p104 = scmp.eq.s32.totalorder %s15, 0
      %p105 = por %p103, %p104
      %p106 = scmp.ne.s32.totalorder %s95, %s98
      %p107 = scmp.eq.s32.totalorder %s20, 1
      %p108 = por %p106, %p107
      %p109 = scmp.ne.s32.totalorder %s98, %s99
      %p110 = scmp.eq.s32.totalorder %s20, 0
      %p111 = por %p109, %p110
      %p112 = scmp.ne.s32.totalorder %s98, %s99
      %p113 = scmp.eq.s32.totalorder %s21, 1
      %p114 = por %p112, %p113
      %p116 = scmp.ne.s32.totalorder %s99, %s115
      %p117 = scmp.eq.s32.totalorder %s21, 0
      %p118 = por %p116, %p117
      %s119 = ssub.s32 %s22, %s34
      %s120 = ssub.s32 %s23, %s30
      %s121 = sor.u32 %s119, %s120
      %p122 = scmp.eq.s32.totalorder %s121, 0
      %s124 = sadd.s32 %s123, 1
      %s125 = scalar_select %p122, %s123, %s124
      %p128 = pneg %p122
      %p129 = scmp.eq.s32.totalorder %s15, 1
      %p130 = por %p128, %p129
      %p131 = scmp.ne.s32.totalorder %s123, %s126
      %p132 = scmp.eq.s32.totalorder %s15, 0
      %p133 = por %p131, %p132
      %p134 = scmp.ne.s32.totalorder %s123, %s126
      %p135 = scmp.eq.s32.totalorder %s20, 1
      %p136 = por %p134, %p135
      %p137 = scmp.ne.s32.totalorder %s126, %s127
      %p138 = scmp.eq.s32.totalorder %s20, 0
      %p139 = por %p137, %p138
      %p140 = scmp.ne.s32.totalorder %s126, %s127
      %p141 = scmp.eq.s32.totalorder %s21, 1
      %p142 = por %p140, %p141
      %p144 = scmp.ne.s32.totalorder %s127, %s143
      %p145 = scmp.eq.s32.totalorder %s21, 0
      %p146 = por %p144, %p145
      %s148 = sadd.s32 %s147, 1
      %p151 = scmp.eq.s32.totalorder %s15, 1
      %p152 = scmp.ne.s32.totalorder %s147, %s149
      %p153 = scmp.eq.s32.totalorder %s15, 0
      %p154 = por %p152, %p153
      %p155 = scmp.ne.s32.totalorder %s147, %s149
      %p156 = scmp.eq.s32.totalorder %s20, 1
      %p157 = por %p155, %p156
      %p158 = scmp.ne.s32.totalorder %s149, %s150
      %p159 = scmp.eq.s32.totalorder %s20, 0
      %p160 = por %p158, %p159
      %p161 = scmp.ne.s32.totalorder %s149, %s150
      %p162 = scmp.eq.s32.totalorder %s21, 1
      %p163 = por %p161, %p162
      %p165 = scmp.ne.s32.totalorder %s150, %s164
      %p166 = scmp.eq.s32.totalorder %s21, 0
      %p167 = por %p165, %p166
      %s169 = sadd.s32 %s168, 1
      %p172 = scmp.eq.s32.totalorder %s15, 1
      %p173 = scmp.ne.s32.totalorder %s168, %s170
      %p174 = scmp.eq.s32.totalorder %s15, 0
      %p175 = por %p173, %p174
      %p176 = scmp.ne.s32.totalorder %s168, %s170
      %p177 = scmp.eq.s32.totalorder %s20, 1
      %p178 = por %p176, %p177
      %p179 = scmp.ne.s32.totalorder %s170, %s171
      %p180 = scmp.eq.s32.totalorder %s20, 0
      %p181 = por %p179, %p180
      %p182 = scmp.ne.s32.totalorder %s170, %s171
      %p183 = scmp.eq.s32.totalorder %s21, 1
      %p184 = por %p182, %p183
      %p186 = scmp.ne.s32.totalorder %s171, %s185
      %p187 = scmp.eq.s32.totalorder %s21, 0
      %p188 = por %p186, %p187
      %s189 = ssub.s32 %s22, %s34
      %s190 = ssub.s32 %s23, %s30
      %s191 = sor.u32 %s189, %s190
      %p192 = scmp.eq.s32.totalorder %s191, 0
      %s194 = sadd.s32 %s193, 1
      %s195 = scalar_select %p192, %s193, %s194
      %p198 = pneg %p192
      %p199 = scmp.eq.s32.totalorder %s15, 1
      %p200 = por %p198, %p199
      %p201 = scmp.ne.s32.totalorder %s193, %s196
      %p202 = scmp.eq.s32.totalorder %s15, 0
      %p203 = por %p201, %p202
      %p204 = scmp.ne.s32.totalorder %s193, %s196
      %p205 = scmp.eq.s32.totalorder %s20, 1
      %p206 = por %p204, %p205
      %p207 = scmp.ne.s32.totalorder %s196, %s197
      %p208 = scmp.eq.s32.totalorder %s20, 0
      %p209 = por %p207, %p208
      %p210 = scmp.ne.s32.totalorder %s196, %s197
      %p211 = scmp.eq.s32.totalorder %s21, 1
      %p212 = por %p210, %p211
      %p214 = scmp.ne.s32.totalorder %s197, %s213
      %p215 = scmp.eq.s32.totalorder %s21, 0
      %p216 = por %p214, %p215
      %p217 = scmp.le.s32.totalorder 1, %s15
      %p218 = scmp.lt.s32.totalorder %s15, 3
      %p219 = pnand %p217, %p218
      %p220 = pneg %p219
      // Predicated region
      $region9: #{downsample_forward.1} parent=5 // pred_check
        _
      $region10: #{downsample_forward.1} parent=5 // pred_check_branch
        %222 = sbr.rel (%p219) target = $region12
      $region11: #{downsample_forward.1} parent=5 // pred_region
        %s223 = ssub.s32 %s15, 1
        // Predicated region
        $region13: #{downsample_forward.1} parent=11 // pred_check
          %p224 = pneg %p160
        $region14: #{downsample_forward.1} parent=11 // pred_check_branch
          %226 = sbr.rel (%p224) target = $region16
        $region15: #{downsample_forward.1} parent=11 // pred_region
          _
        $region16: #{downsample_forward.1} parent=11 // pred_fallthru
          _
        // Predicated region
        $region17: #{downsample_forward.1} parent=11 // pred_check
          %p227 = pneg %p181
        $region18: #{downsample_forward.1} parent=11 // pred_check_branch
          %229 = sbr.rel (%p227) target = $region20
        $region19: #{downsample_forward.1} parent=11 // pred_region
          _
        $region20: #{downsample_forward.1} parent=11 // pred_fallthru
          _
      $region12: #{downsample_forward.1} parent=5 // pred_fallthru
        _
      %p230 = scmp.lt.s32.totalorder %s15, 2
      // Predicated region
      $region21: #{downsample_forward.1} parent=5 // pred_check
        %p231 = pneg %p230
      $region22: #{downsample_forward.1} parent=5 // pred_check_branch
        %233 = sbr.rel (%p231) target = $region24
      $region23: #{downsample_forward.1} parent=5 // pred_region
        // Predicated region
        $region25: #{downsample_forward.1} parent=23 // pred_check
          %p234 = pneg %p49
        $region26: #{downsample_forward.1} parent=23 // pred_check_branch
          %236 = sbr.rel (%p234) target = $region28
        $region27: #{downsample_forward.1} parent=23 // pred_region
          %p237 = scmp.lt.s32.totalorder %s22, 1
          %s238 = scalar_select %p237, %s22, 1
          %p239 = scmp.lt.s32.totalorder %s23, 0
          %s240 = scalar_select %p239, %s23, 0
          %s241 = smul.addr %s240, 9
          %s242 = smul.addr %s238, 9
          %s243 = sadd.s32 %s241, %s242
          %s244 = smul.addr %s243, 4
          %s245 = scalar_lea.vmem %s0, %s244
        $region28: #{downsample_forward.1} parent=23 // pred_fallthru
          _
        // Predicated region
        $region29: #{downsample_forward.1} parent=23 // pred_check
          %p246 = pneg %p77
        $region30: #{downsample_forward.1} parent=23 // pred_check_branch
          %248 = sbr.rel (%p246) target = $region32
        $region31: #{downsample_forward.1} parent=23 // pred_region
          %p249 = scmp.lt.s32.totalorder %s22, 1
          %s250 = scalar_select %p249, %s22, 1
          %p251 = scmp.lt.s32.totalorder %s23, 0
          %s252 = scalar_select %p251, %s23, 0
          %s253 = smul.addr %s252, 9
          %s254 = smul.addr %s250, 9
          %s255 = sadd.s32 %s253, %s254
          %s256 = smul.addr %s255, 4
          %s257 = scalar_lea.vmem %s1, %s256
        $region32: #{downsample_forward.1} parent=23 // pred_fallthru
          _
        // Predicated region
        $region33: #{downsample_forward.1} parent=23 // pred_check
          %p258 = pneg %p105
        $region34: #{downsample_forward.1} parent=23 // pred_check_branch
          %260 = sbr.rel (%p258) target = $region36
        $region35: #{downsample_forward.1} parent=23 // pred_region
          %p261 = scmp.lt.s32.totalorder %s22, 1
          %s262 = scalar_select %p261, %s22, 1
          %p263 = scmp.lt.s32.totalorder %s23, 0
          %s264 = scalar_select %p263, %s23, 0
          %s265 = smul.addr %s264, 9
          %s266 = smul.addr %s262, 9
          %s267 = sadd.s32 %s265, %s266
          %s268 = smul.addr %s267, 4
          %s269 = scalar_lea.vmem %s2, %s268
        $region36: #{downsample_forward.1} parent=23 // pred_fallthru
          _
        // Predicated region
        $region37: #{downsample_forward.1} parent=23 // pred_check
          %p270 = pneg %p133
        $region38: #{downsample_forward.1} parent=23 // pred_check_branch
          %272 = sbr.rel (%p270) target = $region40
        $region39: #{downsample_forward.1} parent=23 // pred_region
          %p273 = scmp.lt.s32.totalorder %s22, 1
          %s274 = scalar_select %p273, %s22, 1
          %p275 = scmp.lt.s32.totalorder %s23, 0
          %s276 = scalar_select %p275, %s23, 0
          %s277 = smul.addr %s276, 9
          %s278 = smul.addr %s274, 9
          %s279 = sadd.s32 %s277, %s278
          %s280 = smul.addr %s279, 4
          %s281 = scalar_lea.vmem %s3, %s280
        $region40: #{downsample_forward.1} parent=23 // pred_fallthru
          _
      $region24: #{downsample_forward.1} parent=5 // pred_fallthru
        _
      %p282 = scmp.le.s32.totalorder 1, %s15
      %p283 = scmp.lt.s32.totalorder %s15, 3
      %p284 = pnand %p282, %p283
      %p285 = pneg %p284
      // Predicated region
      $region41: #{downsample_forward.1} parent=5 // pred_check
        _
      $region42: #{downsample_forward.1} parent=5 // pred_check_branch
        %287 = sbr.rel (%p284) target = $region44
      $region43: #{downsample_forward.1} parent=5 // pred_region
        %s288 = ssub.s32 %s15, 1
        %p289 = scmp.lt.s32.totalorder %s24, 1
        %s290 = scalar_select %p289, %s24, 1
        %p291 = scmp.lt.s32.totalorder %s25, 0
        %s292 = scalar_select %p291, %s25, 0
        %s293 = smul.addr %s292, 9
        %s294 = smul.addr %s290, 9
        %s295 = sadd.s32 %s293, %s294
        %s296 = smul.addr %s295, 4
        %s297 = scalar_lea.vmem %s0, %s296
        %p298 = pneg %p55
        %p299 = pneg %p52
        %p300 = scmp.lt.s32.totalorder %s24, 1
        %s301 = scalar_select %p300, %s24, 1
        %p302 = scmp.lt.s32.totalorder %s25, 0
        %s303 = scalar_select %p302, %s25, 0
        %s304 = smul.addr %s303, 9
        %s305 = smul.addr %s301, 9
        %s306 = sadd.s32 %s304, %s305
        %s307 = smul.addr %s306, 4
        %s308 = scalar_lea.vmem %s1, %s307
        %p309 = pneg %p83
        %p310 = pneg %p80
        %p311 = scmp.lt.s32.totalorder %s24, 1
        %s312 = scalar_select %p311, %s24, 1
        %p313 = scmp.lt.s32.totalorder %s25, 0
        %s314 = scalar_select %p313, %s25, 0
        %s315 = smul.addr %s314, 9
        %s316 = smul.addr %s312, 9
        %s317 = sadd.s32 %s315, %s316
        %s318 = smul.addr %s317, 4
        %s319 = scalar_lea.vmem %s2, %s318
        %p320 = pneg %p111
        %p321 = pneg %p108
        %p322 = scmp.lt.s32.totalorder %s24, 1
        %s323 = scalar_select %p322, %s24, 1
        %p324 = scmp.lt.s32.totalorder %s25, 0
        %s325 = scalar_select %p324, %s25, 0
        %s326 = smul.addr %s325, 9
        %s327 = smul.addr %s323, 9
        %s328 = sadd.s32 %s326, %s327
        %s329 = smul.addr %s328, 4
        %s330 = scalar_lea.vmem %s3, %s329
        %p331 = pneg %p139
        %p332 = pneg %p136
        %p333 = pneg %p160
        %p334 = pneg %p157
        %p335 = pneg %p181
        %p336 = pneg %p178
        %p337 = pneg %p209
        %p338 = pneg %p206
        %s339 = sand.u32 %s196, 1
        %s340 = scalar_lea.sflag [#allocation3], %s339
        %s341 = sand.u32 %s196, 1
        %s342 = smul.addr %s341, 64
        %s343 = scalar_lea.vmem [#allocation2], %s342
        %p344 = scmp.lt.s32.totalorder %s24, 1
        %s345 = scalar_select %p344, %s24, 1
        %p346 = scmp.lt.s32.totalorder %s25, 0
        %s347 = scalar_select %p346, %s25, 0
        %s348 = smul.addr %s347, 9
        %s349 = smul.addr %s345, 9
        %s350 = sadd.s32 %s348, %s349
        %s351 = smul.addr %s350, 4
        %s352 = scalar_lea.vmem %s0, %s351
        %p353 = scmp.lt.s32.totalorder %s24, 1
        %s354 = scalar_select %p353, %s24, 1
        %p355 = scmp.lt.s32.totalorder %s25, 0
        %s356 = scalar_select %p355, %s25, 0
        %s357 = smul.addr %s356, 9
        %s358 = smul.addr %s354, 9
        %s359 = sadd.s32 %s357, %s358
        %s360 = smul.addr %s359, 4
        %s361 = scalar_lea.vmem %s1, %s360
        %p362 = scmp.lt.s32.totalorder %s24, 1
        %s363 = scalar_select %p362, %s24, 1
        %p364 = scmp.lt.s32.totalorder %s25, 0
        %s365 = scalar_select %p364, %s25, 0
        %s366 = smul.addr %s365, 9
        %s367 = smul.addr %s363, 9
        %s368 = sadd.s32 %s366, %s367
        %s369 = smul.addr %s368, 4
        %s370 = scalar_lea.vmem %s2, %s369
        %p371 = scmp.lt.s32.totalorder %s24, 1
        %s372 = scalar_select %p371, %s24, 1
        %p373 = scmp.lt.s32.totalorder %s25, 0
        %s374 = scalar_select %p373, %s25, 0
        %s375 = smul.addr %s374, 9
        %s376 = smul.addr %s372, 9
        %s377 = sadd.s32 %s375, %s376
        %s378 = smul.addr %s377, 4
        %s379 = scalar_lea.vmem %s3, %s378
        %v380 = vld [vmem:[%s5] sm:$0xff]
        %v381 = vld [vmem:[%s4] sm:$0xff]
        %s382 = scalar_lea.vmem %s4, 8
        %v383 = vld [vmem:[%s382] sm:$0xff]
        %s384 = scalar_lea.vmem %s4, 16
        %v385 = vld [vmem:[%s384] sm:$0xff]
        %s386 = scalar_lea.vmem %s4, 24
        %v387 = vld [vmem:[%s386] sm:$0xff]
        %s388 = scalar_lea.vmem %s4, 32
        %v389 = vld [vmem:[%s388] sm:$0xff]
        %s390 = scalar_lea.vmem %s4, 40
        %v391 = vld [vmem:[%s390] sm:$0xff]
        %s392 = scalar_lea.vmem %s4, 48
        %v393 = vld [vmem:[%s392] sm:$0xff]
        %s394 = scalar_lea.vmem %s4, 56
        %v395 = vld [vmem:[%s394] sm:$0xff]
        %s396 = scalar_lea.vmem %s4, 64
        %v397 = vld [vmem:[%s396] sm:$0xff]
        %v398 = vld [vmem:[%s352] sm:$0xf]
        %v399 = vld [vmem:[%s361] sm:$0xf]
        %vm400 = vcmask 31744
        %v402 = vsel %vm400, %v383, 0
        %vm404 = vcmask 1043456
        %v406 = vsel %vm404, %v399, 0
        %408 = vmatpush.msra.mxu0 0.0
        %409 = vmatpush.msra.mxu0 0.0
        %410 = vmatpush.msra.mxu0 0.0
        %411 = vmatpush.msra.mxu0 0.0
        %412 = vmatpush.msra.mxu0 0.0
        %413 = vmatpush.msra.mxu0 0.0
        %414 = vmatpush.msra.mxu0 0.0
        %415 = vmatpush.msra.mxu0 0.0
        %416 = vmatpush.msra.mxu0 0.0
        %417 = vmatpush.msra.mxu0 0.0
        %418 = vmatpush.msra.mxu0 0.0
        %419 = vmatpush.msra.mxu0 0.0
        %420 = vmatpush.msra.mxu0 0.0
        %421 = vmatpush.msra.mxu0 0.0
        %422 = vmatpush.msra.mxu0 0.0
        %423 = vmatpush.msra.mxu0 %v406
        %424 = vmatmul.f32.gmra.mxu0 %v402
        %v425 = vpop.f32.mrf.mxu0
        %v426 = vadd.f32 0.0, %v425
        %427 = vdwg.mxu0
        %v429 = vsel %vm400, %v381, 0
        %v432 = vsel %vm404, %v398, 0
        %434 = vmatpush.msra.mxu0 0.0
        %435 = vmatpush.msra.mxu0 0.0
        %436 = vmatpush.msra.mxu0 0.0
        %437 = vmatpush.msra.mxu0 0.0
        %438 = vmatpush.msra.mxu0 0.0
        %439 = vmatpush.msra.mxu0 0.0
        %440 = vmatpush.msra.mxu0 0.0
        %441 = vmatpush.msra.mxu0 0.0
        %442 = vmatpush.msra.mxu0 0.0
        %443 = vmatpush.msra.mxu0 0.0
        %444 = vmatpush.msra.mxu0 0.0
        %445 = vmatpush.msra.mxu0 0.0
        %446 = vmatpush.msra.mxu0 0.0
        %447 = vmatpush.msra.mxu0 0.0
        %448 = vmatpush.msra.mxu0 0.0
        %449 = vmatpush.msra.mxu0 %v432
        %450 = vmatmul.f32.gmra.mxu0 %v429
        %v451 = vpop.f32.mrf.mxu0
        %v452 = vadd.f32 %v426, %v451
        %453 = vdwg.mxu0
        %454 = vrot.lane.b32.xlu0 %v398, 127
        %v455 = vpop.permute.xlu0 %454
        %v457 = vsel %vm400, %v385, 0
        %v459 = vsel %vm404, %v455, 0
        %461 = vmatpush.msra.mxu0 0.0
        %462 = vmatpush.msra.mxu0 0.0
        %463 = vmatpush.msra.mxu0 0.0
        %464 = vmatpush.msra.mxu0 0.0
        %465 = vmatpush.msra.mxu0 0.0
        %466 = vmatpush.msra.mxu0 0.0
        %467 = vmatpush.msra.mxu0 0.0
        %468 = vmatpush.msra.mxu0 0.0
        %469 = vmatpush.msra.mxu0 0.0
        %470 = vmatpush.msra.mxu0 0.0
        %471 = vmatpush.msra.mxu0 0.0
        %472 = vmatpush.msra.mxu0 0.0
        %473 = vmatpush.msra.mxu0 0.0
        %474 = vmatpush.msra.mxu0 0.0
        %475 = vmatpush.msra.mxu0 0.0
        %476 = vmatpush.msra.mxu0 %v459
        %477 = vmatmul.f32.gmra.mxu0 %v457
        %v478 = vpop.f32.mrf.mxu0
        %v479 = vadd.f32 0.0, %v478
        %480 = vdwg.mxu0
        %v481 = vadd.f32 %v452, %v479
        %v482 = vld [vmem:[%s370] sm:$0xf]
        %v484 = vsel %vm400, %v387, 0
        %v487 = vsel %vm404, %v482, 0
        %489 = vmatpush.msra.mxu0 0.0
        %490 = vmatpush.msra.mxu0 0.0
        %491 = vmatpush.msra.mxu0 0.0
        %492 = vmatpush.msra.mxu0 0.0
        %493 = vmatpush.msra.mxu0 0.0
        %494 = vmatpush.msra.mxu0 0.0
        %495 = vmatpush.msra.mxu0 0.0
        %496 = vmatpush.msra.mxu0 0.0
        %497 = vmatpush.msra.mxu0 0.0
        %498 = vmatpush.msra.mxu0 0.0
        %499 = vmatpush.msra.mxu0 0.0
        %500 = vmatpush.msra.mxu0 0.0
        %501 = vmatpush.msra.mxu0 0.0
        %502 = vmatpush.msra.mxu0 0.0
        %503 = vmatpush.msra.mxu0 0.0
        %504 = vmatpush.msra.mxu0 %v487
        %505 = vmatmul.f32.gmra.mxu0 %v484
        %v506 = vpop.f32.mrf.mxu0
        %v507 = vadd.f32 0.0, %v506
        %508 = vdwg.mxu0
        %v509 = vadd.f32 %v481, %v507
        %v510 = vld [vmem:[%s379] sm:$0xf]
        %v512 = vsel %vm400, %v389, 0
        %v515 = vsel %vm404, %v510, 0
        %517 = vmatpush.msra.mxu0 0.0
        %518 = vmatpush.msra.mxu0 0.0
        %519 = vmatpush.msra.mxu0 0.0
        %520 = vmatpush.msra.mxu0 0.0
        %521 = vmatpush.msra.mxu0 0.0
        %522 = vmatpush.msra.mxu0 0.0
        %523 = vmatpush.msra.mxu0 0.0
        %524 = vmatpush.msra.mxu0 0.0
        %525 = vmatpush.msra.mxu0 0.0
        %526 = vmatpush.msra.mxu0 0.0
        %527 = vmatpush.msra.mxu0 0.0
        %528 = vmatpush.msra.mxu0 0.0
        %529 = vmatpush.msra.mxu0 0.0
        %530 = vmatpush.msra.mxu0 0.0
        %531 = vmatpush.msra.mxu0 0.0
        %532 = vmatpush.msra.mxu0 %v515
        %533 = vmatmul.f32.gmra.mxu0 %v512
        %v534 = vpop.f32.mrf.mxu0
        %v535 = vadd.f32 0.0, %v534
        %536 = vdwg.mxu0
        %v537 = vadd.f32 %v509, %v535
        %538 = vrot.lane.b32.xlu0 %v482, 127
        %v539 = vpop.permute.xlu0 %538
        %v541 = vsel %vm400, %v391, 0
        %v543 = vsel %vm404, %v539, 0
        %545 = vmatpush.msra.mxu0 0.0
        %546 = vmatpush.msra.mxu0 0.0
        %547 = vmatpush.msra.mxu0 0.0
        %548 = vmatpush.msra.mxu0 0.0
        %549 = vmatpush.msra.mxu0 0.0
        %550 = vmatpush.msra.mxu0 0.0
        %551 = vmatpush.msra.mxu0 0.0
        %552 = vmatpush.msra.mxu0 0.0
        %553 = vmatpush.msra.mxu0 0.0
        %554 = vmatpush.msra.mxu0 0.0
        %555 = vmatpush.msra.mxu0 0.0
        %556 = vmatpush.msra.mxu0 0.0
        %557 = vmatpush.msra.mxu0 0.0
        %558 = vmatpush.msra.mxu0 0.0
        %559 = vmatpush.msra.mxu0 0.0
        %560 = vmatpush.msra.mxu0 %v543
        %561 = vmatmul.f32.gmra.mxu0 %v541
        %v562 = vpop.f32.mrf.mxu0
        %v563 = vadd.f32 0.0, %v562
        %564 = vdwg.mxu0
        %v565 = vadd.f32 %v537, %v563
        %s566 = scalar_lea.vmem %s352, 4
        %v567 = vld [vmem:[%s566] sm:$0xf]
        %v569 = vsel %vm400, %v393, 0
        %v572 = vsel %vm404, %v567, 0
        %574 = vmatpush.msra.mxu0 0.0
        %575 = vmatpush.msra.mxu0 0.0
        %576 = vmatpush.msra.mxu0 0.0
        %577 = vmatpush.msra.mxu0 0.0
        %578 = vmatpush.msra.mxu0 0.0
        %579 = vmatpush.msra.mxu0 0.0
        %580 = vmatpush.msra.mxu0 0.0
        %581 = vmatpush.msra.mxu0 0.0
        %582 = vmatpush.msra.mxu0 0.0
        %583 = vmatpush.msra.mxu0 0.0
        %584 = vmatpush.msra.mxu0 0.0
        %585 = vmatpush.msra.mxu0 0.0
        %586 = vmatpush.msra.mxu0 0.0
        %587 = vmatpush.msra.mxu0 0.0
        %588 = vmatpush.msra.mxu0 0.0
        %589 = vmatpush.msra.mxu0 %v572
        %590 = vmatmul.f32.gmra.mxu0 %v569
        %v591 = vpop.f32.mrf.mxu0
        %v592 = vadd.f32 0.0, %v591
        %593 = vdwg.mxu0
        %v594 = vadd.f32 %v565, %v592
        %s595 = scalar_lea.vmem %s361, 4
        %v596 = vld [vmem:[%s595] sm:$0xf]
        %v598 = vsel %vm400, %v395, 0
        %v601 = vsel %vm404, %v596, 0
        %603 = vmatpush.msra.mxu0 0.0
        %604 = vmatpush.msra.mxu0 0.0
        %605 = vmatpush.msra.mxu0 0.0
        %606 = vmatpush.msra.mxu0 0.0
        %607 = vmatpush.msra.mxu0 0.0
        %608 = vmatpush.msra.mxu0 0.0
        %609 = vmatpush.msra.mxu0 0.0
        %610 = vmatpush.msra.mxu0 0.0
        %611 = vmatpush.msra.mxu0 0.0
        %612 = vmatpush.msra.mxu0 0.0
        %613 = vmatpush.msra.mxu0 0.0
        %614 = vmatpush.msra.mxu0 0.0
        %615 = vmatpush.msra.mxu0 0.0
        %616 = vmatpush.msra.mxu0 0.0
        %617 = vmatpush.msra.mxu0 0.0
        %618 = vmatpush.msra.mxu0 %v601
        %619 = vmatmul.f32.gmra.mxu0 %v598
        %v620 = vpop.f32.mrf.mxu0
        %v621 = vadd.f32 0.0, %v620
        %622 = vdwg.mxu0
        %v623 = vadd.f32 %v594, %v621
        %624 = vrot.lane.b32.xlu0 %v567, 127
        %v625 = vpop.permute.xlu0 %624
        %v627 = vsel %vm400, %v397, 0
        %v629 = vsel %vm404, %v625, 0
        %631 = vmatpush.msra.mxu0 0.0
        %632 = vmatpush.msra.mxu0 0.0
        %633 = vmatpush.msra.mxu0 0.0
        %634 = vmatpush.msra.mxu0 0.0
        %635 = vmatpush.msra.mxu0 0.0
        %636 = vmatpush.msra.mxu0 0.0
        %637 = vmatpush.msra.mxu0 0.0
        %638 = vmatpush.msra.mxu0 0.0
        %639 = vmatpush.msra.mxu0 0.0
        %640 = vmatpush.msra.mxu0 0.0
        %641 = vmatpush.msra.mxu0 0.0
        %642 = vmatpush.msra.mxu0 0.0
        %643 = vmatpush.msra.mxu0 0.0
        %644 = vmatpush.msra.mxu0 0.0
        %645 = vmatpush.msra.mxu0 0.0
        %646 = vmatpush.msra.mxu0 %v629
        %647 = vmatmul.f32.gmra.mxu0 %v627
        %v648 = vpop.f32.mrf.mxu0
        %v649 = vadd.f32 0.0, %v648
        %650 = vdwg.mxu0
        %v651 = vadd.f32 %v623, %v649
        %653 = vset.pattern.permute.xlu0 0
        %654 = vperm.xlu0 %653, %v380
        %v655 = vpop.permute.xlu0 %654
        %v657 = vadd.f32 %v651, %v655
        %v658 = vmax.f32 %v657, 0.0
        %v660 = vrot.slane %v658, 1
        %v661 = vrot.slane %v658, 2
        %v662 = vrot.slane %v658, 3
        %v663 = vrot.slane %v658, 4
        %v664 = vrot.slane %v658, 5
        %v665 = vrot.slane %v658, 6
        %v666 = vrot.slane %v658, 7
        %vm674 = vcmask 57344
        %675 = vst.msk [vmem:[%s343] sm:$0x1] %vm674, %v658
        %676 = vst.msk [vmem:[%s343 + $0x8] sm:$0x1] %vm674, %v660
        %677 = vst.msk [vmem:[%s343 + $0x10] sm:$0x1] %vm674, %v661
        %678 = vst.msk [vmem:[%s343 + $0x18] sm:$0x1] %vm674, %v662
        %679 = vst.msk [vmem:[%s343 + $0x20] sm:$0x1] %vm674, %v663
        %680 = vst.msk [vmem:[%s343 + $0x28] sm:$0x1] %vm674, %v664
        %681 = vst.msk [vmem:[%s343 + $0x30] sm:$0x1] %vm674, %v665
        %682 = vst.msk [vmem:[%s343 + $0x38] sm:$0x1] %vm674, %v666
        %v683 = vld [vmem:[%s566] sm:$0xf]
        %v684 = vld [vmem:[%s595] sm:$0xf]
        %v686 = vsel %vm404, %v684, 0
        %688 = vmatpush.msra.mxu0 0.0
        %689 = vmatpush.msra.mxu0 0.0
        %690 = vmatpush.msra.mxu0 0.0
        %691 = vmatpush.msra.mxu0 0.0
        %692 = vmatpush.msra.mxu0 0.0
        %693 = vmatpush.msra.mxu0 0.0
        %694 = vmatpush.msra.mxu0 0.0
        %695 = vmatpush.msra.mxu0 0.0
        %696 = vmatpush.msra.mxu0 0.0
        %697 = vmatpush.msra.mxu0 0.0
        %698 = vmatpush.msra.mxu0 0.0
        %699 = vmatpush.msra.mxu0 0.0
        %700 = vmatpush.msra.mxu0 0.0
        %701 = vmatpush.msra.mxu0 0.0
        %702 = vmatpush.msra.mxu0 0.0
        %703 = vmatpush.msra.mxu0 %v686
        %704 = vmatmul.f32.gmra.mxu0 %v402
        %v705 = vpop.f32.mrf.mxu0
        %v706 = vadd.f32 0.0, %v705
        %707 = vdwg.mxu0
        %v709 = vsel %vm404, %v683, 0
        %711 = vmatpush.msra.mxu0 0.0
        %712 = vmatpush.msra.mxu0 0.0
        %713 = vmatpush.msra.mxu0 0.0
        %714 = vmatpush.msra.mxu0 0.0
        %715 = vmatpush.msra.mxu0 0.0
        %716 = vmatpush.msra.mxu0 0.0
        %717 = vmatpush.msra.mxu0 0.0
        %718 = vmatpush.msra.mxu0 0.0
        %719 = vmatpush.msra.mxu0 0.0
        %720 = vmatpush.msra.mxu0 0.0
        %721 = vmatpush.msra.mxu0 0.0
        %722 = vmatpush.msra.mxu0 0.0
        %723 = vmatpush.msra.mxu0 0.0
        %724 = vmatpush.msra.mxu0 0.0
        %725 = vmatpush.msra.mxu0 0.0
        %726 = vmatpush.msra.mxu0 %v709
        %727 = vmatmul.f32.gmra.mxu0 %v429
        %v728 = vpop.f32.mrf.mxu0
        %v729 = vadd.f32 %v706, %v728
        %730 = vdwg.mxu0
        %731 = vrot.lane.b32.xlu0 %v683, 127
        %v732 = vpop.permute.xlu0 %731
        %v733 = vsel %vm404, %v732, 0
        %735 = vmatpush.msra.mxu0 0.0
        %736 = vmatpush.msra.mxu0 0.0
        %737 = vmatpush.msra.mxu0 0.0
        %738 = vmatpush.msra.mxu0 0.0
        %739 = vmatpush.msra.mxu0 0.0
        %740 = vmatpush.msra.mxu0 0.0
        %741 = vmatpush.msra.mxu0 0.0
        %742 = vmatpush.msra.mxu0 0.0
        %743 = vmatpush.msra.mxu0 0.0
        %744 = vmatpush.msra.mxu0 0.0
        %745 = vmatpush.msra.mxu0 0.0
        %746 = vmatpush.msra.mxu0 0.0
        %747 = vmatpush.msra.mxu0 0.0
        %748 = vmatpush.msra.mxu0 0.0
        %749 = vmatpush.msra.mxu0 0.0
        %750 = vmatpush.msra.mxu0 %v733
        %751 = vmatmul.f32.gmra.mxu0 %v457
        %v752 = vpop.f32.mrf.mxu0
        %v753 = vadd.f32 0.0, %v752
        %754 = vdwg.mxu0
        %v755 = vadd.f32 %v729, %v753
        %s756 = scalar_lea.vmem %s370, 4
        %v757 = vld [vmem:[%s756] sm:$0xf]
        %v759 = vsel %vm404, %v757, 0
        %761 = vmatpush.msra.mxu0 0.0
        %762 = vmatpush.msra.mxu0 0.0
        %763 = vmatpush.msra.mxu0 0.0
        %764 = vmatpush.msra.mxu0 0.0
        %765 = vmatpush.msra.mxu0 0.0
        %766 = vmatpush.msra.mxu0 0.0
        %767 = vmatpush.msra.mxu0 0.0
        %768 = vmatpush.msra.mxu0 0.0
        %769 = vmatpush.msra.mxu0 0.0
        %770 = vmatpush.msra.mxu0 0.0
        %771 = vmatpush.msra.mxu0 0.0
        %772 = vmatpush.msra.mxu0 0.0
        %773 = vmatpush.msra.mxu0 0.0
        %774 = vmatpush.msra.mxu0 0.0
        %775 = vmatpush.msra.mxu0 0.0
        %776 = vmatpush.msra.mxu0 %v759
        %777 = vmatmul.f32.gmra.mxu0 %v484
        %v778 = vpop.f32.mrf.mxu0
        %v779 = vadd.f32 0.0, %v778
        %780 = vdwg.mxu0
        %v781 = vadd.f32 %v755, %v779
        %s782 = scalar_lea.vmem %s379, 4
        %v783 = vld [vmem:[%s782] sm:$0xf]
        %v785 = vsel %vm404, %v783, 0
        %787 = vmatpush.msra.mxu0 0.0
        %788 = vmatpush.msra.mxu0 0.0
        %789 = vmatpush.msra.mxu0 0.0
        %790 = vmatpush.msra.mxu0 0.0
        %791 = vmatpush.msra.mxu0 0.0
        %792 = vmatpush.msra.mxu0 0.0
        %793 = vmatpush.msra.mxu0 0.0
        %794 = vmatpush.msra.mxu0 0.0
        %795 = vmatpush.msra.mxu0 0.0
        %796 = vmatpush.msra.mxu0 0.0
        %797 = vmatpush.msra.mxu0 0.0
        %798 = vmatpush.msra.mxu0 0.0
        %799 = vmatpush.msra.mxu0 0.0
        %800 = vmatpush.msra.mxu0 0.0
        %801 = vmatpush.msra.mxu0 0.0
        %802 = vmatpush.msra.mxu0 %v785
        %803 = vmatmul.f32.gmra.mxu0 %v512
        %v804 = vpop.f32.mrf.mxu0
        %v805 = vadd.f32 0.0, %v804
        %806 = vdwg.mxu0
        %v807 = vadd.f32 %v781, %v805
        %808 = vrot.lane.b32.xlu0 %v757, 127
        %v809 = vpop.permute.xlu0 %808
        %v810 = vsel %vm404, %v809, 0
        %812 = vmatpush.msra.mxu0 0.0
        %813 = vmatpush.msra.mxu0 0.0
        %814 = vmatpush.msra.mxu0 0.0
        %815 = vmatpush.msra.mxu0 0.0
        %816 = vmatpush.msra.mxu0 0.0
        %817 = vmatpush.msra.mxu0 0.0
        %818 = vmatpush.msra.mxu0 0.0
        %819 = vmatpush.msra.mxu0 0.0
        %820 = vmatpush.msra.mxu0 0.0
        %821 = vmatpush.msra.mxu0 0.0
        %822 = vmatpush.msra.mxu0 0.0
        %823 = vmatpush.msra.mxu0 0.0
        %824 = vmatpush.msra.mxu0 0.0
        %825 = vmatpush.msra.mxu0 0.0
        %826 = vmatpush.msra.mxu0 0.0
        %827 = vmatpush.msra.mxu0 %v810
        %828 = vmatmul.f32.gmra.mxu0 %v541
        %v829 = vpop.f32.mrf.mxu0
        %v830 = vadd.f32 0.0, %v829
        %831 = vdwg.mxu0
        %v832 = vadd.f32 %v807, %v830
        %s833 = scalar_lea.vmem %s352, 8
        %v834 = vld [vmem:[%s833] sm:$0xf]
        %v836 = vsel %vm404, %v834, 0
        %838 = vmatpush.msra.mxu0 0.0
        %839 = vmatpush.msra.mxu0 0.0
        %840 = vmatpush.msra.mxu0 0.0
        %841 = vmatpush.msra.mxu0 0.0
        %842 = vmatpush.msra.mxu0 0.0
        %843 = vmatpush.msra.mxu0 0.0
        %844 = vmatpush.msra.mxu0 0.0
        %845 = vmatpush.msra.mxu0 0.0
        %846 = vmatpush.msra.mxu0 0.0
        %847 = vmatpush.msra.mxu0 0.0
        %848 = vmatpush.msra.mxu0 0.0
        %849 = vmatpush.msra.mxu0 0.0
        %850 = vmatpush.msra.mxu0 0.0
        %851 = vmatpush.msra.mxu0 0.0
        %852 = vmatpush.msra.mxu0 0.0
        %853 = vmatpush.msra.mxu0 %v836
        %854 = vmatmul.f32.gmra.mxu0 %v569
        %v855 = vpop.f32.mrf.mxu0
        %v856 = vadd.f32 0.0, %v855
        %857 = vdwg.mxu0
        %v858 = vadd.f32 %v832, %v856
        %s859 = scalar_lea.vmem %s361, 8
        %v860 = vld [vmem:[%s859] sm:$0xf]
        %v862 = vsel %vm404, %v860, 0
        %864 = vmatpush.msra.mxu0 0.0
        %865 = vmatpush.msra.mxu0 0.0
        %866 = vmatpush.msra.mxu0 0.0
        %867 = vmatpush.msra.mxu0 0.0
        %868 = vmatpush.msra.mxu0 0.0
        %869 = vmatpush.msra.mxu0 0.0
        %870 = vmatpush.msra.mxu0 0.0
        %871 = vmatpush.msra.mxu0 0.0
        %872 = vmatpush.msra.mxu0 0.0
        %873 = vmatpush.msra.mxu0 0.0
        %874 = vmatpush.msra.mxu0 0.0
        %875 = vmatpush.msra.mxu0 0.0
        %876 = vmatpush.msra.mxu0 0.0
        %877 = vmatpush.msra.mxu0 0.0
        %878 = vmatpush.msra.mxu0 0.0
        %879 = vmatpush.msra.mxu0 %v862
        %880 = vmatmul.f32.gmra.mxu0 %v598
        %v881 = vpop.f32.mrf.mxu0
        %v882 = vadd.f32 0.0, %v881
        %883 = vdwg.mxu0
        %v884 = vadd.f32 %v858, %v882
        %885 = vrot.lane.b32.xlu0 %v834, 127
        %v886 = vpop.permute.xlu0 %885
        %v887 = vsel %vm404, %v886, 0
        %889 = vmatpush.msra.mxu0 0.0
        %890 = vmatpush.msra.mxu0 0.0
        %891 = vmatpush.msra.mxu0 0.0
        %892 = vmatpush.msra.mxu0 0.0
        %893 = vmatpush.msra.mxu0 0.0
        %894 = vmatpush.msra.mxu0 0.0
        %895 = vmatpush.msra.mxu0 0.0
        %896 = vmatpush.msra.mxu0 0.0
        %897 = vmatpush.msra.mxu0 0.0
        %898 = vmatpush.msra.mxu0 0.0
        %899 = vmatpush.msra.mxu0 0.0
        %900 = vmatpush.msra.mxu0 0.0
        %901 = vmatpush.msra.mxu0 0.0
        %902 = vmatpush.msra.mxu0 0.0
        %903 = vmatpush.msra.mxu0 0.0
        %904 = vmatpush.msra.mxu0 %v887
        %905 = vmatmul.f32.gmra.mxu0 %v627
        %v906 = vpop.f32.mrf.mxu0
        %v907 = vadd.f32 0.0, %v906
        %908 = vdwg.mxu0
        %v909 = vadd.f32 %v884, %v907
        %v910 = vadd.f32 %v909, %v655
        %v911 = vmax.f32 %v910, 0.0
        %v913 = vrot.slane %v911, 1
        %v914 = vrot.slane %v911, 2
        %v915 = vrot.slane %v911, 3
        %v916 = vrot.slane %v911, 4
        %v917 = vrot.slane %v911, 5
        %v918 = vrot.slane %v911, 6
        %v919 = vrot.slane %v911, 7
        %927 = vst.msk [vmem:[%s343 + $0x1] sm:$0x1] %vm674, %v911
        %928 = vst.msk [vmem:[%s343 + $0x9] sm:$0x1] %vm674, %v913
        %929 = vst.msk [vmem:[%s343 + $0x11] sm:$0x1] %vm674, %v914
        %930 = vst.msk [vmem:[%s343 + $0x19] sm:$0x1] %vm674, %v915
        %931 = vst.msk [vmem:[%s343 + $0x21] sm:$0x1] %vm674, %v916
        %932 = vst.msk [vmem:[%s343 + $0x29] sm:$0x1] %vm674, %v917
        %933 = vst.msk [vmem:[%s343 + $0x31] sm:$0x1] %vm674, %v918
        %934 = vst.msk [vmem:[%s343 + $0x39] sm:$0x1] %vm674, %v919
        %v935 = vld [vmem:[%s833] sm:$0xf]
        %v936 = vld [vmem:[%s859] sm:$0xf]
        %v938 = vsel %vm404, %v936, 0
        %940 = vmatpush.msra.mxu0 0.0
        %941 = vmatpush.msra.mxu0 0.0
        %942 = vmatpush.msra.mxu0 0.0
        %943 = vmatpush.msra.mxu0 0.0
        %944 = vmatpush.msra.mxu0 0.0
        %945 = vmatpush.msra.mxu0 0.0
        %946 = vmatpush.msra.mxu0 0.0
        %947 = vmatpush.msra.mxu0 0.0
        %948 = vmatpush.msra.mxu0 0.0
        %949 = vmatpush.msra.mxu0 0.0
        %950 = vmatpush.msra.mxu0 0.0
        %951 = vmatpush.msra.mxu0 0.0
        %952 = vmatpush.msra.mxu0 0.0
        %953 = vmatpush.msra.mxu0 0.0
        %954 = vmatpush.msra.mxu0 0.0
        %955 = vmatpush.msra.mxu0 %v938
        %956 = vmatmul.f32.gmra.mxu0 %v402
        %v957 = vpop.f32.mrf.mxu0
        %v958 = vadd.f32 0.0, %v957
        %959 = vdwg.mxu0
        %v961 = vsel %vm404, %v935, 0
        %963 = vmatpush.msra.mxu0 0.0
        %964 = vmatpush.msra.mxu0 0.0
        %965 = vmatpush.msra.mxu0 0.0
        %966 = vmatpush.msra.mxu0 0.0
        %967 = vmatpush.msra.mxu0 0.0
        %968 = vmatpush.msra.mxu0 0.0
        %969 = vmatpush.msra.mxu0 0.0
        %970 = vmatpush.msra.mxu0 0.0
        %971 = vmatpush.msra.mxu0 0.0
        %972 = vmatpush.msra.mxu0 0.0
        %973 = vmatpush.msra.mxu0 0.0
        %974 = vmatpush.msra.mxu0 0.0
        %975 = vmatpush.msra.mxu0 0.0
        %976 = vmatpush.msra.mxu0 0.0
        %977 = vmatpush.msra.mxu0 0.0
        %978 = vmatpush.msra.mxu0 %v961
        %979 = vmatmul.f32.gmra.mxu0 %v429
        %v980 = vpop.f32.mrf.mxu0
        %v981 = vadd.f32 %v958, %v980
        %982 = vdwg.mxu0
        %983 = vrot.lane.b32.xlu0 %v935, 127
        %v984 = vpop.permute.xlu0 %983
        %v985 = vsel %vm404, %v984, 0
        %987 = vmatpush.msra.mxu0 0.0
        %988 = vmatpush.msra.mxu0 0.0
        %989 = vmatpush.msra.mxu0 0.0
        %990 = vmatpush.msra.mxu0 0.0
        %991 = vmatpush.msra.mxu0 0.0
        %992 = vmatpush.msra.mxu0 0.0
        %993 = vmatpush.msra.mxu0 0.0
        %994 = vmatpush.msra.mxu0 0.0
        %995 = vmatpush.msra.mxu0 0.0
        %996 = vmatpush.msra.mxu0 0.0
        %997 = vmatpush.msra.mxu0 0.0
        %998 = vmatpush.msra.mxu0 0.0
        %999 = vmatpush.msra.mxu0 0.0
        %1000 = vmatpush.msra.mxu0 0.0
        %1001 = vmatpush.msra.mxu0 0.0
        %1002 = vmatpush.msra.mxu0 %v985
        %1003 = vmatmul.f32.gmra.mxu0 %v457
        %v1004 = vpop.f32.mrf.mxu0
        %v1005 = vadd.f32 0.0, %v1004
        %1006 = vdwg.mxu0
        %v1007 = vadd.f32 %v981, %v1005
        %s1008 = scalar_lea.vmem %s370, 8
        %v1009 = vld [vmem:[%s1008] sm:$0xf]
        %v1011 = vsel %vm404, %v1009, 0
        %1013 = vmatpush.msra.mxu0 0.0
        %1014 = vmatpush.msra.mxu0 0.0
        %1015 = vmatpush.msra.mxu0 0.0
        %1016 = vmatpush.msra.mxu0 0.0
        %1017 = vmatpush.msra.mxu0 0.0
        %1018 = vmatpush.msra.mxu0 0.0
        %1019 = vmatpush.msra.mxu0 0.0
        %1020 = vmatpush.msra.mxu0 0.0
        %1021 = vmatpush.msra.mxu0 0.0
        %1022 = vmatpush.msra.mxu0 0.0
        %1023 = vmatpush.msra.mxu0 0.0
        %1024 = vmatpush.msra.mxu0 0.0
        %1025 = vmatpush.msra.mxu0 0.0
        %1026 = vmatpush.msra.mxu0 0.0
        %1027 = vmatpush.msra.mxu0 0.0
        %1028 = vmatpush.msra.mxu0 %v1011
        %1029 = vmatmul.f32.gmra.mxu0 %v484
        %v1030 = vpop.f32.mrf.mxu0
        %v1031 = vadd.f32 0.0, %v1030
        %1032 = vdwg.mxu0
        %v1033 = vadd.f32 %v1007, %v1031
        %s1034 = scalar_lea.vmem %s379, 8
        %v1035 = vld [vmem:[%s1034] sm:$0xf]
        %v1037 = vsel %vm404, %v1035, 0
        %1039 = vmatpush.msra.mxu0 0.0
        %1040 = vmatpush.msra.mxu0 0.0
        %1041 = vmatpush.msra.mxu0 0.0
        %1042 = vmatpush.msra.mxu0 0.0
        %1043 = vmatpush.msra.mxu0 0.0
        %1044 = vmatpush.msra.mxu0 0.0
        %1045 = vmatpush.msra.mxu0 0.0
        %1046 = vmatpush.msra.mxu0 0.0
        %1047 = vmatpush.msra.mxu0 0.0
        %1048 = vmatpush.msra.mxu0 0.0
        %1049 = vmatpush.msra.mxu0 0.0
        %1050 = vmatpush.msra.mxu0 0.0
        %1051 = vmatpush.msra.mxu0 0.0
        %1052 = vmatpush.msra.mxu0 0.0
        %1053 = vmatpush.msra.mxu0 0.0
        %1054 = vmatpush.msra.mxu0 %v1037
        %1055 = vmatmul.f32.gmra.mxu0 %v512
        %v1056 = vpop.f32.mrf.mxu0
        %v1057 = vadd.f32 0.0, %v1056
        %1058 = vdwg.mxu0
        %v1059 = vadd.f32 %v1033, %v1057
        %1060 = vrot.lane.b32.xlu0 %v1009, 127
        %v1061 = vpop.permute.xlu0 %1060
        %v1062 = vsel %vm404, %v1061, 0
        %1064 = vmatpush.msra.mxu0 0.0
        %1065 = vmatpush.msra.mxu0 0.0
        %1066 = vmatpush.msra.mxu0 0.0
        %1067 = vmatpush.msra.mxu0 0.0
        %1068 = vmatpush.msra.mxu0 0.0
        %1069 = vmatpush.msra.mxu0 0.0
        %1070 = vmatpush.msra.mxu0 0.0
        %1071 = vmatpush.msra.mxu0 0.0
        %1072 = vmatpush.msra.mxu0 0.0
        %1073 = vmatpush.msra.mxu0 0.0
        %1074 = vmatpush.msra.mxu0 0.0
        %1075 = vmatpush.msra.mxu0 0.0
        %1076 = vmatpush.msra.mxu0 0.0
        %1077 = vmatpush.msra.mxu0 0.0
        %1078 = vmatpush.msra.mxu0 0.0
        %1079 = vmatpush.msra.mxu0 %v1062
        %1080 = vmatmul.f32.gmra.mxu0 %v541
        %v1081 = vpop.f32.mrf.mxu0
        %v1082 = vadd.f32 0.0, %v1081
        %1083 = vdwg.mxu0
        %v1084 = vadd.f32 %v1059, %v1082
        %s1085 = scalar_lea.vmem %s352, 12
        %v1086 = vld [vmem:[%s1085] sm:$0xf]
        %v1088 = vsel %vm404, %v1086, 0
        %1090 = vmatpush.msra.mxu0 0.0
        %1091 = vmatpush.msra.mxu0 0.0
        %1092 = vmatpush.msra.mxu0 0.0
        %1093 = vmatpush.msra.mxu0 0.0
        %1094 = vmatpush.msra.mxu0 0.0
        %1095 = vmatpush.msra.mxu0 0.0
        %1096 = vmatpush.msra.mxu0 0.0
        %1097 = vmatpush.msra.mxu0 0.0
        %1098 = vmatpush.msra.mxu0 0.0
        %1099 = vmatpush.msra.mxu0 0.0
        %1100 = vmatpush.msra.mxu0 0.0
        %1101 = vmatpush.msra.mxu0 0.0
        %1102 = vmatpush.msra.mxu0 0.0
        %1103 = vmatpush.msra.mxu0 0.0
        %1104 = vmatpush.msra.mxu0 0.0
        %1105 = vmatpush.msra.mxu0 %v1088
        %1106 = vmatmul.f32.gmra.mxu0 %v569
        %v1107 = vpop.f32.mrf.mxu0
        %v1108 = vadd.f32 0.0, %v1107
        %1109 = vdwg.mxu0
        %v1110 = vadd.f32 %v1084, %v1108
        %s1111 = scalar_lea.vmem %s361, 12
        %v1112 = vld [vmem:[%s1111] sm:$0xf]
        %v1114 = vsel %vm404, %v1112, 0
        %1116 = vmatpush.msra.mxu0 0.0
        %1117 = vmatpush.msra.mxu0 0.0
        %1118 = vmatpush.msra.mxu0 0.0
        %1119 = vmatpush.msra.mxu0 0.0
        %1120 = vmatpush.msra.mxu0 0.0
        %1121 = vmatpush.msra.mxu0 0.0
        %1122 = vmatpush.msra.mxu0 0.0
        %1123 = vmatpush.msra.mxu0 0.0
        %1124 = vmatpush.msra.mxu0 0.0
        %1125 = vmatpush.msra.mxu0 0.0
        %1126 = vmatpush.msra.mxu0 0.0
        %1127 = vmatpush.msra.mxu0 0.0
        %1128 = vmatpush.msra.mxu0 0.0
        %1129 = vmatpush.msra.mxu0 0.0
        %1130 = vmatpush.msra.mxu0 0.0
        %1131 = vmatpush.msra.mxu0 %v1114
        %1132 = vmatmul.f32.gmra.mxu0 %v598
        %v1133 = vpop.f32.mrf.mxu0
        %v1134 = vadd.f32 0.0, %v1133
        %1135 = vdwg.mxu0
        %v1136 = vadd.f32 %v1110, %v1134
        %1137 = vrot.lane.b32.xlu0 %v1086, 127
        %v1138 = vpop.permute.xlu0 %1137
        %v1139 = vsel %vm404, %v1138, 0
        %1141 = vmatpush.msra.mxu0 0.0
        %1142 = vmatpush.msra.mxu0 0.0
        %1143 = vmatpush.msra.mxu0 0.0
        %1144 = vmatpush.msra.mxu0 0.0
        %1145 = vmatpush.msra.mxu0 0.0
        %1146 = vmatpush.msra.mxu0 0.0
        %1147 = vmatpush.msra.mxu0 0.0
        %1148 = vmatpush.msra.mxu0 0.0
        %1149 = vmatpush.msra.mxu0 0.0
        %1150 = vmatpush.msra.mxu0 0.0
        %1151 = vmatpush.msra.mxu0 0.0
        %1152 = vmatpush.msra.mxu0 0.0
        %1153 = vmatpush.msra.mxu0 0.0
        %1154 = vmatpush.msra.mxu0 0.0
        %1155 = vmatpush.msra.mxu0 0.0
        %1156 = vmatpush.msra.mxu0 %v1139
        %1157 = vmatmul.f32.gmra.mxu0 %v627
        %v1158 = vpop.f32.mrf.mxu0
        %v1159 = vadd.f32 0.0, %v1158
        %1160 = vdwg.mxu0
        %v1161 = vadd.f32 %v1136, %v1159
        %v1162 = vadd.f32 %v1161, %v655
        %v1163 = vmax.f32 %v1162, 0.0
        %v1165 = vrot.slane %v1163, 1
        %v1166 = vrot.slane %v1163, 2
        %v1167 = vrot.slane %v1163, 3
        %v1168 = vrot.slane %v1163, 4
        %v1169 = vrot.slane %v1163, 5
        %v1170 = vrot.slane %v1163, 6
        %v1171 = vrot.slane %v1163, 7
        %1179 = vst.msk [vmem:[%s343 + $0x2] sm:$0x1] %vm674, %v1163
        %1180 = vst.msk [vmem:[%s343 + $0xa] sm:$0x1] %vm674, %v1165
        %1181 = vst.msk [vmem:[%s343 + $0x12] sm:$0x1] %vm674, %v1166
        %1182 = vst.msk [vmem:[%s343 + $0x1a] sm:$0x1] %vm674, %v1167
        %1183 = vst.msk [vmem:[%s343 + $0x22] sm:$0x1] %vm674, %v1168
        %1184 = vst.msk [vmem:[%s343 + $0x2a] sm:$0x1] %vm674, %v1169
        %1185 = vst.msk [vmem:[%s343 + $0x32] sm:$0x1] %vm674, %v1170
        %1186 = vst.msk [vmem:[%s343 + $0x3a] sm:$0x1] %vm674, %v1171
        %v1187 = vld [vmem:[%s1085] sm:$0xf]
        %v1188 = vld [vmem:[%s1111] sm:$0xf]
        %v1190 = vsel %vm404, %v1188, 0
        %1192 = vmatpush.msra.mxu0 0.0
        %1193 = vmatpush.msra.mxu0 0.0
        %1194 = vmatpush.msra.mxu0 0.0
        %1195 = vmatpush.msra.mxu0 0.0
        %1196 = vmatpush.msra.mxu0 0.0
        %1197 = vmatpush.msra.mxu0 0.0
        %1198 = vmatpush.msra.mxu0 0.0
        %1199 = vmatpush.msra.mxu0 0.0
        %1200 = vmatpush.msra.mxu0 0.0
        %1201 = vmatpush.msra.mxu0 0.0
        %1202 = vmatpush.msra.mxu0 0.0
        %1203 = vmatpush.msra.mxu0 0.0
        %1204 = vmatpush.msra.mxu0 0.0
        %1205 = vmatpush.msra.mxu0 0.0
        %1206 = vmatpush.msra.mxu0 0.0
        %1207 = vmatpush.msra.mxu0 %v1190
        %1208 = vmatmul.f32.gmra.mxu0 %v402
        %v1209 = vpop.f32.mrf.mxu0
        %v1210 = vadd.f32 0.0, %v1209
        %1211 = vdwg.mxu0
        %v1213 = vsel %vm404, %v1187, 0
        %1215 = vmatpush.msra.mxu0 0.0
        %1216 = vmatpush.msra.mxu0 0.0
        %1217 = vmatpush.msra.mxu0 0.0
        %1218 = vmatpush.msra.mxu0 0.0
        %1219 = vmatpush.msra.mxu0 0.0
        %1220 = vmatpush.msra.mxu0 0.0
        %1221 = vmatpush.msra.mxu0 0.0
        %1222 = vmatpush.msra.mxu0 0.0
        %1223 = vmatpush.msra.mxu0 0.0
        %1224 = vmatpush.msra.mxu0 0.0
        %1225 = vmatpush.msra.mxu0 0.0
        %1226 = vmatpush.msra.mxu0 0.0
        %1227 = vmatpush.msra.mxu0 0.0
        %1228 = vmatpush.msra.mxu0 0.0
        %1229 = vmatpush.msra.mxu0 0.0
        %1230 = vmatpush.msra.mxu0 %v1213
        %1231 = vmatmul.f32.gmra.mxu0 %v429
        %v1232 = vpop.f32.mrf.mxu0
        %v1233 = vadd.f32 %v1210, %v1232
        %1234 = vdwg.mxu0
        %1235 = vrot.lane.b32.xlu0 %v1187, 127
        %v1236 = vpop.permute.xlu0 %1235
        %v1237 = vsel %vm404, %v1236, 0
        %1239 = vmatpush.msra.mxu0 0.0
        %1240 = vmatpush.msra.mxu0 0.0
        %1241 = vmatpush.msra.mxu0 0.0
        %1242 = vmatpush.msra.mxu0 0.0
        %1243 = vmatpush.msra.mxu0 0.0
        %1244 = vmatpush.msra.mxu0 0.0
        %1245 = vmatpush.msra.mxu0 0.0
        %1246 = vmatpush.msra.mxu0 0.0
        %1247 = vmatpush.msra.mxu0 0.0
        %1248 = vmatpush.msra.mxu0 0.0
        %1249 = vmatpush.msra.mxu0 0.0
        %1250 = vmatpush.msra.mxu0 0.0
        %1251 = vmatpush.msra.mxu0 0.0
        %1252 = vmatpush.msra.mxu0 0.0
        %1253 = vmatpush.msra.mxu0 0.0
        %1254 = vmatpush.msra.mxu0 %v1237
        %1255 = vmatmul.f32.gmra.mxu0 %v457
        %v1256 = vpop.f32.mrf.mxu0
        %v1257 = vadd.f32 0.0, %v1256
        %1258 = vdwg.mxu0
        %v1259 = vadd.f32 %v1233, %v1257
        %s1260 = scalar_lea.vmem %s370, 12
        %v1261 = vld [vmem:[%s1260] sm:$0xf]
        %v1263 = vsel %vm404, %v1261, 0
        %1265 = vmatpush.msra.mxu0 0.0
        %1266 = vmatpush.msra.mxu0 0.0
        %1267 = vmatpush.msra.mxu0 0.0
        %1268 = vmatpush.msra.mxu0 0.0
        %1269 = vmatpush.msra.mxu0 0.0
        %1270 = vmatpush.msra.mxu0 0.0
        %1271 = vmatpush.msra.mxu0 0.0
        %1272 = vmatpush.msra.mxu0 0.0
        %1273 = vmatpush.msra.mxu0 0.0
        %1274 = vmatpush.msra.mxu0 0.0
        %1275 = vmatpush.msra.mxu0 0.0
        %1276 = vmatpush.msra.mxu0 0.0
        %1277 = vmatpush.msra.mxu0 0.0
        %1278 = vmatpush.msra.mxu0 0.0
        %1279 = vmatpush.msra.mxu0 0.0
        %1280 = vmatpush.msra.mxu0 %v1263
        %1281 = vmatmul.f32.gmra.mxu0 %v484
        %v1282 = vpop.f32.mrf.mxu0
        %v1283 = vadd.f32 0.0, %v1282
        %1284 = vdwg.mxu0
        %v1285 = vadd.f32 %v1259, %v1283
        %s1286 = scalar_lea.vmem %s379, 12
        %v1287 = vld [vmem:[%s1286] sm:$0xf]
        %v1289 = vsel %vm404, %v1287, 0
        %1291 = vmatpush.msra.mxu0 0.0
        %1292 = vmatpush.msra.mxu0 0.0
        %1293 = vmatpush.msra.mxu0 0.0
        %1294 = vmatpush.msra.mxu0 0.0
        %1295 = vmatpush.msra.mxu0 0.0
        %1296 = vmatpush.msra.mxu0 0.0
        %1297 = vmatpush.msra.mxu0 0.0
        %1298 = vmatpush.msra.mxu0 0.0
        %1299 = vmatpush.msra.mxu0 0.0
        %1300 = vmatpush.msra.mxu0 0.0
        %1301 = vmatpush.msra.mxu0 0.0
        %1302 = vmatpush.msra.mxu0 0.0
        %1303 = vmatpush.msra.mxu0 0.0
        %1304 = vmatpush.msra.mxu0 0.0
        %1305 = vmatpush.msra.mxu0 0.0
        %1306 = vmatpush.msra.mxu0 %v1289
        %1307 = vmatmul.f32.gmra.mxu0 %v512
        %v1308 = vpop.f32.mrf.mxu0
        %v1309 = vadd.f32 0.0, %v1308
        %1310 = vdwg.mxu0
        %v1311 = vadd.f32 %v1285, %v1309
        %1312 = vrot.lane.b32.xlu0 %v1261, 127
        %v1313 = vpop.permute.xlu0 %1312
        %v1314 = vsel %vm404, %v1313, 0
        %1316 = vmatpush.msra.mxu0 0.0
        %1317 = vmatpush.msra.mxu0 0.0
        %1318 = vmatpush.msra.mxu0 0.0
        %1319 = vmatpush.msra.mxu0 0.0
        %1320 = vmatpush.msra.mxu0 0.0
        %1321 = vmatpush.msra.mxu0 0.0
        %1322 = vmatpush.msra.mxu0 0.0
        %1323 = vmatpush.msra.mxu0 0.0
        %1324 = vmatpush.msra.mxu0 0.0
        %1325 = vmatpush.msra.mxu0 0.0
        %1326 = vmatpush.msra.mxu0 0.0
        %1327 = vmatpush.msra.mxu0 0.0
        %1328 = vmatpush.msra.mxu0 0.0
        %1329 = vmatpush.msra.mxu0 0.0
        %1330 = vmatpush.msra.mxu0 0.0
        %1331 = vmatpush.msra.mxu0 %v1314
        %1332 = vmatmul.f32.gmra.mxu0 %v541
        %v1333 = vpop.f32.mrf.mxu0
        %v1334 = vadd.f32 0.0, %v1333
        %1335 = vdwg.mxu0
        %v1336 = vadd.f32 %v1311, %v1334
        %s1337 = scalar_lea.vmem %s352, 16
        %v1338 = vld [vmem:[%s1337] sm:$0xf]
        %v1340 = vsel %vm404, %v1338, 0
        %1342 = vmatpush.msra.mxu0 0.0
        %1343 = vmatpush.msra.mxu0 0.0
        %1344 = vmatpush.msra.mxu0 0.0
        %1345 = vmatpush.msra.mxu0 0.0
        %1346 = vmatpush.msra.mxu0 0.0
        %1347 = vmatpush.msra.mxu0 0.0
        %1348 = vmatpush.msra.mxu0 0.0
        %1349 = vmatpush.msra.mxu0 0.0
        %1350 = vmatpush.msra.mxu0 0.0
        %1351 = vmatpush.msra.mxu0 0.0
        %1352 = vmatpush.msra.mxu0 0.0
        %1353 = vmatpush.msra.mxu0 0.0
        %1354 = vmatpush.msra.mxu0 0.0
        %1355 = vmatpush.msra.mxu0 0.0
        %1356 = vmatpush.msra.mxu0 0.0
        %1357 = vmatpush.msra.mxu0 %v1340
        %1358 = vmatmul.f32.gmra.mxu0 %v569
        %v1359 = vpop.f32.mrf.mxu0
        %v1360 = vadd.f32 0.0, %v1359
        %1361 = vdwg.mxu0
        %v1362 = vadd.f32 %v1336, %v1360
        %s1363 = scalar_lea.vmem %s361, 16
        %v1364 = vld [vmem:[%s1363] sm:$0xf]
        %v1366 = vsel %vm404, %v1364, 0
        %1368 = vmatpush.msra.mxu0 0.0
        %1369 = vmatpush.msra.mxu0 0.0
        %1370 = vmatpush.msra.mxu0 0.0
        %1371 = vmatpush.msra.mxu0 0.0
        %1372 = vmatpush.msra.mxu0 0.0
        %1373 = vmatpush.msra.mxu0 0.0
        %1374 = vmatpush.msra.mxu0 0.0
        %1375 = vmatpush.msra.mxu0 0.0
        %1376 = vmatpush.msra.mxu0 0.0
        %1377 = vmatpush.msra.mxu0 0.0
        %1378 = vmatpush.msra.mxu0 0.0
        %1379 = vmatpush.msra.mxu0 0.0
        %1380 = vmatpush.msra.mxu0 0.0
        %1381 = vmatpush.msra.mxu0 0.0
        %1382 = vmatpush.msra.mxu0 0.0
        %1383 = vmatpush.msra.mxu0 %v1366
        %1384 = vmatmul.f32.gmra.mxu0 %v598
        %v1385 = vpop.f32.mrf.mxu0
        %v1386 = vadd.f32 0.0, %v1385
        %1387 = vdwg.mxu0
        %v1388 = vadd.f32 %v1362, %v1386
        %1389 = vrot.lane.b32.xlu0 %v1338, 127
        %v1390 = vpop.permute.xlu0 %1389
        %v1391 = vsel %vm404, %v1390, 0
        %1393 = vmatpush.msra.mxu0 0.0
        %1394 = vmatpush.msra.mxu0 0.0
        %1395 = vmatpush.msra.mxu0 0.0
        %1396 = vmatpush.msra.mxu0 0.0
        %1397 = vmatpush.msra.mxu0 0.0
        %1398 = vmatpush.msra.mxu0 0.0
        %1399 = vmatpush.msra.mxu0 0.0
        %1400 = vmatpush.msra.mxu0 0.0
        %1401 = vmatpush.msra.mxu0 0.0
        %1402 = vmatpush.msra.mxu0 0.0
        %1403 = vmatpush.msra.mxu0 0.0
        %1404 = vmatpush.msra.mxu0 0.0
        %1405 = vmatpush.msra.mxu0 0.0
        %1406 = vmatpush.msra.mxu0 0.0
        %1407 = vmatpush.msra.mxu0 0.0
        %1408 = vmatpush.msra.mxu0 %v1391
        %1409 = vmatmul.f32.gmra.mxu0 %v627
        %v1410 = vpop.f32.mrf.mxu0
        %v1411 = vadd.f32 0.0, %v1410
        %1412 = vdwg.mxu0
        %v1413 = vadd.f32 %v1388, %v1411
        %v1414 = vadd.f32 %v1413, %v655
        %v1415 = vmax.f32 %v1414, 0.0
        %v1417 = vrot.slane %v1415, 1
        %v1418 = vrot.slane %v1415, 2
        %v1419 = vrot.slane %v1415, 3
        %v1420 = vrot.slane %v1415, 4
        %v1421 = vrot.slane %v1415, 5
        %v1422 = vrot.slane %v1415, 6
        %v1423 = vrot.slane %v1415, 7
        %1431 = vst.msk [vmem:[%s343 + $0x3] sm:$0x1] %vm674, %v1415
        %1432 = vst.msk [vmem:[%s343 + $0xb] sm:$0x1] %vm674, %v1417
        %1433 = vst.msk [vmem:[%s343 + $0x13] sm:$0x1] %vm674, %v1418
        %1434 = vst.msk [vmem:[%s343 + $0x1b] sm:$0x1] %vm674, %v1419
        %1435 = vst.msk [vmem:[%s343 + $0x23] sm:$0x1] %vm674, %v1420
        %1436 = vst.msk [vmem:[%s343 + $0x2b] sm:$0x1] %vm674, %v1421
        %1437 = vst.msk [vmem:[%s343 + $0x33] sm:$0x1] %vm674, %v1422
        %1438 = vst.msk [vmem:[%s343 + $0x3b] sm:$0x1] %vm674, %v1423
        %v1439 = vld [vmem:[%s1337] sm:$0xf]
        %v1440 = vld [vmem:[%s1363] sm:$0xf]
        %v1442 = vsel %vm404, %v1440, 0
        %1444 = vmatpush.msra.mxu0 0.0
        %1445 = vmatpush.msra.mxu0 0.0
        %1446 = vmatpush.msra.mxu0 0.0
        %1447 = vmatpush.msra.mxu0 0.0
        %1448 = vmatpush.msra.mxu0 0.0
        %1449 = vmatpush.msra.mxu0 0.0
        %1450 = vmatpush.msra.mxu0 0.0
        %1451 = vmatpush.msra.mxu0 0.0
        %1452 = vmatpush.msra.mxu0 0.0
        %1453 = vmatpush.msra.mxu0 0.0
        %1454 = vmatpush.msra.mxu0 0.0
        %1455 = vmatpush.msra.mxu0 0.0
        %1456 = vmatpush.msra.mxu0 0.0
        %1457 = vmatpush.msra.mxu0 0.0
        %1458 = vmatpush.msra.mxu0 0.0
        %1459 = vmatpush.msra.mxu0 %v1442
        %1460 = vmatmul.f32.gmra.mxu0 %v402
        %v1461 = vpop.f32.mrf.mxu0
        %v1462 = vadd.f32 0.0, %v1461
        %1463 = vdwg.mxu0
        %v1465 = vsel %vm404, %v1439, 0
        %1467 = vmatpush.msra.mxu0 0.0
        %1468 = vmatpush.msra.mxu0 0.0
        %1469 = vmatpush.msra.mxu0 0.0
        %1470 = vmatpush.msra.mxu0 0.0
        %1471 = vmatpush.msra.mxu0 0.0
        %1472 = vmatpush.msra.mxu0 0.0
        %1473 = vmatpush.msra.mxu0 0.0
        %1474 = vmatpush.msra.mxu0 0.0
        %1475 = vmatpush.msra.mxu0 0.0
        %1476 = vmatpush.msra.mxu0 0.0
        %1477 = vmatpush.msra.mxu0 0.0
        %1478 = vmatpush.msra.mxu0 0.0
        %1479 = vmatpush.msra.mxu0 0.0
        %1480 = vmatpush.msra.mxu0 0.0
        %1481 = vmatpush.msra.mxu0 0.0
        %1482 = vmatpush.msra.mxu0 %v1465
        %1483 = vmatmul.f32.gmra.mxu0 %v429
        %v1484 = vpop.f32.mrf.mxu0
        %v1485 = vadd.f32 %v1462, %v1484
        %1486 = vdwg.mxu0
        %1487 = vrot.lane.b32.xlu0 %v1439, 127
        %v1488 = vpop.permute.xlu0 %1487
        %v1489 = vsel %vm404, %v1488, 0
        %1491 = vmatpush.msra.mxu0 0.0
        %1492 = vmatpush.msra.mxu0 0.0
        %1493 = vmatpush.msra.mxu0 0.0
        %1494 = vmatpush.msra.mxu0 0.0
        %1495 = vmatpush.msra.mxu0 0.0
        %1496 = vmatpush.msra.mxu0 0.0
        %1497 = vmatpush.msra.mxu0 0.0
        %1498 = vmatpush.msra.mxu0 0.0
        %1499 = vmatpush.msra.mxu0 0.0
        %1500 = vmatpush.msra.mxu0 0.0
        %1501 = vmatpush.msra.mxu0 0.0
        %1502 = vmatpush.msra.mxu0 0.0
        %1503 = vmatpush.msra.mxu0 0.0
        %1504 = vmatpush.msra.mxu0 0.0
        %1505 = vmatpush.msra.mxu0 0.0
        %1506 = vmatpush.msra.mxu0 %v1489
        %1507 = vmatmul.f32.gmra.mxu0 %v457
        %v1508 = vpop.f32.mrf.mxu0
        %v1509 = vadd.f32 0.0, %v1508
        %1510 = vdwg.mxu0
        %v1511 = vadd.f32 %v1485, %v1509
        %s1512 = scalar_lea.vmem %s370, 16
        %v1513 = vld [vmem:[%s1512] sm:$0xf]
        %v1515 = vsel %vm404, %v1513, 0
        %1517 = vmatpush.msra.mxu0 0.0
        %1518 = vmatpush.msra.mxu0 0.0
        %1519 = vmatpush.msra.mxu0 0.0
        %1520 = vmatpush.msra.mxu0 0.0
        %1521 = vmatpush.msra.mxu0 0.0
        %1522 = vmatpush.msra.mxu0 0.0
        %1523 = vmatpush.msra.mxu0 0.0
        %1524 = vmatpush.msra.mxu0 0.0
        %1525 = vmatpush.msra.mxu0 0.0
        %1526 = vmatpush.msra.mxu0 0.0
        %1527 = vmatpush.msra.mxu0 0.0
        %1528 = vmatpush.msra.mxu0 0.0
        %1529 = vmatpush.msra.mxu0 0.0
        %1530 = vmatpush.msra.mxu0 0.0
        %1531 = vmatpush.msra.mxu0 0.0
        %1532 = vmatpush.msra.mxu0 %v1515
        %1533 = vmatmul.f32.gmra.mxu0 %v484
        %v1534 = vpop.f32.mrf.mxu0
        %v1535 = vadd.f32 0.0, %v1534
        %1536 = vdwg.mxu0
        %v1537 = vadd.f32 %v1511, %v1535
        %s1538 = scalar_lea.vmem %s379, 16
        %v1539 = vld [vmem:[%s1538] sm:$0xf]
        %v1541 = vsel %vm404, %v1539, 0
        %1543 = vmatpush.msra.mxu0 0.0
        %1544 = vmatpush.msra.mxu0 0.0
        %1545 = vmatpush.msra.mxu0 0.0
        %1546 = vmatpush.msra.mxu0 0.0
        %1547 = vmatpush.msra.mxu0 0.0
        %1548 = vmatpush.msra.mxu0 0.0
        %1549 = vmatpush.msra.mxu0 0.0
        %1550 = vmatpush.msra.mxu0 0.0
        %1551 = vmatpush.msra.mxu0 0.0
        %1552 = vmatpush.msra.mxu0 0.0
        %1553 = vmatpush.msra.mxu0 0.0
        %1554 = vmatpush.msra.mxu0 0.0
        %1555 = vmatpush.msra.mxu0 0.0
        %1556 = vmatpush.msra.mxu0 0.0
        %1557 = vmatpush.msra.mxu0 0.0
        %1558 = vmatpush.msra.mxu0 %v1541
        %1559 = vmatmul.f32.gmra.mxu0 %v512
        %v1560 = vpop.f32.mrf.mxu0
        %v1561 = vadd.f32 0.0, %v1560
        %1562 = vdwg.mxu0
        %v1563 = vadd.f32 %v1537, %v1561
        %1564 = vrot.lane.b32.xlu0 %v1513, 127
        %v1565 = vpop.permute.xlu0 %1564
        %v1566 = vsel %vm404, %v1565, 0
        %1568 = vmatpush.msra.mxu0 0.0
        %1569 = vmatpush.msra.mxu0 0.0
        %1570 = vmatpush.msra.mxu0 0.0
        %1571 = vmatpush.msra.mxu0 0.0
        %1572 = vmatpush.msra.mxu0 0.0
        %1573 = vmatpush.msra.mxu0 0.0
        %1574 = vmatpush.msra.mxu0 0.0
        %1575 = vmatpush.msra.mxu0 0.0
        %1576 = vmatpush.msra.mxu0 0.0
        %1577 = vmatpush.msra.mxu0 0.0
        %1578 = vmatpush.msra.mxu0 0.0
        %1579 = vmatpush.msra.mxu0 0.0
        %1580 = vmatpush.msra.mxu0 0.0
        %1581 = vmatpush.msra.mxu0 0.0
        %1582 = vmatpush.msra.mxu0 0.0
        %1583 = vmatpush.msra.mxu0 %v1566
        %1584 = vmatmul.f32.gmra.mxu0 %v541
        %v1585 = vpop.f32.mrf.mxu0
        %v1586 = vadd.f32 0.0, %v1585
        %1587 = vdwg.mxu0
        %v1588 = vadd.f32 %v1563, %v1586
        %s1589 = scalar_lea.vmem %s352, 20
        %v1590 = vld [vmem:[%s1589] sm:$0xf]
        %v1592 = vsel %vm404, %v1590, 0
        %1594 = vmatpush.msra.mxu0 0.0
        %1595 = vmatpush.msra.mxu0 0.0
        %1596 = vmatpush.msra.mxu0 0.0
        %1597 = vmatpush.msra.mxu0 0.0
        %1598 = vmatpush.msra.mxu0 0.0
        %1599 = vmatpush.msra.mxu0 0.0
        %1600 = vmatpush.msra.mxu0 0.0
        %1601 = vmatpush.msra.mxu0 0.0
        %1602 = vmatpush.msra.mxu0 0.0
        %1603 = vmatpush.msra.mxu0 0.0
        %1604 = vmatpush.msra.mxu0 0.0
        %1605 = vmatpush.msra.mxu0 0.0
        %1606 = vmatpush.msra.mxu0 0.0
        %1607 = vmatpush.msra.mxu0 0.0
        %1608 = vmatpush.msra.mxu0 0.0
        %1609 = vmatpush.msra.mxu0 %v1592
        %1610 = vmatmul.f32.gmra.mxu0 %v569
        %v1611 = vpop.f32.mrf.mxu0
        %v1612 = vadd.f32 0.0, %v1611
        %1613 = vdwg.mxu0
        %v1614 = vadd.f32 %v1588, %v1612
        %s1615 = scalar_lea.vmem %s361, 20
        %v1616 = vld [vmem:[%s1615] sm:$0xf]
        %v1618 = vsel %vm404, %v1616, 0
        %1620 = vmatpush.msra.mxu0 0.0
        %1621 = vmatpush.msra.mxu0 0.0
        %1622 = vmatpush.msra.mxu0 0.0
        %1623 = vmatpush.msra.mxu0 0.0
        %1624 = vmatpush.msra.mxu0 0.0
        %1625 = vmatpush.msra.mxu0 0.0
        %1626 = vmatpush.msra.mxu0 0.0
        %1627 = vmatpush.msra.mxu0 0.0
        %1628 = vmatpush.msra.mxu0 0.0
        %1629 = vmatpush.msra.mxu0 0.0
        %1630 = vmatpush.msra.mxu0 0.0
        %1631 = vmatpush.msra.mxu0 0.0
        %1632 = vmatpush.msra.mxu0 0.0
        %1633 = vmatpush.msra.mxu0 0.0
        %1634 = vmatpush.msra.mxu0 0.0
        %1635 = vmatpush.msra.mxu0 %v1618
        %1636 = vmatmul.f32.gmra.mxu0 %v598
        %v1637 = vpop.f32.mrf.mxu0
        %v1638 = vadd.f32 0.0, %v1637
        %1639 = vdwg.mxu0
        %v1640 = vadd.f32 %v1614, %v1638
        %1641 = vrot.lane.b32.xlu0 %v1590, 127
        %v1642 = vpop.permute.xlu0 %1641
        %v1643 = vsel %vm404, %v1642, 0
        %1645 = vmatpush.msra.mxu0 0.0
        %1646 = vmatpush.msra.mxu0 0.0
        %1647 = vmatpush.msra.mxu0 0.0
        %1648 = vmatpush.msra.mxu0 0.0
        %1649 = vmatpush.msra.mxu0 0.0
        %1650 = vmatpush.msra.mxu0 0.0
        %1651 = vmatpush.msra.mxu0 0.0
        %1652 = vmatpush.msra.mxu0 0.0
        %1653 = vmatpush.msra.mxu0 0.0
        %1654 = vmatpush.msra.mxu0 0.0
        %1655 = vmatpush.msra.mxu0 0.0
        %1656 = vmatpush.msra.mxu0 0.0
        %1657 = vmatpush.msra.mxu0 0.0
        %1658 = vmatpush.msra.mxu0 0.0
        %1659 = vmatpush.msra.mxu0 0.0
        %1660 = vmatpush.msra.mxu0 %v1643
        %1661 = vmatmul.f32.gmra.mxu0 %v627
        %v1662 = vpop.f32.mrf.mxu0
        %v1663 = vadd.f32 0.0, %v1662
        %1664 = vdwg.mxu0
        %v1665 = vadd.f32 %v1640, %v1663
        %v1666 = vadd.f32 %v1665, %v655
        %v1667 = vmax.f32 %v1666, 0.0
        %v1669 = vrot.slane %v1667, 1
        %v1670 = vrot.slane %v1667, 2
        %v1671 = vrot.slane %v1667, 3
        %v1672 = vrot.slane %v1667, 4
        %v1673 = vrot.slane %v1667, 5
        %v1674 = vrot.slane %v1667, 6
        %v1675 = vrot.slane %v1667, 7
        %1683 = vst.msk [vmem:[%s343 + $0x4] sm:$0x1] %vm674, %v1667
        %1684 = vst.msk [vmem:[%s343 + $0xc] sm:$0x1] %vm674, %v1669
        %1685 = vst.msk [vmem:[%s343 + $0x14] sm:$0x1] %vm674, %v1670
        %1686 = vst.msk [vmem:[%s343 + $0x1c] sm:$0x1] %vm674, %v1671
        %1687 = vst.msk [vmem:[%s343 + $0x24] sm:$0x1] %vm674, %v1672
        %1688 = vst.msk [vmem:[%s343 + $0x2c] sm:$0x1] %vm674, %v1673
        %1689 = vst.msk [vmem:[%s343 + $0x34] sm:$0x1] %vm674, %v1674
        %1690 = vst.msk [vmem:[%s343 + $0x3c] sm:$0x1] %vm674, %v1675
        %v1691 = vld [vmem:[%s1589] sm:$0xf]
        %v1692 = vld [vmem:[%s1615] sm:$0xf]
        %v1694 = vsel %vm404, %v1692, 0
        %1696 = vmatpush.msra.mxu0 0.0
        %1697 = vmatpush.msra.mxu0 0.0
        %1698 = vmatpush.msra.mxu0 0.0
        %1699 = vmatpush.msra.mxu0 0.0
        %1700 = vmatpush.msra.mxu0 0.0
        %1701 = vmatpush.msra.mxu0 0.0
        %1702 = vmatpush.msra.mxu0 0.0
        %1703 = vmatpush.msra.mxu0 0.0
        %1704 = vmatpush.msra.mxu0 0.0
        %1705 = vmatpush.msra.mxu0 0.0
        %1706 = vmatpush.msra.mxu0 0.0
        %1707 = vmatpush.msra.mxu0 0.0
        %1708 = vmatpush.msra.mxu0 0.0
        %1709 = vmatpush.msra.mxu0 0.0
        %1710 = vmatpush.msra.mxu0 0.0
        %1711 = vmatpush.msra.mxu0 %v1694
        %1712 = vmatmul.f32.gmra.mxu0 %v402
        %v1713 = vpop.f32.mrf.mxu0
        %v1714 = vadd.f32 0.0, %v1713
        %1715 = vdwg.mxu0
        %v1717 = vsel %vm404, %v1691, 0
        %1719 = vmatpush.msra.mxu0 0.0
        %1720 = vmatpush.msra.mxu0 0.0
        %1721 = vmatpush.msra.mxu0 0.0
        %1722 = vmatpush.msra.mxu0 0.0
        %1723 = vmatpush.msra.mxu0 0.0
        %1724 = vmatpush.msra.mxu0 0.0
        %1725 = vmatpush.msra.mxu0 0.0
        %1726 = vmatpush.msra.mxu0 0.0
        %1727 = vmatpush.msra.mxu0 0.0
        %1728 = vmatpush.msra.mxu0 0.0
        %1729 = vmatpush.msra.mxu0 0.0
        %1730 = vmatpush.msra.mxu0 0.0
        %1731 = vmatpush.msra.mxu0 0.0
        %1732 = vmatpush.msra.mxu0 0.0
        %1733 = vmatpush.msra.mxu0 0.0
        %1734 = vmatpush.msra.mxu0 %v1717
        %1735 = vmatmul.f32.gmra.mxu0 %v429
        %v1736 = vpop.f32.mrf.mxu0
        %v1737 = vadd.f32 %v1714, %v1736
        %1738 = vdwg.mxu0
        %1739 = vrot.lane.b32.xlu0 %v1691, 127
        %v1740 = vpop.permute.xlu0 %1739
        %v1741 = vsel %vm404, %v1740, 0
        %1743 = vmatpush.msra.mxu0 0.0
        %1744 = vmatpush.msra.mxu0 0.0
        %1745 = vmatpush.msra.mxu0 0.0
        %1746 = vmatpush.msra.mxu0 0.0
        %1747 = vmatpush.msra.mxu0 0.0
        %1748 = vmatpush.msra.mxu0 0.0
        %1749 = vmatpush.msra.mxu0 0.0
        %1750 = vmatpush.msra.mxu0 0.0
        %1751 = vmatpush.msra.mxu0 0.0
        %1752 = vmatpush.msra.mxu0 0.0
        %1753 = vmatpush.msra.mxu0 0.0
        %1754 = vmatpush.msra.mxu0 0.0
        %1755 = vmatpush.msra.mxu0 0.0
        %1756 = vmatpush.msra.mxu0 0.0
        %1757 = vmatpush.msra.mxu0 0.0
        %1758 = vmatpush.msra.mxu0 %v1741
        %1759 = vmatmul.f32.gmra.mxu0 %v457
        %v1760 = vpop.f32.mrf.mxu0
        %v1761 = vadd.f32 0.0, %v1760
        %1762 = vdwg.mxu0
        %v1763 = vadd.f32 %v1737, %v1761
        %s1764 = scalar_lea.vmem %s370, 20
        %v1765 = vld [vmem:[%s1764] sm:$0xf]
        %v1767 = vsel %vm404, %v1765, 0
        %1769 = vmatpush.msra.mxu0 0.0
        %1770 = vmatpush.msra.mxu0 0.0
        %1771 = vmatpush.msra.mxu0 0.0
        %1772 = vmatpush.msra.mxu0 0.0
        %1773 = vmatpush.msra.mxu0 0.0
        %1774 = vmatpush.msra.mxu0 0.0
        %1775 = vmatpush.msra.mxu0 0.0
        %1776 = vmatpush.msra.mxu0 0.0
        %1777 = vmatpush.msra.mxu0 0.0
        %1778 = vmatpush.msra.mxu0 0.0
        %1779 = vmatpush.msra.mxu0 0.0
        %1780 = vmatpush.msra.mxu0 0.0
        %1781 = vmatpush.msra.mxu0 0.0
        %1782 = vmatpush.msra.mxu0 0.0
        %1783 = vmatpush.msra.mxu0 0.0
        %1784 = vmatpush.msra.mxu0 %v1767
        %1785 = vmatmul.f32.gmra.mxu0 %v484
        %v1786 = vpop.f32.mrf.mxu0
        %v1787 = vadd.f32 0.0, %v1786
        %1788 = vdwg.mxu0
        %v1789 = vadd.f32 %v1763, %v1787
        %s1790 = scalar_lea.vmem %s379, 20
        %v1791 = vld [vmem:[%s1790] sm:$0xf]
        %v1793 = vsel %vm404, %v1791, 0
        %1795 = vmatpush.msra.mxu0 0.0
        %1796 = vmatpush.msra.mxu0 0.0
        %1797 = vmatpush.msra.mxu0 0.0
        %1798 = vmatpush.msra.mxu0 0.0
        %1799 = vmatpush.msra.mxu0 0.0
        %1800 = vmatpush.msra.mxu0 0.0
        %1801 = vmatpush.msra.mxu0 0.0
        %1802 = vmatpush.msra.mxu0 0.0
        %1803 = vmatpush.msra.mxu0 0.0
        %1804 = vmatpush.msra.mxu0 0.0
        %1805 = vmatpush.msra.mxu0 0.0
        %1806 = vmatpush.msra.mxu0 0.0
        %1807 = vmatpush.msra.mxu0 0.0
        %1808 = vmatpush.msra.mxu0 0.0
        %1809 = vmatpush.msra.mxu0 0.0
        %1810 = vmatpush.msra.mxu0 %v1793
        %1811 = vmatmul.f32.gmra.mxu0 %v512
        %v1812 = vpop.f32.mrf.mxu0
        %v1813 = vadd.f32 0.0, %v1812
        %1814 = vdwg.mxu0
        %v1815 = vadd.f32 %v1789, %v1813
        %1816 = vrot.lane.b32.xlu0 %v1765, 127
        %v1817 = vpop.permute.xlu0 %1816
        %v1818 = vsel %vm404, %v1817, 0
        %1820 = vmatpush.msra.mxu0 0.0
        %1821 = vmatpush.msra.mxu0 0.0
        %1822 = vmatpush.msra.mxu0 0.0
        %1823 = vmatpush.msra.mxu0 0.0
        %1824 = vmatpush.msra.mxu0 0.0
        %1825 = vmatpush.msra.mxu0 0.0
        %1826 = vmatpush.msra.mxu0 0.0
        %1827 = vmatpush.msra.mxu0 0.0
        %1828 = vmatpush.msra.mxu0 0.0
        %1829 = vmatpush.msra.mxu0 0.0
        %1830 = vmatpush.msra.mxu0 0.0
        %1831 = vmatpush.msra.mxu0 0.0
        %1832 = vmatpush.msra.mxu0 0.0
        %1833 = vmatpush.msra.mxu0 0.0
        %1834 = vmatpush.msra.mxu0 0.0
        %1835 = vmatpush.msra.mxu0 %v1818
        %1836 = vmatmul.f32.gmra.mxu0 %v541
        %v1837 = vpop.f32.mrf.mxu0
        %v1838 = vadd.f32 0.0, %v1837
        %1839 = vdwg.mxu0
        %v1840 = vadd.f32 %v1815, %v1838
        %s1841 = scalar_lea.vmem %s352, 24
        %v1842 = vld [vmem:[%s1841] sm:$0xf]
        %v1844 = vsel %vm404, %v1842, 0
        %1846 = vmatpush.msra.mxu0 0.0
        %1847 = vmatpush.msra.mxu0 0.0
        %1848 = vmatpush.msra.mxu0 0.0
        %1849 = vmatpush.msra.mxu0 0.0
        %1850 = vmatpush.msra.mxu0 0.0
        %1851 = vmatpush.msra.mxu0 0.0
        %1852 = vmatpush.msra.mxu0 0.0
        %1853 = vmatpush.msra.mxu0 0.0
        %1854 = vmatpush.msra.mxu0 0.0
        %1855 = vmatpush.msra.mxu0 0.0
        %1856 = vmatpush.msra.mxu0 0.0
        %1857 = vmatpush.msra.mxu0 0.0
        %1858 = vmatpush.msra.mxu0 0.0
        %1859 = vmatpush.msra.mxu0 0.0
        %1860 = vmatpush.msra.mxu0 0.0
        %1861 = vmatpush.msra.mxu0 %v1844
        %1862 = vmatmul.f32.gmra.mxu0 %v569
        %v1863 = vpop.f32.mrf.mxu0
        %v1864 = vadd.f32 0.0, %v1863
        %1865 = vdwg.mxu0
        %v1866 = vadd.f32 %v1840, %v1864
        %s1867 = scalar_lea.vmem %s361, 24
        %v1868 = vld [vmem:[%s1867] sm:$0xf]
        %v1870 = vsel %vm404, %v1868, 0
        %1872 = vmatpush.msra.mxu0 0.0
        %1873 = vmatpush.msra.mxu0 0.0
        %1874 = vmatpush.msra.mxu0 0.0
        %1875 = vmatpush.msra.mxu0 0.0
        %1876 = vmatpush.msra.mxu0 0.0
        %1877 = vmatpush.msra.mxu0 0.0
        %1878 = vmatpush.msra.mxu0 0.0
        %1879 = vmatpush.msra.mxu0 0.0
        %1880 = vmatpush.msra.mxu0 0.0
        %1881 = vmatpush.msra.mxu0 0.0
        %1882 = vmatpush.msra.mxu0 0.0
        %1883 = vmatpush.msra.mxu0 0.0
        %1884 = vmatpush.msra.mxu0 0.0
        %1885 = vmatpush.msra.mxu0 0.0
        %1886 = vmatpush.msra.mxu0 0.0
        %1887 = vmatpush.msra.mxu0 %v1870
        %1888 = vmatmul.f32.gmra.mxu0 %v598
        %v1889 = vpop.f32.mrf.mxu0
        %v1890 = vadd.f32 0.0, %v1889
        %1891 = vdwg.mxu0
        %v1892 = vadd.f32 %v1866, %v1890
        %1893 = vrot.lane.b32.xlu0 %v1842, 127
        %v1894 = vpop.permute.xlu0 %1893
        %v1895 = vsel %vm404, %v1894, 0
        %1897 = vmatpush.msra.mxu0 0.0
        %1898 = vmatpush.msra.mxu0 0.0
        %1899 = vmatpush.msra.mxu0 0.0
        %1900 = vmatpush.msra.mxu0 0.0
        %1901 = vmatpush.msra.mxu0 0.0
        %1902 = vmatpush.msra.mxu0 0.0
        %1903 = vmatpush.msra.mxu0 0.0
        %1904 = vmatpush.msra.mxu0 0.0
        %1905 = vmatpush.msra.mxu0 0.0
        %1906 = vmatpush.msra.mxu0 0.0
        %1907 = vmatpush.msra.mxu0 0.0
        %1908 = vmatpush.msra.mxu0 0.0
        %1909 = vmatpush.msra.mxu0 0.0
        %1910 = vmatpush.msra.mxu0 0.0
        %1911 = vmatpush.msra.mxu0 0.0
        %1912 = vmatpush.msra.mxu0 %v1895
        %1913 = vmatmul.f32.gmra.mxu0 %v627
        %v1914 = vpop.f32.mrf.mxu0
        %v1915 = vadd.f32 0.0, %v1914
        %1916 = vdwg.mxu0
        %v1917 = vadd.f32 %v1892, %v1915
        %v1918 = vadd.f32 %v1917, %v655
        %v1919 = vmax.f32 %v1918, 0.0
        %v1921 = vrot.slane %v1919, 1
        %v1922 = vrot.slane %v1919, 2
        %v1923 = vrot.slane %v1919, 3
        %v1924 = vrot.slane %v1919, 4
        %v1925 = vrot.slane %v1919, 5
        %v1926 = vrot.slane %v1919, 6
        %v1927 = vrot.slane %v1919, 7
        %1935 = vst.msk [vmem:[%s343 + $0x5] sm:$0x1] %vm674, %v1919
        %1936 = vst.msk [vmem:[%s343 + $0xd] sm:$0x1] %vm674, %v1921
        %1937 = vst.msk [vmem:[%s343 + $0x15] sm:$0x1] %vm674, %v1922
        %1938 = vst.msk [vmem:[%s343 + $0x1d] sm:$0x1] %vm674, %v1923
        %1939 = vst.msk [vmem:[%s343 + $0x25] sm:$0x1] %vm674, %v1924
        %1940 = vst.msk [vmem:[%s343 + $0x2d] sm:$0x1] %vm674, %v1925
        %1941 = vst.msk [vmem:[%s343 + $0x35] sm:$0x1] %vm674, %v1926
        %1942 = vst.msk [vmem:[%s343 + $0x3d] sm:$0x1] %vm674, %v1927
        %v1943 = vld [vmem:[%s1841] sm:$0xf]
        %v1944 = vld [vmem:[%s1867] sm:$0xf]
        %v1946 = vsel %vm404, %v1944, 0
        %1948 = vmatpush.msra.mxu0 0.0
        %1949 = vmatpush.msra.mxu0 0.0
        %1950 = vmatpush.msra.mxu0 0.0
        %1951 = vmatpush.msra.mxu0 0.0
        %1952 = vmatpush.msra.mxu0 0.0
        %1953 = vmatpush.msra.mxu0 0.0
        %1954 = vmatpush.msra.mxu0 0.0
        %1955 = vmatpush.msra.mxu0 0.0
        %1956 = vmatpush.msra.mxu0 0.0
        %1957 = vmatpush.msra.mxu0 0.0
        %1958 = vmatpush.msra.mxu0 0.0
        %1959 = vmatpush.msra.mxu0 0.0
        %1960 = vmatpush.msra.mxu0 0.0
        %1961 = vmatpush.msra.mxu0 0.0
        %1962 = vmatpush.msra.mxu0 0.0
        %1963 = vmatpush.msra.mxu0 %v1946
        %1964 = vmatmul.f32.gmra.mxu0 %v402
        %v1965 = vpop.f32.mrf.mxu0
        %v1966 = vadd.f32 0.0, %v1965
        %1967 = vdwg.mxu0
        %v1969 = vsel %vm404, %v1943, 0
        %1971 = vmatpush.msra.mxu0 0.0
        %1972 = vmatpush.msra.mxu0 0.0
        %1973 = vmatpush.msra.mxu0 0.0
        %1974 = vmatpush.msra.mxu0 0.0
        %1975 = vmatpush.msra.mxu0 0.0
        %1976 = vmatpush.msra.mxu0 0.0
        %1977 = vmatpush.msra.mxu0 0.0
        %1978 = vmatpush.msra.mxu0 0.0
        %1979 = vmatpush.msra.mxu0 0.0
        %1980 = vmatpush.msra.mxu0 0.0
        %1981 = vmatpush.msra.mxu0 0.0
        %1982 = vmatpush.msra.mxu0 0.0
        %1983 = vmatpush.msra.mxu0 0.0
        %1984 = vmatpush.msra.mxu0 0.0
        %1985 = vmatpush.msra.mxu0 0.0
        %1986 = vmatpush.msra.mxu0 %v1969
        %1987 = vmatmul.f32.gmra.mxu0 %v429
        %v1988 = vpop.f32.mrf.mxu0
        %v1989 = vadd.f32 %v1966, %v1988
        %1990 = vdwg.mxu0
        %1991 = vrot.lane.b32.xlu0 %v1943, 127
        %v1992 = vpop.permute.xlu0 %1991
        %v1993 = vsel %vm404, %v1992, 0
        %1995 = vmatpush.msra.mxu0 0.0
        %1996 = vmatpush.msra.mxu0 0.0
        %1997 = vmatpush.msra.mxu0 0.0
        %1998 = vmatpush.msra.mxu0 0.0
        %1999 = vmatpush.msra.mxu0 0.0
        %2000 = vmatpush.msra.mxu0 0.0
        %2001 = vmatpush.msra.mxu0 0.0
        %2002 = vmatpush.msra.mxu0 0.0
        %2003 = vmatpush.msra.mxu0 0.0
        %2004 = vmatpush.msra.mxu0 0.0
        %2005 = vmatpush.msra.mxu0 0.0
        %2006 = vmatpush.msra.mxu0 0.0
        %2007 = vmatpush.msra.mxu0 0.0
        %2008 = vmatpush.msra.mxu0 0.0
        %2009 = vmatpush.msra.mxu0 0.0
        %2010 = vmatpush.msra.mxu0 %v1993
        %2011 = vmatmul.f32.gmra.mxu0 %v457
        %v2012 = vpop.f32.mrf.mxu0
        %v2013 = vadd.f32 0.0, %v2012
        %2014 = vdwg.mxu0
        %v2015 = vadd.f32 %v1989, %v2013
        %s2016 = scalar_lea.vmem %s370, 24
        %v2017 = vld [vmem:[%s2016] sm:$0xf]
        %v2019 = vsel %vm404, %v2017, 0
        %2021 = vmatpush.msra.mxu0 0.0
        %2022 = vmatpush.msra.mxu0 0.0
        %2023 = vmatpush.msra.mxu0 0.0
        %2024 = vmatpush.msra.mxu0 0.0
        %2025 = vmatpush.msra.mxu0 0.0
        %2026 = vmatpush.msra.mxu0 0.0
        %2027 = vmatpush.msra.mxu0 0.0
        %2028 = vmatpush.msra.mxu0 0.0
        %2029 = vmatpush.msra.mxu0 0.0
        %2030 = vmatpush.msra.mxu0 0.0
        %2031 = vmatpush.msra.mxu0 0.0
        %2032 = vmatpush.msra.mxu0 0.0
        %2033 = vmatpush.msra.mxu0 0.0
        %2034 = vmatpush.msra.mxu0 0.0
        %2035 = vmatpush.msra.mxu0 0.0
        %2036 = vmatpush.msra.mxu0 %v2019
        %2037 = vmatmul.f32.gmra.mxu0 %v484
        %v2038 = vpop.f32.mrf.mxu0
        %v2039 = vadd.f32 0.0, %v2038
        %2040 = vdwg.mxu0
        %v2041 = vadd.f32 %v2015, %v2039
        %s2042 = scalar_lea.vmem %s379, 24
        %v2043 = vld [vmem:[%s2042] sm:$0xf]
        %v2045 = vsel %vm404, %v2043, 0
        %2047 = vmatpush.msra.mxu0 0.0
        %2048 = vmatpush.msra.mxu0 0.0
        %2049 = vmatpush.msra.mxu0 0.0
        %2050 = vmatpush.msra.mxu0 0.0
        %2051 = vmatpush.msra.mxu0 0.0
        %2052 = vmatpush.msra.mxu0 0.0
        %2053 = vmatpush.msra.mxu0 0.0
        %2054 = vmatpush.msra.mxu0 0.0
        %2055 = vmatpush.msra.mxu0 0.0
        %2056 = vmatpush.msra.mxu0 0.0
        %2057 = vmatpush.msra.mxu0 0.0
        %2058 = vmatpush.msra.mxu0 0.0
        %2059 = vmatpush.msra.mxu0 0.0
        %2060 = vmatpush.msra.mxu0 0.0
        %2061 = vmatpush.msra.mxu0 0.0
        %2062 = vmatpush.msra.mxu0 %v2045
        %2063 = vmatmul.f32.gmra.mxu0 %v512
        %v2064 = vpop.f32.mrf.mxu0
        %v2065 = vadd.f32 0.0, %v2064
        %2066 = vdwg.mxu0
        %v2067 = vadd.f32 %v2041, %v2065
        %2068 = vrot.lane.b32.xlu0 %v2017, 127
        %v2069 = vpop.permute.xlu0 %2068
        %v2070 = vsel %vm404, %v2069, 0
        %2072 = vmatpush.msra.mxu0 0.0
        %2073 = vmatpush.msra.mxu0 0.0
        %2074 = vmatpush.msra.mxu0 0.0
        %2075 = vmatpush.msra.mxu0 0.0
        %2076 = vmatpush.msra.mxu0 0.0
        %2077 = vmatpush.msra.mxu0 0.0
        %2078 = vmatpush.msra.mxu0 0.0
        %2079 = vmatpush.msra.mxu0 0.0
        %2080 = vmatpush.msra.mxu0 0.0
        %2081 = vmatpush.msra.mxu0 0.0
        %2082 = vmatpush.msra.mxu0 0.0
        %2083 = vmatpush.msra.mxu0 0.0
        %2084 = vmatpush.msra.mxu0 0.0
        %2085 = vmatpush.msra.mxu0 0.0
        %2086 = vmatpush.msra.mxu0 0.0
        %2087 = vmatpush.msra.mxu0 %v2070
        %2088 = vmatmul.f32.gmra.mxu0 %v541
        %v2089 = vpop.f32.mrf.mxu0
        %v2090 = vadd.f32 0.0, %v2089
        %2091 = vdwg.mxu0
        %v2092 = vadd.f32 %v2067, %v2090
        %s2093 = scalar_lea.vmem %s352, 28
        %v2094 = vld [vmem:[%s2093] sm:$0xf]
        %v2096 = vsel %vm404, %v2094, 0
        %2098 = vmatpush.msra.mxu0 0.0
        %2099 = vmatpush.msra.mxu0 0.0
        %2100 = vmatpush.msra.mxu0 0.0
        %2101 = vmatpush.msra.mxu0 0.0
        %2102 = vmatpush.msra.mxu0 0.0
        %2103 = vmatpush.msra.mxu0 0.0
        %2104 = vmatpush.msra.mxu0 0.0
        %2105 = vmatpush.msra.mxu0 0.0
        %2106 = vmatpush.msra.mxu0 0.0
        %2107 = vmatpush.msra.mxu0 0.0
        %2108 = vmatpush.msra.mxu0 0.0
        %2109 = vmatpush.msra.mxu0 0.0
        %2110 = vmatpush.msra.mxu0 0.0
        %2111 = vmatpush.msra.mxu0 0.0
        %2112 = vmatpush.msra.mxu0 0.0
        %2113 = vmatpush.msra.mxu0 %v2096
        %2114 = vmatmul.f32.gmra.mxu0 %v569
        %v2115 = vpop.f32.mrf.mxu0
        %v2116 = vadd.f32 0.0, %v2115
        %2117 = vdwg.mxu0
        %v2118 = vadd.f32 %v2092, %v2116
        %s2119 = scalar_lea.vmem %s361, 28
        %v2120 = vld [vmem:[%s2119] sm:$0xf]
        %v2122 = vsel %vm404, %v2120, 0
        %2124 = vmatpush.msra.mxu0 0.0
        %2125 = vmatpush.msra.mxu0 0.0
        %2126 = vmatpush.msra.mxu0 0.0
        %2127 = vmatpush.msra.mxu0 0.0
        %2128 = vmatpush.msra.mxu0 0.0
        %2129 = vmatpush.msra.mxu0 0.0
        %2130 = vmatpush.msra.mxu0 0.0
        %2131 = vmatpush.msra.mxu0 0.0
        %2132 = vmatpush.msra.mxu0 0.0
        %2133 = vmatpush.msra.mxu0 0.0
        %2134 = vmatpush.msra.mxu0 0.0
        %2135 = vmatpush.msra.mxu0 0.0
        %2136 = vmatpush.msra.mxu0 0.0
        %2137 = vmatpush.msra.mxu0 0.0
        %2138 = vmatpush.msra.mxu0 0.0
        %2139 = vmatpush.msra.mxu0 %v2122
        %2140 = vmatmul.f32.gmra.mxu0 %v598
        %v2141 = vpop.f32.mrf.mxu0
        %v2142 = vadd.f32 0.0, %v2141
        %2143 = vdwg.mxu0
        %v2144 = vadd.f32 %v2118, %v2142
        %2145 = vrot.lane.b32.xlu0 %v2094, 127
        %v2146 = vpop.permute.xlu0 %2145
        %v2147 = vsel %vm404, %v2146, 0
        %2149 = vmatpush.msra.mxu0 0.0
        %2150 = vmatpush.msra.mxu0 0.0
        %2151 = vmatpush.msra.mxu0 0.0
        %2152 = vmatpush.msra.mxu0 0.0
        %2153 = vmatpush.msra.mxu0 0.0
        %2154 = vmatpush.msra.mxu0 0.0
        %2155 = vmatpush.msra.mxu0 0.0
        %2156 = vmatpush.msra.mxu0 0.0
        %2157 = vmatpush.msra.mxu0 0.0
        %2158 = vmatpush.msra.mxu0 0.0
        %2159 = vmatpush.msra.mxu0 0.0
        %2160 = vmatpush.msra.mxu0 0.0
        %2161 = vmatpush.msra.mxu0 0.0
        %2162 = vmatpush.msra.mxu0 0.0
        %2163 = vmatpush.msra.mxu0 0.0
        %2164 = vmatpush.msra.mxu0 %v2147
        %2165 = vmatmul.f32.gmra.mxu0 %v627
        %v2166 = vpop.f32.mrf.mxu0
        %v2167 = vadd.f32 0.0, %v2166
        %2168 = vdwg.mxu0
        %v2169 = vadd.f32 %v2144, %v2167
        %v2170 = vadd.f32 %v2169, %v655
        %v2171 = vmax.f32 %v2170, 0.0
        %v2173 = vrot.slane %v2171, 1
        %v2174 = vrot.slane %v2171, 2
        %v2175 = vrot.slane %v2171, 3
        %v2176 = vrot.slane %v2171, 4
        %v2177 = vrot.slane %v2171, 5
        %v2178 = vrot.slane %v2171, 6
        %v2179 = vrot.slane %v2171, 7
        %2187 = vst.msk [vmem:[%s343 + $0x6] sm:$0x1] %vm674, %v2171
        %2188 = vst.msk [vmem:[%s343 + $0xe] sm:$0x1] %vm674, %v2173
        %2189 = vst.msk [vmem:[%s343 + $0x16] sm:$0x1] %vm674, %v2174
        %2190 = vst.msk [vmem:[%s343 + $0x1e] sm:$0x1] %vm674, %v2175
        %2191 = vst.msk [vmem:[%s343 + $0x26] sm:$0x1] %vm674, %v2176
        %2192 = vst.msk [vmem:[%s343 + $0x2e] sm:$0x1] %vm674, %v2177
        %2193 = vst.msk [vmem:[%s343 + $0x36] sm:$0x1] %vm674, %v2178
        %2194 = vst.msk [vmem:[%s343 + $0x3e] sm:$0x1] %vm674, %v2179
        %v2195 = vld [vmem:[%s2093] sm:$0xf]
        %v2196 = vld [vmem:[%s2119] sm:$0xf]
        %v2198 = vsel %vm404, %v2196, 0
        %2200 = vmatpush.msra.mxu0 0.0
        %2201 = vmatpush.msra.mxu0 0.0
        %2202 = vmatpush.msra.mxu0 0.0
        %2203 = vmatpush.msra.mxu0 0.0
        %2204 = vmatpush.msra.mxu0 0.0
        %2205 = vmatpush.msra.mxu0 0.0
        %2206 = vmatpush.msra.mxu0 0.0
        %2207 = vmatpush.msra.mxu0 0.0
        %2208 = vmatpush.msra.mxu0 0.0
        %2209 = vmatpush.msra.mxu0 0.0
        %2210 = vmatpush.msra.mxu0 0.0
        %2211 = vmatpush.msra.mxu0 0.0
        %2212 = vmatpush.msra.mxu0 0.0
        %2213 = vmatpush.msra.mxu0 0.0
        %2214 = vmatpush.msra.mxu0 0.0
        %2215 = vmatpush.msra.mxu0 %v2198
        %2216 = vmatmul.f32.gmra.mxu0 %v402
        %v2217 = vpop.f32.mrf.mxu0
        %v2218 = vadd.f32 0.0, %v2217
        %2219 = vdwg.mxu0
        %v2221 = vsel %vm404, %v2195, 0
        %2223 = vmatpush.msra.mxu0 0.0
        %2224 = vmatpush.msra.mxu0 0.0
        %2225 = vmatpush.msra.mxu0 0.0
        %2226 = vmatpush.msra.mxu0 0.0
        %2227 = vmatpush.msra.mxu0 0.0
        %2228 = vmatpush.msra.mxu0 0.0
        %2229 = vmatpush.msra.mxu0 0.0
        %2230 = vmatpush.msra.mxu0 0.0
        %2231 = vmatpush.msra.mxu0 0.0
        %2232 = vmatpush.msra.mxu0 0.0
        %2233 = vmatpush.msra.mxu0 0.0
        %2234 = vmatpush.msra.mxu0 0.0
        %2235 = vmatpush.msra.mxu0 0.0
        %2236 = vmatpush.msra.mxu0 0.0
        %2237 = vmatpush.msra.mxu0 0.0
        %2238 = vmatpush.msra.mxu0 %v2221
        %2239 = vmatmul.f32.gmra.mxu0 %v429
        %v2240 = vpop.f32.mrf.mxu0
        %v2241 = vadd.f32 %v2218, %v2240
        %2242 = vdwg.mxu0
        %2243 = vrot.lane.b32.xlu0 %v2195, 127
        %v2244 = vpop.permute.xlu0 %2243
        %v2245 = vsel %vm404, %v2244, 0
        %2247 = vmatpush.msra.mxu0 0.0
        %2248 = vmatpush.msra.mxu0 0.0
        %2249 = vmatpush.msra.mxu0 0.0
        %2250 = vmatpush.msra.mxu0 0.0
        %2251 = vmatpush.msra.mxu0 0.0
        %2252 = vmatpush.msra.mxu0 0.0
        %2253 = vmatpush.msra.mxu0 0.0
        %2254 = vmatpush.msra.mxu0 0.0
        %2255 = vmatpush.msra.mxu0 0.0
        %2256 = vmatpush.msra.mxu0 0.0
        %2257 = vmatpush.msra.mxu0 0.0
        %2258 = vmatpush.msra.mxu0 0.0
        %2259 = vmatpush.msra.mxu0 0.0
        %2260 = vmatpush.msra.mxu0 0.0
        %2261 = vmatpush.msra.mxu0 0.0
        %2262 = vmatpush.msra.mxu0 %v2245
        %2263 = vmatmul.f32.gmra.mxu0 %v457
        %v2264 = vpop.f32.mrf.mxu0
        %v2265 = vadd.f32 0.0, %v2264
        %2266 = vdwg.mxu0
        %v2267 = vadd.f32 %v2241, %v2265
        %s2268 = scalar_lea.vmem %s370, 28
        %v2269 = vld [vmem:[%s2268] sm:$0xf]
        %v2271 = vsel %vm404, %v2269, 0
        %2273 = vmatpush.msra.mxu0 0.0
        %2274 = vmatpush.msra.mxu0 0.0
        %2275 = vmatpush.msra.mxu0 0.0
        %2276 = vmatpush.msra.mxu0 0.0
        %2277 = vmatpush.msra.mxu0 0.0
        %2278 = vmatpush.msra.mxu0 0.0
        %2279 = vmatpush.msra.mxu0 0.0
        %2280 = vmatpush.msra.mxu0 0.0
        %2281 = vmatpush.msra.mxu0 0.0
        %2282 = vmatpush.msra.mxu0 0.0
        %2283 = vmatpush.msra.mxu0 0.0
        %2284 = vmatpush.msra.mxu0 0.0
        %2285 = vmatpush.msra.mxu0 0.0
        %2286 = vmatpush.msra.mxu0 0.0
        %2287 = vmatpush.msra.mxu0 0.0
        %2288 = vmatpush.msra.mxu0 %v2271
        %2289 = vmatmul.f32.gmra.mxu0 %v484
        %v2290 = vpop.f32.mrf.mxu0
        %v2291 = vadd.f32 0.0, %v2290
        %2292 = vdwg.mxu0
        %v2293 = vadd.f32 %v2267, %v2291
        %s2294 = scalar_lea.vmem %s379, 28
        %v2295 = vld [vmem:[%s2294] sm:$0xf]
        %v2297 = vsel %vm404, %v2295, 0
        %2299 = vmatpush.msra.mxu0 0.0
        %2300 = vmatpush.msra.mxu0 0.0
        %2301 = vmatpush.msra.mxu0 0.0
        %2302 = vmatpush.msra.mxu0 0.0
        %2303 = vmatpush.msra.mxu0 0.0
        %2304 = vmatpush.msra.mxu0 0.0
        %2305 = vmatpush.msra.mxu0 0.0
        %2306 = vmatpush.msra.mxu0 0.0
        %2307 = vmatpush.msra.mxu0 0.0
        %2308 = vmatpush.msra.mxu0 0.0
        %2309 = vmatpush.msra.mxu0 0.0
        %2310 = vmatpush.msra.mxu0 0.0
        %2311 = vmatpush.msra.mxu0 0.0
        %2312 = vmatpush.msra.mxu0 0.0
        %2313 = vmatpush.msra.mxu0 0.0
        %2314 = vmatpush.msra.mxu0 %v2297
        %2315 = vmatmul.f32.gmra.mxu0 %v512
        %v2316 = vpop.f32.mrf.mxu0
        %v2317 = vadd.f32 0.0, %v2316
        %2318 = vdwg.mxu0
        %v2319 = vadd.f32 %v2293, %v2317
        %2320 = vrot.lane.b32.xlu0 %v2269, 127
        %v2321 = vpop.permute.xlu0 %2320
        %v2322 = vsel %vm404, %v2321, 0
        %2324 = vmatpush.msra.mxu0 0.0
        %2325 = vmatpush.msra.mxu0 0.0
        %2326 = vmatpush.msra.mxu0 0.0
        %2327 = vmatpush.msra.mxu0 0.0
        %2328 = vmatpush.msra.mxu0 0.0
        %2329 = vmatpush.msra.mxu0 0.0
        %2330 = vmatpush.msra.mxu0 0.0
        %2331 = vmatpush.msra.mxu0 0.0
        %2332 = vmatpush.msra.mxu0 0.0
        %2333 = vmatpush.msra.mxu0 0.0
        %2334 = vmatpush.msra.mxu0 0.0
        %2335 = vmatpush.msra.mxu0 0.0
        %2336 = vmatpush.msra.mxu0 0.0
        %2337 = vmatpush.msra.mxu0 0.0
        %2338 = vmatpush.msra.mxu0 0.0
        %2339 = vmatpush.msra.mxu0 %v2322
        %2340 = vmatmul.f32.gmra.mxu0 %v541
        %v2341 = vpop.f32.mrf.mxu0
        %v2342 = vadd.f32 0.0, %v2341
        %2343 = vdwg.mxu0
        %v2344 = vadd.f32 %v2319, %v2342
        %s2345 = scalar_lea.vmem %s352, 32
        %v2346 = vld [vmem:[%s2345] sm:$0xf]
        %v2348 = vsel %vm404, %v2346, 0
        %2350 = vmatpush.msra.mxu0 0.0
        %2351 = vmatpush.msra.mxu0 0.0
        %2352 = vmatpush.msra.mxu0 0.0
        %2353 = vmatpush.msra.mxu0 0.0
        %2354 = vmatpush.msra.mxu0 0.0
        %2355 = vmatpush.msra.mxu0 0.0
        %2356 = vmatpush.msra.mxu0 0.0
        %2357 = vmatpush.msra.mxu0 0.0
        %2358 = vmatpush.msra.mxu0 0.0
        %2359 = vmatpush.msra.mxu0 0.0
        %2360 = vmatpush.msra.mxu0 0.0
        %2361 = vmatpush.msra.mxu0 0.0
        %2362 = vmatpush.msra.mxu0 0.0
        %2363 = vmatpush.msra.mxu0 0.0
        %2364 = vmatpush.msra.mxu0 0.0
        %2365 = vmatpush.msra.mxu0 %v2348
        %2366 = vmatmul.f32.gmra.mxu0 %v569
        %v2367 = vpop.f32.mrf.mxu0
        %v2368 = vadd.f32 0.0, %v2367
        %2369 = vdwg.mxu0
        %v2370 = vadd.f32 %v2344, %v2368
        %s2371 = scalar_lea.vmem %s361, 32
        %v2372 = vld [vmem:[%s2371] sm:$0xf]
        %v2374 = vsel %vm404, %v2372, 0
        %2376 = vmatpush.msra.mxu0 0.0
        %2377 = vmatpush.msra.mxu0 0.0
        %2378 = vmatpush.msra.mxu0 0.0
        %2379 = vmatpush.msra.mxu0 0.0
        %2380 = vmatpush.msra.mxu0 0.0
        %2381 = vmatpush.msra.mxu0 0.0
        %2382 = vmatpush.msra.mxu0 0.0
        %2383 = vmatpush.msra.mxu0 0.0
        %2384 = vmatpush.msra.mxu0 0.0
        %2385 = vmatpush.msra.mxu0 0.0
        %2386 = vmatpush.msra.mxu0 0.0
        %2387 = vmatpush.msra.mxu0 0.0
        %2388 = vmatpush.msra.mxu0 0.0
        %2389 = vmatpush.msra.mxu0 0.0
        %2390 = vmatpush.msra.mxu0 0.0
        %2391 = vmatpush.msra.mxu0 %v2374
        %2392 = vmatmul.f32.gmra.mxu0 %v598
        %v2393 = vpop.f32.mrf.mxu0
        %v2394 = vadd.f32 0.0, %v2393
        %2395 = vdwg.mxu0
        %v2396 = vadd.f32 %v2370, %v2394
        %2397 = vrot.lane.b32.xlu0 %v2346, 127
        %v2398 = vpop.permute.xlu0 %2397
        %v2399 = vsel %vm404, %v2398, 0
        %2401 = vmatpush.msra.mxu0 0.0
        %2402 = vmatpush.msra.mxu0 0.0
        %2403 = vmatpush.msra.mxu0 0.0
        %2404 = vmatpush.msra.mxu0 0.0
        %2405 = vmatpush.msra.mxu0 0.0
        %2406 = vmatpush.msra.mxu0 0.0
        %2407 = vmatpush.msra.mxu0 0.0
        %2408 = vmatpush.msra.mxu0 0.0
        %2409 = vmatpush.msra.mxu0 0.0
        %2410 = vmatpush.msra.mxu0 0.0
        %2411 = vmatpush.msra.mxu0 0.0
        %2412 = vmatpush.msra.mxu0 0.0
        %2413 = vmatpush.msra.mxu0 0.0
        %2414 = vmatpush.msra.mxu0 0.0
        %2415 = vmatpush.msra.mxu0 0.0
        %2416 = vmatpush.msra.mxu0 %v2399
        %2417 = vmatmul.f32.gmra.mxu0 %v627
        %v2418 = vpop.f32.mrf.mxu0
        %v2419 = vadd.f32 0.0, %v2418
        %2420 = vdwg.mxu0
        %v2421 = vadd.f32 %v2396, %v2419
        %v2422 = vadd.f32 %v2421, %v655
        %v2423 = vmax.f32 %v2422, 0.0
        %v2425 = vrot.slane %v2423, 1
        %v2426 = vrot.slane %v2423, 2
        %v2427 = vrot.slane %v2423, 3
        %v2428 = vrot.slane %v2423, 4
        %v2429 = vrot.slane %v2423, 5
        %v2430 = vrot.slane %v2423, 6
        %v2431 = vrot.slane %v2423, 7
        %2439 = vst.msk [vmem:[%s343 + $0x7] sm:$0x1] %vm674, %v2423
        %2440 = vst.msk [vmem:[%s343 + $0xf] sm:$0x1] %vm674, %v2425
        %2441 = vst.msk [vmem:[%s343 + $0x17] sm:$0x1] %vm674, %v2426
        %2442 = vst.msk [vmem:[%s343 + $0x1f] sm:$0x1] %vm674, %v2427
        %2443 = vst.msk [vmem:[%s343 + $0x27] sm:$0x1] %vm674, %v2428
        %2444 = vst.msk [vmem:[%s343 + $0x2f] sm:$0x1] %vm674, %v2429
        %2445 = vst.msk [vmem:[%s343 + $0x37] sm:$0x1] %vm674, %v2430
        %2446 = vst.msk [vmem:[%s343 + $0x3f] sm:$0x1] %vm674, %v2431
        %s2447 = sand.u32 %s196, 1
        %s2448 = scalar_lea.sflag [#allocation3], %s2447
        %s2449 = sand.u32 %s196, 1
        %s2450 = smul.addr %s2449, 64
        %s2451 = scalar_lea.vmem [#allocation2], %s2450
        // Predicated region
        $region45: #{downsample_forward.1} parent=43 // pred_check
          %p2452 = pneg %p206
        $region46: #{downsample_forward.1} parent=43 // pred_check_branch
          %2454 = sbr.rel (%p2452) target = $region48
        $region47: #{downsample_forward.1} parent=43 // pred_region
          %2456 = vsyncadd %s2448, 0
          %s2457 = smul.addr %s24, 8
          %s2458 = sadd.s32 %s25, %s2457
          %s2459 = smul.addr %s2458, 8
          %s2460 = scalar_lea.hbm %s6, %s2459
          %s2461 = sshll.u32 %s2451, 4
          %s2462 = int_to_ptr.vmem [resolvable:$true] %s2461
          %s2463 = sshll.u32 %s2460, 4
          %s2464 = int_to_ptr.hbm [resolvable:$true] %s2463
          %2469 = dma.vmem_to_hbm [thread:$0]  %s2462, 1024, %s2464, %s2448, 128, 128, 8
        $region48: #{downsample_forward.1} parent=43 // pred_fallthru
          _
      $region44: #{downsample_forward.1} parent=5 // pred_fallthru
        _
      %p2470 = scmp.le.s32.totalorder 2, %s15
      // Predicated region
      $region49: #{downsample_forward.1} parent=5 // pred_check
        %p2471 = pneg %p2470
      $region50: #{downsample_forward.1} parent=5 // pred_check_branch
        %2473 = sbr.rel (%p2471) target = $region52
      $region51: #{downsample_forward.1} parent=5 // pred_region
        %s2474 = ssub.s32 %s15, 2
        // Predicated region
        $region53: #{downsample_forward.1} parent=51 // pred_check
          %p2475 = pneg %p212
        $region54: #{downsample_forward.1} parent=51 // pred_check_branch
          %2477 = sbr.rel (%p2475) target = $region56
        $region55: #{downsample_forward.1} parent=51 // pred_region
          %s2478 = sand.u32 %s197, 1
          %s2479 = scalar_lea.sflag [#allocation3], %s2478
          %s2480 = sand.u32 %s197, 1
          %s2481 = smul.addr %s2480, 64
          %s2482 = scalar_lea.vmem [#allocation2], %s2481
          %2484 = dma.done %s2479, 1024
        $region56: #{downsample_forward.1} parent=51 // pred_fallthru
          _
      $region52: #{downsample_forward.1} parent=5 // pred_fallthru
        _
    $region6: #{downsample_forward.1} parent=1 // loop_footer
      %s19 = sadd.s32 1, %s15
    $region7: #{downsample_forward.1} parent=1 // loop_footer_branch
      %14 = sbr.rel target = $region3
    $region8: #{downsample_forward.1} parent=1 // loop_exit
      _
    %2485 = vsyncpa [#allocation3], 1
    %s2486 = scalar_lea.sflag [#allocation3], 1
    %2487 = vsyncpa %s2486, 1

</llo_original>
